<compile_context>
chip_gen: v6e
topology: v6e:2x2x1
jax: 0.10.0
libtpu: 0.0.40
codegen_flags: <defaults>
</compile_context>

<pallas_src>
import numpy as np
import jax
import jax.numpy as jnp
from jax import lax
from jax.experimental import pallas as pl
from jax.experimental.pallas import tpu as pltpu


# -----------------------------------------------------------------------------
# small helpers
# -----------------------------------------------------------------------------
def _rep_spec(shape):
    """BlockSpec for a full (replicated) parameter array, grid=(B,)."""
    n = len(shape)
    return pl.BlockSpec(shape, lambda b, _n=n: (0,) * _n)


def _out_geom(H, W, k, stride):
    pd = k // 2
    Ho = (H + 2 * pd - k) // stride + 1
    Wo = (W + 2 * pd - k) // stride + 1
    return pd, Ho, Wo


def _make_sel(H, W, k, stride):
    """(Ho*Wo, H*W) 0/1 matrix selecting strided output positions from the
    stride-1 (same-size) depthwise output."""
    pd, Ho, Wo = _out_geom(H, W, k, stride)
    rows = jnp.arange(Ho * Wo)
    io, jo = rows // Wo, rows % Wo
    src = (io * stride) * W + (jo * stride)
    sel = jnp.zeros((Ho * Wo, H * W), jnp.float32).at[rows, src].set(1.0)
    return sel, Ho, Wo


# -----------------------------------------------------------------------------
# in-kernel channels-last depthwise conv (shared by both branches)
# -----------------------------------------------------------------------------
def _depthwise_cl(h, wd_ref, bd_ref, sel_ref, pad_ref, *, H, W, C, k, stride):
    """h: (H*W, C) f32 value (channels-last slab).
    wd_ref: (k*k, C) taps, bd_ref: (1, C) bias, sel_ref: (Ho*Wo, H*W) or None.
    pad_ref: VMEM scratch (H*W + 2*halo, C), halo = (k//2)*W + k//2.
    Returns (Hout*Wout, C) f32 = depthwise_conv(h) + bias."""
    pd = k // 2
    halo = pd * W + pd
    HW = H * W

    # Refresh the zero halo (tiny) and write the interior slab.  Re-zeroing the
    # halo every step keeps the kernel correct even when the parallel batch grid
    # is split across TensorCores (each core has its own scratch).
    pad_ref[:halo, :] = jnp.zeros((halo, C), jnp.float32)
    pad_ref[halo + HW:, :] = jnp.zeros((halo, C), jnp.float32)
    pad_ref[halo:halo + HW, :] = h

    wd = wd_ref[...]                                            # (k*k, C)
    col = lax.broadcasted_iota(jnp.int32, (HW, 1), 0) % W       # output column

    acc = jnp.zeros((HW, C), jnp.float32)
    for dj in range(k):                       # column tap (mask hoisted per dj)
        jc = dj - pd
        if jc == 0:
            mask = None                       # centered column: always valid
        else:
            cc = col + jc
            mask = jnp.logical_and(cc >= 0, cc < W)             # (HW, 1)
        for di in range(k):                   # row tap
            off = di * W + dj                 # = halo + (di-pd)*W + (dj-pd)
            src = pad_ref[off:off + HW, :]                      # (HW, C)
            tap = wd[di * k + dj:di * k + dj + 1, :]            # (1, C)
            contrib = src * tap
            if mask is not None:
                contrib = jnp.where(mask, contrib, 0.0)
            acc = acc + contrib

    if stride != 1:
        # one well-shaped selection matmul instead of per-row tiny matmuls
        acc = jnp.dot(sel_ref[...], acc, preferred_element_type=jnp.float32)
    return acc + bd_ref[...]


# -----------------------------------------------------------------------------
# kernels
# -----------------------------------------------------------------------------
def _make_s1_kernel(Cin, mid, Cout, H, W, k):
    """stride=1: pass-through proj half + branch_main, written into one output."""
    def kernel(xm_ref, xp_ref, w1_ref, b1_ref, wd_ref, bd_ref, w2_ref, b2_ref,
               o_ref, pad_ref):
        # proj half of the channel shuffle: straight copy into channels [0, Cin)
        o_ref[0, :, :Cin] = xp_ref[0].astype(o_ref.dtype)

        xm = xm_ref[0]                                          # (HW, Cin) f32
        # 1x1 conv + BN + ReLU  (bf16 MXU, f32 accumulation / bias / ReLU)
        h1 = jnp.maximum(
            jnp.dot(xm.astype(jnp.bfloat16), w1_ref[...],
                    preferred_element_type=jnp.float32) + b1_ref[...], 0.0)
        # depthwise conv + BN
        h2 = _depthwise_cl(h1, wd_ref, bd_ref, None, pad_ref,
                           H=H, W=W, C=mid, k=k, stride=1)      # (HW, mid)
        # 1x1 conv + BN + ReLU
        out = jnp.maximum(
            jnp.dot(h2.astype(jnp.bfloat16), w2_ref[...],
                    preferred_element_type=jnp.float32) + b2_ref[...], 0.0)
        o_ref[0, :, Cin:] = out.astype(o_ref.dtype)
    return kernel


def _make_s2_kernel(Cin, mid, Cout, H, W, k):
    """stride=2: fused branch_proj + branch_main sharing the loaded x slab."""
    def kernel(x_ref, w1_ref, b1_ref, wd_ref, bd_ref, w2_ref, b2_ref,
               wdp_ref, bdp_ref, wp_ref, bp_ref, sel_ref,
               o_ref, padm_ref, padp_ref):
        x = x_ref[0]                                            # (HW, Cin) f32

        # ---- branch_proj: depthwise + BN -> 1x1 + BN + ReLU ----
        hp = _depthwise_cl(x, wdp_ref, bdp_ref, sel_ref, padp_ref,
                           H=H, W=W, C=Cin, k=k, stride=2)      # (HoWo, Cin)
        proj = jnp.maximum(
            jnp.dot(hp.astype(jnp.bfloat16), wp_ref[...],
                    preferred_element_type=jnp.float32) + bp_ref[...], 0.0)
        o_ref[0, :, :Cin] = proj.astype(o_ref.dtype)

        # ---- branch_main: 1x1 -> depthwise -> 1x1 ----
        h1 = jnp.maximum(
            jnp.dot(x.astype(jnp.bfloat16), w1_ref[...],
                    preferred_element_type=jnp.float32) + b1_ref[...], 0.0)
        h2 = _depthwise_cl(h1, wd_ref, bd_ref, sel_ref, padm_ref,
                           H=H, W=W, C=mid, k=k, stride=2)      # (HoWo, mid)
        out = jnp.maximum(
            jnp.dot(h2.astype(jnp.bfloat16), w2_ref[...],
                    preferred_element_type=jnp.float32) + b2_ref[...], 0.0)
        o_ref[0, :, Cin:] = out.astype(o_ref.dtype)
    return kernel


# -----------------------------------------------------------------------------
# pallas_call wrappers (host side: layout + BN-folded parameter packing)
# -----------------------------------------------------------------------------
def _run_stride1(x_main, x_proj, p, *, inp, mid, outputs, H, W, k):
    B = x_main.shape[0]
    HW = H * W
    Ctot = inp + outputs
    pd = k // 2
    halo = pd * W + pd

    w1t = p['w1'].T.astype(jnp.bfloat16)                         # (inp, mid)
    b1 = p['b1'][None, :].astype(jnp.float32)                    # (1, mid)
    wd = p['wd'].reshape(mid, k * k).T.astype(jnp.float32)       # (k*k, mid)
    bd = p['bd'][None, :].astype(jnp.float32)
    w2t = p['w2'].T.astype(jnp.bfloat16)                         # (mid, outputs)
    b2 = p['b2'][None, :].astype(jnp.float32)

    kernel = _make_s1_kernel(inp, mid, outputs, H, W, k)
    return pl.pallas_call(
        kernel,
        out_shape=jax.ShapeDtypeStruct((B, HW, Ctot), x_main.dtype),
        grid_spec=pltpu.PrefetchScalarGridSpec(
            num_scalar_prefetch=0,
            grid=(B,),
            in_specs=[
                pl.BlockSpec((1, HW, inp), lambda b: (b, 0, 0)),   # x_main
                pl.BlockSpec((1, HW, inp), lambda b: (b, 0, 0)),   # x_proj
                _rep_spec(w1t.shape), _rep_spec(b1.shape),
                _rep_spec(wd.shape), _rep_spec(bd.shape),
                _rep_spec(w2t.shape), _rep_spec(b2.shape),
            ],
            out_specs=pl.BlockSpec((1, HW, Ctot), lambda b: (b, 0, 0)),
            scratch_shapes=[pltpu.VMEM((HW + 2 * halo, mid), jnp.float32)],
        ),
        compiler_params=pltpu.CompilerParams(dimension_semantics=("parallel",)),
    )(x_main, x_proj, w1t, b1, wd, bd, w2t, b2)


def _run_stride2(x_cl, p, *, inp, mid, outputs, H, W, k):
    B = x_cl.shape[0]
    HW = H * W
    Ctot = inp + outputs
    pd = k // 2
    halo = pd * W + pd
    sel, Ho, Wo = _make_sel(H, W, k, 2)

    w1t = p['w1'].T.astype(jnp.bfloat16)
    b1 = p['b1'][None, :].astype(jnp.float32)
    wd = p['wd'].reshape(mid, k * k).T.astype(jnp.float32)
    bd = p['bd'][None, :].astype(jnp.float32)
    w2t = p['w2'].T.astype(jnp.bfloat16)
    b2 = p['b2'][None, :].astype(jnp.float32)
    wdp = p['wdp'].reshape(inp, k * k).T.astype(jnp.float32)
    bdp = p['bdp'][None, :].astype(jnp.float32)
    wpt = p['wp'].T.astype(jnp.bfloat16)
    bp = p['bp'][None, :].astype(jnp.float32)

    kernel = _make_s2_kernel(inp, mid, outputs, H, W, k)
    out = pl.pallas_call(
        kernel,
        out_shape=jax.ShapeDtypeStruct((B, Ho * Wo, Ctot), x_cl.dtype),
        grid_spec=pltpu.PrefetchScalarGridSpec(
            num_scalar_prefetch=0,
            grid=(B,),
            in_specs=[
                pl.BlockSpec((1, HW, inp), lambda b: (b, 0, 0)),   # x
                _rep_spec(w1t.shape), _rep_spec(b1.shape),
                _rep_spec(wd.shape), _rep_spec(bd.shape),
                _rep_spec(w2t.shape), _rep_spec(b2.shape),
                _rep_spec(wdp.shape), _rep_spec(bdp.shape),
                _rep_spec(wpt.shape), _rep_spec(bp.shape),
                _rep_spec(sel.shape),
            ],
            out_specs=pl.BlockSpec((1, Ho * Wo, Ctot), lambda b: (b, 0, 0)),
            scratch_shapes=[
                pltpu.VMEM((HW + 2 * halo, mid), jnp.float32),     # main pad
                pltpu.VMEM((HW + 2 * halo, inp), jnp.float32),     # proj pad
            ],
        ),
        compiler_params=pltpu.CompilerParams(dimension_semantics=("parallel",)),
    )(x_cl, w1t, b1, wd, bd, w2t, b2, wdp, bdp, wpt, bp, sel)
    return out, Ho, Wo


def shuffle_v2_block_pallas(x, p, *, inp, oup, mid, ksize, stride):
    """Forward pass of ShuffleV2Block. x: (B, C, H, W) NCHW float32."""
    B, C, H, W = x.shape
    outputs = oup - inp
    if stride == 1:
        assert C % 4 == 0 and C == 2 * inp
        # channel shuffle (same as torch reshape/permute): even channels -> proj,
        # odd channels -> main; done as cheap host-side slicing in channels-last.
        x_cl = jnp.transpose(x, (0, 2, 3, 1)).reshape(B, H * W, C)
        x_pair = x_cl.reshape(B, H * W, C // 2, 2)
        x_proj = x_pair[..., 0]                    # (B, HW, inp)
        x_main = x_pair[..., 1]                    # (B, HW, inp)
        out_cl = _run_stride1(x_main, x_proj, p, inp=inp, mid=mid,
                              outputs=outputs, H=H, W=W, k=ksize)
        Ho, Wo = H, W
    else:
        assert C == inp
        x_cl = jnp.transpose(x, (0, 2, 3, 1)).reshape(B, H * W, C)
        out_cl, Ho, Wo = _run_stride2(x_cl, p, inp=inp, mid=mid,
                                      outputs=outputs, H=H, W=W, k=ksize)
    Cout = inp + outputs
    return jnp.transpose(out_cl.reshape(B, Ho, Wo, Cout), (0, 3, 1, 2))


# -----------------------------------------------------------------------------
# deterministic parameter init + BN folding (eval-mode BatchNorm)
# -----------------------------------------------------------------------------
def fold_bn(w, gamma, beta, mean, var, eps=1e-5):
    scale = gamma / jnp.sqrt(var + eps)
    w_f = w * scale.reshape((-1,) + (1,) * (w.ndim - 1))
    b_f = beta - mean * scale
    return w_f, b_f


def init_params(key, *, inp, oup, mid, ksize, stride):
    outputs = oup - inp
    ks = iter(jax.random.split(key, 32))

    def nrm(shape, scale=0.2):
        return scale * jax.random.normal(next(ks), shape, jnp.float32)

    def bn_params(c):
        gamma = 1.0 + 0.1 * jax.random.normal(next(ks), (c,), jnp.float32)
        beta = 0.1 * jax.random.normal(next(ks), (c,), jnp.float32)
        mean = 0.1 * jax.random.normal(next(ks), (c,), jnp.float32)
        var = jax.random.uniform(next(ks), (c,), jnp.float32, 0.5, 1.5)
        return gamma, beta, mean, var

    p = {}
    p['w1'], p['b1'] = fold_bn(nrm((mid, inp)), *bn_params(mid))               # 1x1
    p['wd'], p['bd'] = fold_bn(nrm((mid, ksize, ksize)), *bn_params(mid))      # dw
    p['w2'], p['b2'] = fold_bn(nrm((outputs, mid)), *bn_params(outputs))       # 1x1
    if stride == 2:
        p['wdp'], p['bdp'] = fold_bn(nrm((inp, ksize, ksize)), *bn_params(inp))
        p['wp'], p['bp'] = fold_bn(nrm((inp, inp)), *bn_params(inp))
    return p


# -----------------------------------------------------------------------------
# pure-JAX reference (independent path, for verification)
# -----------------------------------------------------------------------------
def ref_forward(x, p, *, ksize, stride):
    pad = ksize // 2
    relu = lambda v: jnp.maximum(v, 0.0)

    def conv1x1(v, w, b):
        y = lax.conv_general_dilated(v, w[:, :, None, None], (1, 1), 'VALID',
                                     dimension_numbers=('NCHW', 'OIHW', 'NCHW'))
        return y + b[None, :, None, None]

    def dwconv(v, w, b, s):
        y = lax.conv_general_dilated(v, w[:, None, :, :], (s, s),
                                     [(pad, pad), (pad, pad)],
                                     dimension_numbers=('NCHW', 'OIHW', 'NCHW'),
                                     feature_group_count=v.shape[1])
        return y + b[None, :, None, None]

    def branch_main(v):
        h = relu(conv1x1(v, p['w1'], p['b1']))
        h = dwconv(h, p['wd'], p['bd'], stride)
        return relu(conv1x1(h, p['w2'], p['b2']))

    if stride == 1:
        B, C, H, W = x.shape
        xr = jnp.transpose(x.reshape(B * C // 2, 2, H * W), (1, 0, 2))
        xr = xr.reshape(2, B, C // 2, H, W)
        x_proj, x_main = xr[0], xr[1]
        return jnp.concatenate([x_proj, branch_main(x_main)], axis=1)
    else:
        h = dwconv(x, p['wdp'], p['bdp'], stride)
        proj = relu(conv1x1(h, p['wp'], p['bp']))
        return jnp.concatenate([proj, branch_main(x)], axis=1)


# -----------------------------------------------------------------------------
if __name__ == "__main__":
    key = jax.random.PRNGKey(0)
    kx, kp1, kp2 = jax.random.split(key, 3)

    x = jax.random.normal(kx, (2, 4, 16, 16), jnp.float32)

    # stride=1 block: inp=2 (half of the 4 input channels), oup=4, mid=2, k=3
    p1 = init_params(kp1, inp=2, oup=4, mid=2, ksize=3, stride=1)
    out1 = shuffle_v2_block_pallas(x, p1, inp=2, oup=4, mid=2, ksize=3, stride=1)
    out1 = jax.block_until_ready(out1)
    ref1 = ref_forward(x, p1, ksize=3, stride=1)

    # stride=2 block: inp=4, oup=8, mid=4, k=3 -> spatial halved
    p2 = init_params(kp2, inp=4, oup=8, mid=4, ksize=3, stride=2)
    out2 = shuffle_v2_block_pallas(x, p2, inp=4, oup=8, mid=4, ksize=3, stride=2)
    out2 = jax.block_until_ready(out2)
    ref2 = ref_forward(x, p2, ksize=3, stride=2)

    assert out1.shape == (2, 4, 16, 16), out1.shape
    assert out2.shape == (2, 8, 8, 8), out2.shape
    err1 = float(np.max(np.abs(np.asarray(out1) - np.asarray(ref1))))
    err2 = float(np.max(np.abs(np.asarray(out2) - np.asarray(ref2))))
    # bf16 MXU inputs with f32 accumulation -> slightly looser tolerance than pure f32
    assert np.allclose(np.asarray(out1), np.asarray(ref1), atol=2e-2, rtol=2e-2), err1
    assert np.allclose(np.asarray(out2), np.asarray(ref2), atol=2e-2, rtol=2e-2), err2

    print("KERNEL_OK")
</pallas_src>

<mosaic_0001>
module attributes {stable_mosaic.version = 11 : i64} {
  func.func @kernel(%arg0: i32, %arg1: memref<1x256x2xf32, #tpu.memory_space<vmem>>, %arg2: memref<1x256x2xf32, #tpu.memory_space<vmem>>, %arg3: memref<2x2xbf16, #tpu.memory_space<vmem>>, %arg4: memref<1x2xf32, #tpu.memory_space<vmem>>, %arg5: memref<9x2xf32, #tpu.memory_space<vmem>>, %arg6: memref<1x2xf32, #tpu.memory_space<vmem>>, %arg7: memref<2x2xbf16, #tpu.memory_space<vmem>>, %arg8: memref<1x2xf32, #tpu.memory_space<vmem>>, %arg9: memref<1x256x4xf32, #tpu.memory_space<vmem>>, %arg10: memref<290x2xf32, #tpu.memory_space<vmem>>) attributes {dimension_semantics = [#tpu.dimension_semantics<parallel>], iteration_bounds = array<i64: 2>, scalar_prefetch = 0 : i64, scratch_operands = 1 : i64, tpu.core_type = #tpu.core_type<tc>, window_params = [{transform_indices = @transform_0, window_bounds = array<i64: 1, 256, 2>}, {transform_indices = @transform_1, window_bounds = array<i64: 1, 256, 2>}, {pipeline_mode = #tpu.pipeline_mode<synchronous>, transform_indices = @transform_2, window_bounds = array<i64: 2, 2>}, {pipeline_mode = #tpu.pipeline_mode<synchronous>, transform_indices = @transform_3, window_bounds = array<i64: 1, 2>}, {pipeline_mode = #tpu.pipeline_mode<synchronous>, transform_indices = @transform_4, window_bounds = array<i64: 9, 2>}, {pipeline_mode = #tpu.pipeline_mode<synchronous>, transform_indices = @transform_5, window_bounds = array<i64: 1, 2>}, {pipeline_mode = #tpu.pipeline_mode<synchronous>, transform_indices = @transform_6, window_bounds = array<i64: 2, 2>}, {pipeline_mode = #tpu.pipeline_mode<synchronous>, transform_indices = @transform_7, window_bounds = array<i64: 1, 2>}, {transform_indices = @transform_8, window_bounds = array<i64: 1, 256, 4>}]} {
    %c0 = arith.constant 0 : index
    %c0_0 = arith.constant 0 : index
    %c0_1 = arith.constant 0 : index
    %0 = vector.load %arg2[%c0, %c0_0, %c0_1] : memref<1x256x2xf32, #tpu.memory_space<vmem>>, vector<1x256x2xf32>
    %1 = vector.shape_cast %0 : vector<1x256x2xf32> to vector<256x2xf32>
    %c0_2 = arith.constant 0 : index
    %c0_3 = arith.constant 0 : index
    %c0_4 = arith.constant 0 : index
    %2 = vector.load %arg9[%c0_2, %c0_3, %c0_4] : memref<1x256x4xf32, #tpu.memory_space<vmem>>, vector<1x256x2xf32>
    %3 = vector.shape_cast %2 : vector<1x256x2xf32> to vector<256x2xf32>
    %4 = vector.shape_cast %1 : vector<256x2xf32> to vector<1x256x2xf32>
    tpu.vector_store %arg9[%c0_2, %c0_3, %c0_4], %4 {strides = array<i32>} : memref<1x256x4xf32, #tpu.memory_space<vmem>>, vector<1x256x2xf32>,
    %c0_5 = arith.constant 0 : index
    %c0_6 = arith.constant 0 : index
    %c0_7 = arith.constant 0 : index
    %5 = vector.load %arg1[%c0_5, %c0_6, %c0_7] : memref<1x256x2xf32, #tpu.memory_space<vmem>>, vector<1x256x2xf32>
    %6 = vector.shape_cast %5 : vector<1x256x2xf32> to vector<256x2xf32>
    %7 = arith.truncf %6 : vector<256x2xf32> to vector<256x2xbf16>
    %c0_8 = arith.constant 0 : index
    %c0_9 = arith.constant 0 : index
    %8 = vector.load %arg3[%c0_8, %c0_9] : memref<2x2xbf16, #tpu.memory_space<vmem>>, vector<2x2xbf16>
    %cst = arith.constant dense<0.000000e+00> : vector<256x2xf32>
    %9 = tpu.matmul %7, %8, %cst {dimension_numbers = #tpu.dot_dimension_numbers<[1], [0], [0], [1], [0, 0, 1, 1], [], []>} : vector<256x2xbf16>, vector<2x2xbf16>, vector<256x2xf32> -> vector<256x2xf32>
    %c0_10 = arith.constant 0 : index
    %c0_11 = arith.constant 0 : index
    %10 = vector.load %arg4[%c0_10, %c0_11] : memref<1x2xf32, #tpu.memory_space<vmem>>, vector<1x2xf32>
    %11 = vector.broadcast %10 : vector<1x2xf32> to vector<256x2xf32>
    %12 = arith.addf %9, %11 : vector<256x2xf32>
    %cst_12 = arith.constant 0.000000e+00 : f32
    %13 = vector.broadcast %cst_12 : f32 to vector<256x2xf32>
    %14 = arith.maximumf %12, %13 : vector<256x2xf32>
    %cst_13 = arith.constant 0.000000e+00 : f32
    %15 = vector.broadcast %cst_13 : f32 to vector<17x2xf32>
    %c0_14 = arith.constant 0 : index
    %c0_15 = arith.constant 0 : index
    %16 = vector.load %arg10[%c0_14, %c0_15] : memref<290x2xf32, #tpu.memory_space<vmem>>, vector<17x2xf32>
    tpu.vector_store %arg10[%c0_14, %c0_15], %15 {strides = array<i32>} : memref<290x2xf32, #tpu.memory_space<vmem>>, vector<17x2xf32>,
    %cst_16 = arith.constant 0.000000e+00 : f32
    %17 = vector.broadcast %cst_16 : f32 to vector<17x2xf32>
    %c273 = arith.constant 273 : index
    %c0_17 = arith.constant 0 : index
    %18 = vector.load %arg10[%c273, %c0_17] : memref<290x2xf32, #tpu.memory_space<vmem>>, vector<17x2xf32>
    tpu.vector_store %arg10[%c273, %c0_17], %17 {strides = array<i32>} : memref<290x2xf32, #tpu.memory_space<vmem>>, vector<17x2xf32>,
    %c17 = arith.constant 17 : index
    %c0_18 = arith.constant 0 : index
    %19 = vector.load %arg10[%c17, %c0_18] : memref<290x2xf32, #tpu.memory_space<vmem>>, vector<256x2xf32>
    tpu.vector_store %arg10[%c17, %c0_18], %14 {strides = array<i32>} : memref<290x2xf32, #tpu.memory_space<vmem>>, vector<256x2xf32>,
    %c0_19 = arith.constant 0 : index
    %c0_20 = arith.constant 0 : index
    %20 = vector.load %arg5[%c0_19, %c0_20] : memref<9x2xf32, #tpu.memory_space<vmem>>, vector<9x2xf32>
    %21 = tpu.iota {dimensions = array<i32: 0>} : vector<256x1xi32>
    %c16_i32 = arith.constant 16 : i32
    %c0_i32 = arith.constant 0 : i32
    %22 = arith.cmpi eq, %c16_i32, %c0_i32 : i32
    %c1_i32 = arith.constant 1 : i32
    %23 = arith.select %22, %c1_i32, %c16_i32 : i32
    %24 = vector.broadcast %23 : i32 to vector<256x1xi32>
    %25 = arith.remsi %21, %24 : vector<256x1xi32>
    %c0_i32_21 = arith.constant 0 : i32
    %26 = vector.broadcast %c0_i32_21 : i32 to vector<256x1xi32>
    %27 = arith.cmpi ne, %25, %26 : vector<256x1xi32>
    %c0_i32_22 = arith.constant 0 : i32
    %28 = vector.broadcast %c0_i32_22 : i32 to vector<256x1xi32>
    %29 = arith.cmpi slt, %25, %28 : vector<256x1xi32>
    %c0_i32_23 = arith.constant 0 : i32
    %30 = arith.cmpi slt, %23, %c0_i32_23 : i32
    %31 = vector.broadcast %30 : i1 to vector<256x1xi1>
    %32 = vector.broadcast %31 : vector<256x1xi1> to vector<256x1xi1>
    %33 = arith.xori %29, %32 : vector<256x1xi1>
    %34 = arith.andi %33, %27 : vector<256x1xi1>
    %35 = vector.broadcast %23 : i32 to vector<256x1xi32>
    %36 = arith.addi %25, %35 : vector<256x1xi32>
    %37 = arith.select %34, %36, %25 : vector<256x1xi1>, vector<256x1xi32>
    %cst_24 = arith.constant 0.000000e+00 : f32
    %38 = vector.broadcast %cst_24 : f32 to vector<256x2xf32>
    %c-1_i32 = arith.constant -1 : i32
    %39 = vector.broadcast %c-1_i32 : i32 to vector<256x1xi32>
    %40 = arith.addi %37, %39 : vector<256x1xi32>
    %c0_i32_25 = arith.constant 0 : i32
    %41 = vector.broadcast %c0_i32_25 : i32 to vector<256x1xi32>
    %42 = arith.cmpi sge, %40, %41 : vector<256x1xi32>
    %c16_i32_26 = arith.constant 16 : i32
    %43 = vector.broadcast %c16_i32_26 : i32 to vector<256x1xi32>
    %44 = arith.cmpi slt, %40, %43 : vector<256x1xi32>
    %45 = arith.andi %42, %44 : vector<256x1xi1>
    %c0_27 = arith.constant 0 : index
    %c0_28 = arith.constant 0 : index
    %46 = vector.load %arg10[%c0_27, %c0_28] : memref<290x2xf32, #tpu.memory_space<vmem>>, vector<256x2xf32>
    %47 = vector.extract_strided_slice %20 {offsets = [0, 0], sizes = [1, 2], strides = [1, 1]} : vector<9x2xf32> to vector<1x2xf32>
    %48 = vector.broadcast %47 : vector<1x2xf32> to vector<256x2xf32>
    %49 = arith.mulf %46, %48 : vector<256x2xf32>
    %cst_29 = arith.constant 0.000000e+00 : f32
    %50 = vector.shape_cast %45 : vector<256x1xi1> to vector<256x1xi1>
    %51 = vector.broadcast %50 : vector<256x1xi1> to vector<256x2xi1>
    %52 = vector.broadcast %cst_29 : f32 to vector<256x2xf32>
    %53 = arith.select %51, %49, %52 : vector<256x2xi1>, vector<256x2xf32>
    %54 = arith.addf %38, %53 : vector<256x2xf32>
    %c16 = arith.constant 16 : index
    %c0_30 = arith.constant 0 : index
    %55 = vector.load %arg10[%c16, %c0_30] : memref<290x2xf32, #tpu.memory_space<vmem>>, vector<256x2xf32>
    %56 = vector.extract_strided_slice %20 {offsets = [3, 0], sizes = [1, 2], strides = [1, 1]} : vector<9x2xf32> to vector<1x2xf32>
    %57 = vector.broadcast %56 : vector<1x2xf32> to vector<256x2xf32>
    %58 = arith.mulf %55, %57 : vector<256x2xf32>
    %cst_31 = arith.constant 0.000000e+00 : f32
    %59 = vector.shape_cast %45 : vector<256x1xi1> to vector<256x1xi1>
    %60 = vector.broadcast %59 : vector<256x1xi1> to vector<256x2xi1>
    %61 = vector.broadcast %cst_31 : f32 to vector<256x2xf32>
    %62 = arith.select %60, %58, %61 : vector<256x2xi1>, vector<256x2xf32>
    %63 = arith.addf %54, %62 : vector<256x2xf32>
    %c32 = arith.constant 32 : index
    %c0_32 = arith.constant 0 : index
    %64 = vector.load %arg10[%c32, %c0_32] : memref<290x2xf32, #tpu.memory_space<vmem>>, vector<256x2xf32>
    %65 = vector.extract_strided_slice %20 {offsets = [6, 0], sizes = [1, 2], strides = [1, 1]} : vector<9x2xf32> to vector<1x2xf32>
    %66 = vector.broadcast %65 : vector<1x2xf32> to vector<256x2xf32>
    %67 = arith.mulf %64, %66 : vector<256x2xf32>
    %cst_33 = arith.constant 0.000000e+00 : f32
    %68 = vector.shape_cast %45 : vector<256x1xi1> to vector<256x1xi1>
    %69 = vector.broadcast %68 : vector<256x1xi1> to vector<256x2xi1>
    %70 = vector.broadcast %cst_33 : f32 to vector<256x2xf32>
    %71 = arith.select %69, %67, %70 : vector<256x2xi1>, vector<256x2xf32>
    %72 = arith.addf %63, %71 : vector<256x2xf32>
    %c1 = arith.constant 1 : index
    %c0_34 = arith.constant 0 : index
    %73 = vector.load %arg10[%c1, %c0_34] : memref<290x2xf32, #tpu.memory_space<vmem>>, vector<256x2xf32>
    %74 = vector.extract_strided_slice %20 {offsets = [1, 0], sizes = [1, 2], strides = [1, 1]} : vector<9x2xf32> to vector<1x2xf32>
    %75 = vector.broadcast %74 : vector<1x2xf32> to vector<256x2xf32>
    %76 = arith.mulf %73, %75 : vector<256x2xf32>
    %77 = arith.addf %72, %76 : vector<256x2xf32>
    %c17_35 = arith.constant 17 : index
    %c0_36 = arith.constant 0 : index
    %78 = vector.load %arg10[%c17_35, %c0_36] : memref<290x2xf32, #tpu.memory_space<vmem>>, vector<256x2xf32>
    %79 = vector.extract_strided_slice %20 {offsets = [4, 0], sizes = [1, 2], strides = [1, 1]} : vector<9x2xf32> to vector<1x2xf32>
    %80 = vector.broadcast %79 : vector<1x2xf32> to vector<256x2xf32>
    %81 = arith.mulf %78, %80 : vector<256x2xf32>
    %82 = arith.addf %77, %81 : vector<256x2xf32>
    %c33 = arith.constant 33 : index
    %c0_37 = arith.constant 0 : index
    %83 = vector.load %arg10[%c33, %c0_37] : memref<290x2xf32, #tpu.memory_space<vmem>>, vector<256x2xf32>
    %84 = vector.extract_strided_slice %20 {offsets = [7, 0], sizes = [1, 2], strides = [1, 1]} : vector<9x2xf32> to vector<1x2xf32>
    %85 = vector.broadcast %84 : vector<1x2xf32> to vector<256x2xf32>
    %86 = arith.mulf %83, %85 : vector<256x2xf32>
    %87 = arith.addf %82, %86 : vector<256x2xf32>
    %c1_i32_38 = arith.constant 1 : i32
    %88 = vector.broadcast %c1_i32_38 : i32 to vector<256x1xi32>
    %89 = arith.addi %37, %88 : vector<256x1xi32>
    %c0_i32_39 = arith.constant 0 : i32
    %90 = vector.broadcast %c0_i32_39 : i32 to vector<256x1xi32>
    %91 = arith.cmpi sge, %89, %90 : vector<256x1xi32>
    %c16_i32_40 = arith.constant 16 : i32
    %92 = vector.broadcast %c16_i32_40 : i32 to vector<256x1xi32>
    %93 = arith.cmpi slt, %89, %92 : vector<256x1xi32>
    %94 = arith.andi %91, %93 : vector<256x1xi1>
    %c2 = arith.constant 2 : index
    %c0_41 = arith.constant 0 : index
    %95 = vector.load %arg10[%c2, %c0_41] : memref<290x2xf32, #tpu.memory_space<vmem>>, vector<256x2xf32>
    %96 = vector.extract_strided_slice %20 {offsets = [2, 0], sizes = [1, 2], strides = [1, 1]} : vector<9x2xf32> to vector<1x2xf32>
    %97 = vector.broadcast %96 : vector<1x2xf32> to vector<256x2xf32>
    %98 = arith.mulf %95, %97 : vector<256x2xf32>
    %cst_42 = arith.constant 0.000000e+00 : f32
    %99 = vector.shape_cast %94 : vector<256x1xi1> to vector<256x1xi1>
    %100 = vector.broadcast %99 : vector<256x1xi1> to vector<256x2xi1>
    %101 = vector.broadcast %cst_42 : f32 to vector<256x2xf32>
    %102 = arith.select %100, %98, %101 : vector<256x2xi1>, vector<256x2xf32>
    %103 = arith.addf %87, %102 : vector<256x2xf32>
    %c18 = arith.constant 18 : index
    %c0_43 = arith.constant 0 : index
    %104 = vector.load %arg10[%c18, %c0_43] : memref<290x2xf32, #tpu.memory_space<vmem>>, vector<256x2xf32>
    %105 = vector.extract_strided_slice %20 {offsets = [5, 0], sizes = [1, 2], strides = [1, 1]} : vector<9x2xf32> to vector<1x2xf32>
    %106 = vector.broadcast %105 : vector<1x2xf32> to vector<256x2xf32>
    %107 = arith.mulf %104, %106 : vector<256x2xf32>
    %cst_44 = arith.constant 0.000000e+00 : f32
    %108 = vector.shape_cast %94 : vector<256x1xi1> to vector<256x1xi1>
    %109 = vector.broadcast %108 : vector<256x1xi1> to vector<256x2xi1>
    %110 = vector.broadcast %cst_44 : f32 to vector<256x2xf32>
    %111 = arith.select %109, %107, %110 : vector<256x2xi1>, vector<256x2xf32>
    %112 = arith.addf %103, %111 : vector<256x2xf32>
    %c34 = arith.constant 34 : index
    %c0_45 = arith.constant 0 : index
    %113 = vector.load %arg10[%c34, %c0_45] : memref<290x2xf32, #tpu.memory_space<vmem>>, vector<256x2xf32>
    %114 = vector.extract_strided_slice %20 {offsets = [8, 0], sizes = [1, 2], strides = [1, 1]} : vector<9x2xf32> to vector<1x2xf32>
    %115 = vector.broadcast %114 : vector<1x2xf32> to vector<256x2xf32>
    %116 = arith.mulf %113, %115 : vector<256x2xf32>
    %cst_46 = arith.constant 0.000000e+00 : f32
    %117 = vector.shape_cast %94 : vector<256x1xi1> to vector<256x1xi1>
    %118 = vector.broadcast %117 : vector<256x1xi1> to vector<256x2xi1>
    %119 = vector.broadcast %cst_46 : f32 to vector<256x2xf32>
    %120 = arith.select %118, %116, %119 : vector<256x2xi1>, vector<256x2xf32>
    %121 = arith.addf %112, %120 : vector<256x2xf32>
    %c0_47 = arith.constant 0 : index
    %c0_48 = arith.constant 0 : index
    %122 = vector.load %arg6[%c0_47, %c0_48] : memref<1x2xf32, #tpu.memory_space<vmem>>, vector<1x2xf32>
    %123 = vector.broadcast %122 : vector<1x2xf32> to vector<256x2xf32>
    %124 = arith.addf %121, %123 : vector<256x2xf32>
    %125 = arith.truncf %124 : vector<256x2xf32> to vector<256x2xbf16>
    %c0_49 = arith.constant 0 : index
    %c0_50 = arith.constant 0 : index
    %126 = vector.load %arg7[%c0_49, %c0_50] : memref<2x2xbf16, #tpu.memory_space<vmem>>, vector<2x2xbf16>
    %cst_51 = arith.constant dense<0.000000e+00> : vector<256x2xf32>
    %127 = tpu.matmul %125, %126, %cst_51 {dimension_numbers = #tpu.dot_dimension_numbers<[1], [0], [0], [1], [0, 0, 1, 1], [], []>} : vector<256x2xbf16>, vector<2x2xbf16>, vector<256x2xf32> -> vector<256x2xf32>
    %c0_52 = arith.constant 0 : index
    %c0_53 = arith.constant 0 : index
    %128 = vector.load %arg8[%c0_52, %c0_53] : memref<1x2xf32, #tpu.memory_space<vmem>>, vector<1x2xf32>
    %129 = vector.broadcast %128 : vector<1x2xf32> to vector<256x2xf32>
    %130 = arith.addf %127, %129 : vector<256x2xf32>
    %cst_54 = arith.constant 0.000000e+00 : f32
    %131 = vector.broadcast %cst_54 : f32 to vector<256x2xf32>
    %132 = arith.maximumf %130, %131 : vector<256x2xf32>
    %c0_55 = arith.constant 0 : index
    %c0_56 = arith.constant 0 : index
    %c2_57 = arith.constant 2 : index
    %133 = vector.load %arg9[%c0_55, %c0_56, %c2_57] : memref<1x256x4xf32, #tpu.memory_space<vmem>>, vector<1x256x2xf32>
    %134 = vector.shape_cast %133 : vector<1x256x2xf32> to vector<256x2xf32>
    %135 = vector.shape_cast %132 : vector<256x2xf32> to vector<1x256x2xf32>
    tpu.vector_store %arg9[%c0_55, %c0_56, %c2_57], %135 {strides = array<i32>} : memref<1x256x4xf32, #tpu.memory_space<vmem>>, vector<1x256x2xf32>,
    return
  }
  func.func @transform_0(%arg0: i32) -> (i32, i32, i32) {
    %c0_i32 = arith.constant 0 : i32
    %c0_i32_0 = arith.constant 0 : i32
    %c0_i32_1 = arith.constant 0 : i32
    return %arg0, %c0_i32, %c0_i32_0 : i32, i32, i32
  }
  func.func @transform_1(%arg0: i32) -> (i32, i32, i32) {
    %c0_i32 = arith.constant 0 : i32
    %c0_i32_0 = arith.constant 0 : i32
    %c0_i32_1 = arith.constant 0 : i32
    return %arg0, %c0_i32, %c0_i32_0 : i32, i32, i32
  }
  func.func @transform_2(%arg0: i32) -> (i32, i32) {
    %c0_i32 = arith.constant 0 : i32
    %c0_i32_0 = arith.constant 0 : i32
    %c0_i32_1 = arith.constant 0 : i32
    return %c0_i32, %c0_i32_0 : i32, i32
  }
  func.func @transform_3(%arg0: i32) -> (i32, i32) {
    %c0_i32 = arith.constant 0 : i32
    %c0_i32_0 = arith.constant 0 : i32
    %c0_i32_1 = arith.constant 0 : i32
    return %c0_i32, %c0_i32_0 : i32, i32
  }
  func.func @transform_4(%arg0: i32) -> (i32, i32) {
    %c0_i32 = arith.constant 0 : i32
    %c0_i32_0 = arith.constant 0 : i32
    %c0_i32_1 = arith.constant 0 : i32
    return %c0_i32, %c0_i32_0 : i32, i32
  }
  func.func @transform_5(%arg0: i32) -> (i32, i32) {
    %c0_i32 = arith.constant 0 : i32
    %c0_i32_0 = arith.constant 0 : i32
    %c0_i32_1 = arith.constant 0 : i32
    return %c0_i32, %c0_i32_0 : i32, i32
  }
  func.func @transform_6(%arg0: i32) -> (i32, i32) {
    %c0_i32 = arith.constant 0 : i32
    %c0_i32_0 = arith.constant 0 : i32
    %c0_i32_1 = arith.constant 0 : i32
    return %c0_i32, %c0_i32_0 : i32, i32
  }
  func.func @transform_7(%arg0: i32) -> (i32, i32) {
    %c0_i32 = arith.constant 0 : i32
    %c0_i32_0 = arith.constant 0 : i32
    %c0_i32_1 = arith.constant 0 : i32
    return %c0_i32, %c0_i32_0 : i32, i32
  }
  func.func @transform_8(%arg0: i32) -> (i32, i32, i32) {
    %c0_i32 = arith.constant 0 : i32
    %c0_i32_0 = arith.constant 0 : i32
    %c0_i32_1 = arith.constant 0 : i32
    return %arg0, %c0_i32, %c0_i32_0 : i32, i32, i32
  }
}

</mosaic_0001>

<llo_original>
// kernel: tpu_custom_call.1
$region0: #{tpu_custom_call.1}
  #allocation0 [shape = 'u32[]', space=smem, size = 0x4, offset = 0x4, fixed_abs, tag = 'smem constant byte address 0x4 - core index']
  #allocation1 [shape = 'u32[144,128]{1,0:T(1,128)}', space=vmem, size = 0x12000, scoped, tag = 'internal scratch']
  #allocation2 [shape = 'f32[290,2]{1,0:T(8,128)}', space=vmem, size = 0x25000, scoped, tag = 'scratch operand']
  %s0 = inlined_call_operand.vmem [shape: f32[2,256,2], index: 0, kind: input, shape index: {}]
  %s1 = inlined_call_operand.vmem [shape: f32[2,256,2], index: 1, kind: input, shape index: {}]
  %s2 = inlined_call_operand.vmem [shape: bf16[2,2], index: 2, kind: input, shape index: {}]
  %s3 = inlined_call_operand.vmem [shape: f32[1,2], index: 3, kind: input, shape index: {}]
  %s4 = inlined_call_operand.vmem [shape: f32[9,2], index: 4, kind: input, shape index: {}]
  %s5 = inlined_call_operand.vmem [shape: f32[1,2], index: 5, kind: input, shape index: {}]
  %s6 = inlined_call_operand.vmem [shape: bf16[2,2], index: 6, kind: input, shape index: {}]
  %s7 = inlined_call_operand.vmem [shape: f32[1,2], index: 7, kind: input, shape index: {}]
  %s8 = inlined_call_operand.vmem [shape: f32[2,256,4], index: 8, kind: output, shape index: {}]
  %s9 = sld [smem:[#allocation0]]
  $region65: #{tpu_custom_call.1} parent=0
    _
  %s11 = ssub.s32 1, %s9
  %s12 = scalar_select 0, %s11, %s9
  loop: start=0, step=1, limit=4
  $region2: #{tpu_custom_call.1} parent=0 // loop_pre_header
    _
  $region3: #{tpu_custom_call.1} parent=0 // loop_header
    %s14 = sphi 0, %s18
    %p15 = scmp.ge.s32.totalorder %s14, 4
    %s24 = sphi 0, %s26
    %s27 = sphi 0, %s24
    %s28 = sphi 0, %s27
    %s44 = sphi 0, %s28
    %s50 = sphi 0, %s52
    %s53 = sphi 0, %s50
    %s54 = sphi 0, %s53
    %s70 = sphi 0, %s54
    %s74 = sphi 0, %s74
    %s76 = sphi 0, %s74
    %s77 = sphi 0, %s76
    %s91 = sphi 0, %s77
    %s95 = sphi 0, %s95
    %s97 = sphi 0, %s95
    %s98 = sphi 0, %s97
    %s112 = sphi 0, %s98
    %s116 = sphi 0, %s116
    %s118 = sphi 0, %s116
    %s119 = sphi 0, %s118
    %s133 = sphi 0, %s119
    %s137 = sphi 0, %s137
    %s139 = sphi 0, %s137
    %s140 = sphi 0, %s139
    %s154 = sphi 0, %s140
    %s158 = sphi 0, %s158
    %s160 = sphi 0, %s158
    %s161 = sphi 0, %s160
    %s175 = sphi 0, %s161
    %s179 = sphi 0, %s179
    %s181 = sphi 0, %s179
    %s182 = sphi 0, %s181
    %s196 = sphi 0, %s182
    %s202 = sphi 0, %s204
    %s205 = sphi 0, %s202
    %s206 = sphi 0, %s205
    %s222 = sphi 0, %s206
  $region4: #{tpu_custom_call.1} parent=0 // loop_header_branch
    %17 = sbr.rel (%p15) target = $region8
  $region5: #{tpu_custom_call.1} parent=0 // loop_body
    %s19 = ssub.s32 %s14, 1
    %s20 = ssub.s32 %s14, 2
    %s21 = sadd.s32 %s14, 1
    %s22 = ssub.s32 %s14, %s21
    %p23 = scmp.eq.s32.totalorder %s22, 0
    %s25 = sadd.s32 %s24, 1
    %s26 = scalar_select %p23, %s24, %s25
    %p29 = pneg %p23
    %p30 = scmp.eq.s32.totalorder %s14, 1
    %p31 = por %p29, %p30
    %p32 = scmp.ne.s32.totalorder %s24, %s27
    %p33 = scmp.eq.s32.totalorder %s14, 0
    %p34 = por %p32, %p33
    %p35 = scmp.ne.s32.totalorder %s24, %s27
    %p36 = scmp.eq.s32.totalorder %s19, 1
    %p37 = por %p35, %p36
    %p38 = scmp.ne.s32.totalorder %s27, %s28
    %p39 = scmp.eq.s32.totalorder %s19, 0
    %p40 = por %p38, %p39
    %p41 = scmp.ne.s32.totalorder %s27, %s28
    %p42 = scmp.eq.s32.totalorder %s20, 1
    %p43 = por %p41, %p42
    %p45 = scmp.ne.s32.totalorder %s28, %s44
    %p46 = scmp.eq.s32.totalorder %s20, 0
    %p47 = por %p45, %p46
    %s48 = ssub.s32 %s14, %s21
    %p49 = scmp.eq.s32.totalorder %s48, 0
    %s51 = sadd.s32 %s50, 1
    %s52 = scalar_select %p49, %s50, %s51
    %p55 = pneg %p49
    %p56 = scmp.eq.s32.totalorder %s14, 1
    %p57 = por %p55, %p56
    %p58 = scmp.ne.s32.totalorder %s50, %s53
    %p59 = scmp.eq.s32.totalorder %s14, 0
    %p60 = por %p58, %p59
    %p61 = scmp.ne.s32.totalorder %s50, %s53
    %p62 = scmp.eq.s32.totalorder %s19, 1
    %p63 = por %p61, %p62
    %p64 = scmp.ne.s32.totalorder %s53, %s54
    %p65 = scmp.eq.s32.totalorder %s19, 0
    %p66 = por %p64, %p65
    %p67 = scmp.ne.s32.totalorder %s53, %s54
    %p68 = scmp.eq.s32.totalorder %s20, 1
    %p69 = por %p67, %p68
    %p71 = scmp.ne.s32.totalorder %s54, %s70
    %p72 = scmp.eq.s32.totalorder %s20, 0
    %p73 = por %p71, %p72
    %s75 = sadd.s32 %s74, 1
    %p78 = scmp.eq.s32.totalorder %s14, 1
    %p79 = scmp.ne.s32.totalorder %s74, %s76
    %p80 = scmp.eq.s32.totalorder %s14, 0
    %p81 = por %p79, %p80
    %p82 = scmp.ne.s32.totalorder %s74, %s76
    %p83 = scmp.eq.s32.totalorder %s19, 1
    %p84 = por %p82, %p83
    %p85 = scmp.ne.s32.totalorder %s76, %s77
    %p86 = scmp.eq.s32.totalorder %s19, 0
    %p87 = por %p85, %p86
    %p88 = scmp.ne.s32.totalorder %s76, %s77
    %p89 = scmp.eq.s32.totalorder %s20, 1
    %p90 = por %p88, %p89
    %p92 = scmp.ne.s32.totalorder %s77, %s91
    %p93 = scmp.eq.s32.totalorder %s20, 0
    %p94 = por %p92, %p93
    %s96 = sadd.s32 %s95, 1
    %p99 = scmp.eq.s32.totalorder %s14, 1
    %p100 = scmp.ne.s32.totalorder %s95, %s97
    %p101 = scmp.eq.s32.totalorder %s14, 0
    %p102 = por %p100, %p101
    %p103 = scmp.ne.s32.totalorder %s95, %s97
    %p104 = scmp.eq.s32.totalorder %s19, 1
    %p105 = por %p103, %p104
    %p106 = scmp.ne.s32.totalorder %s97, %s98
    %p107 = scmp.eq.s32.totalorder %s19, 0
    %p108 = por %p106, %p107
    %p109 = scmp.ne.s32.totalorder %s97, %s98
    %p110 = scmp.eq.s32.totalorder %s20, 1
    %p111 = por %p109, %p110
    %p113 = scmp.ne.s32.totalorder %s98, %s112
    %p114 = scmp.eq.s32.totalorder %s20, 0
    %p115 = por %p113, %p114
    %s117 = sadd.s32 %s116, 1
    %p120 = scmp.eq.s32.totalorder %s14, 1
    %p121 = scmp.ne.s32.totalorder %s116, %s118
    %p122 = scmp.eq.s32.totalorder %s14, 0
    %p123 = por %p121, %p122
    %p124 = scmp.ne.s32.totalorder %s116, %s118
    %p125 = scmp.eq.s32.totalorder %s19, 1
    %p126 = por %p124, %p125
    %p127 = scmp.ne.s32.totalorder %s118, %s119
    %p128 = scmp.eq.s32.totalorder %s19, 0
    %p129 = por %p127, %p128
    %p130 = scmp.ne.s32.totalorder %s118, %s119
    %p131 = scmp.eq.s32.totalorder %s20, 1
    %p132 = por %p130, %p131
    %p134 = scmp.ne.s32.totalorder %s119, %s133
    %p135 = scmp.eq.s32.totalorder %s20, 0
    %p136 = por %p134, %p135
    %s138 = sadd.s32 %s137, 1
    %p141 = scmp.eq.s32.totalorder %s14, 1
    %p142 = scmp.ne.s32.totalorder %s137, %s139
    %p143 = scmp.eq.s32.totalorder %s14, 0
    %p144 = por %p142, %p143
    %p145 = scmp.ne.s32.totalorder %s137, %s139
    %p146 = scmp.eq.s32.totalorder %s19, 1
    %p147 = por %p145, %p146
    %p148 = scmp.ne.s32.totalorder %s139, %s140
    %p149 = scmp.eq.s32.totalorder %s19, 0
    %p150 = por %p148, %p149
    %p151 = scmp.ne.s32.totalorder %s139, %s140
    %p152 = scmp.eq.s32.totalorder %s20, 1
    %p153 = por %p151, %p152
    %p155 = scmp.ne.s32.totalorder %s140, %s154
    %p156 = scmp.eq.s32.totalorder %s20, 0
    %p157 = por %p155, %p156
    %s159 = sadd.s32 %s158, 1
    %p162 = scmp.eq.s32.totalorder %s14, 1
    %p163 = scmp.ne.s32.totalorder %s158, %s160
    %p164 = scmp.eq.s32.totalorder %s14, 0
    %p165 = por %p163, %p164
    %p166 = scmp.ne.s32.totalorder %s158, %s160
    %p167 = scmp.eq.s32.totalorder %s19, 1
    %p168 = por %p166, %p167
    %p169 = scmp.ne.s32.totalorder %s160, %s161
    %p170 = scmp.eq.s32.totalorder %s19, 0
    %p171 = por %p169, %p170
    %p172 = scmp.ne.s32.totalorder %s160, %s161
    %p173 = scmp.eq.s32.totalorder %s20, 1
    %p174 = por %p172, %p173
    %p176 = scmp.ne.s32.totalorder %s161, %s175
    %p177 = scmp.eq.s32.totalorder %s20, 0
    %p178 = por %p176, %p177
    %s180 = sadd.s32 %s179, 1
    %p183 = scmp.eq.s32.totalorder %s14, 1
    %p184 = scmp.ne.s32.totalorder %s179, %s181
    %p185 = scmp.eq.s32.totalorder %s14, 0
    %p186 = por %p184, %p185
    %p187 = scmp.ne.s32.totalorder %s179, %s181
    %p188 = scmp.eq.s32.totalorder %s19, 1
    %p189 = por %p187, %p188
    %p190 = scmp.ne.s32.totalorder %s181, %s182
    %p191 = scmp.eq.s32.totalorder %s19, 0
    %p192 = por %p190, %p191
    %p193 = scmp.ne.s32.totalorder %s181, %s182
    %p194 = scmp.eq.s32.totalorder %s20, 1
    %p195 = por %p193, %p194
    %p197 = scmp.ne.s32.totalorder %s182, %s196
    %p198 = scmp.eq.s32.totalorder %s20, 0
    %p199 = por %p197, %p198
    %s200 = ssub.s32 %s14, %s21
    %p201 = scmp.eq.s32.totalorder %s200, 0
    %s203 = sadd.s32 %s202, 1
    %s204 = scalar_select %p201, %s202, %s203
    %p207 = pneg %p201
    %p208 = scmp.eq.s32.totalorder %s14, 1
    %p209 = por %p207, %p208
    %p210 = scmp.ne.s32.totalorder %s202, %s205
    %p211 = scmp.eq.s32.totalorder %s14, 0
    %p212 = por %p210, %p211
    %p213 = scmp.ne.s32.totalorder %s202, %s205
    %p214 = scmp.eq.s32.totalorder %s19, 1
    %p215 = por %p213, %p214
    %p216 = scmp.ne.s32.totalorder %s205, %s206
    %p217 = scmp.eq.s32.totalorder %s19, 0
    %p218 = por %p216, %p217
    %p219 = scmp.ne.s32.totalorder %s205, %s206
    %p220 = scmp.eq.s32.totalorder %s20, 1
    %p221 = por %p219, %p220
    %p223 = scmp.ne.s32.totalorder %s206, %s222
    %p224 = scmp.eq.s32.totalorder %s20, 0
    %p225 = por %p223, %p224
    %p226 = scmp.le.s32.totalorder 1, %s14
    %p227 = scmp.lt.s32.totalorder %s14, 3
    %p228 = pnand %p226, %p227
    %p229 = pneg %p228
    // Predicated region
    $region9: #{tpu_custom_call.1} parent=5 // pred_check
      _
    $region10: #{tpu_custom_call.1} parent=5 // pred_check_branch
      %231 = sbr.rel (%p228) target = $region12
    $region11: #{tpu_custom_call.1} parent=5 // pred_region
      %s232 = ssub.s32 %s14, 1
      // Predicated region
      $region13: #{tpu_custom_call.1} parent=11 // pred_check
        %p233 = pneg %p87
      $region14: #{tpu_custom_call.1} parent=11 // pred_check_branch
        %235 = sbr.rel (%p233) target = $region16
      $region15: #{tpu_custom_call.1} parent=11 // pred_region
        _
      $region16: #{tpu_custom_call.1} parent=11 // pred_fallthru
        _
      // Predicated region
      $region17: #{tpu_custom_call.1} parent=11 // pred_check
        %p236 = pneg %p108
      $region18: #{tpu_custom_call.1} parent=11 // pred_check_branch
        %238 = sbr.rel (%p236) target = $region20
      $region19: #{tpu_custom_call.1} parent=11 // pred_region
        _
      $region20: #{tpu_custom_call.1} parent=11 // pred_fallthru
        _
      // Predicated region
      $region21: #{tpu_custom_call.1} parent=11 // pred_check
        %p239 = pneg %p129
      $region22: #{tpu_custom_call.1} parent=11 // pred_check_branch
        %241 = sbr.rel (%p239) target = $region24
      $region23: #{tpu_custom_call.1} parent=11 // pred_region
        _
      $region24: #{tpu_custom_call.1} parent=11 // pred_fallthru
        _
      // Predicated region
      $region25: #{tpu_custom_call.1} parent=11 // pred_check
        %p242 = pneg %p150
      $region26: #{tpu_custom_call.1} parent=11 // pred_check_branch
        %244 = sbr.rel (%p242) target = $region28
      $region27: #{tpu_custom_call.1} parent=11 // pred_region
        _
      $region28: #{tpu_custom_call.1} parent=11 // pred_fallthru
        _
      // Predicated region
      $region29: #{tpu_custom_call.1} parent=11 // pred_check
        %p245 = pneg %p171
      $region30: #{tpu_custom_call.1} parent=11 // pred_check_branch
        %247 = sbr.rel (%p245) target = $region32
      $region31: #{tpu_custom_call.1} parent=11 // pred_region
        _
      $region32: #{tpu_custom_call.1} parent=11 // pred_fallthru
        _
      // Predicated region
      $region33: #{tpu_custom_call.1} parent=11 // pred_check
        %p248 = pneg %p192
      $region34: #{tpu_custom_call.1} parent=11 // pred_check_branch
        %250 = sbr.rel (%p248) target = $region36
      $region35: #{tpu_custom_call.1} parent=11 // pred_region
        _
      $region36: #{tpu_custom_call.1} parent=11 // pred_fallthru
        _
    $region12: #{tpu_custom_call.1} parent=5 // pred_fallthru
      _
    %p251 = scmp.lt.s32.totalorder %s14, 2
    // Predicated region
    $region37: #{tpu_custom_call.1} parent=5 // pred_check
      %p252 = pneg %p251
    $region38: #{tpu_custom_call.1} parent=5 // pred_check_branch
      %254 = sbr.rel (%p252) target = $region40
    $region39: #{tpu_custom_call.1} parent=5 // pred_region
      // Predicated region
      $region41: #{tpu_custom_call.1} parent=39 // pred_check
        %p255 = pneg %p34
      $region42: #{tpu_custom_call.1} parent=39 // pred_check_branch
        %257 = sbr.rel (%p255) target = $region44
      $region43: #{tpu_custom_call.1} parent=39 // pred_region
        %p258 = scmp.lt.s32.totalorder %s14, 1
        %s259 = scalar_select %p258, %s14, 1
        %s260 = smul.addr %s259, 32
        %s261 = smul.addr %s260, 8
        %s262 = scalar_lea.vmem %s0, %s261
      $region44: #{tpu_custom_call.1} parent=39 // pred_fallthru
        _
      // Predicated region
      $region45: #{tpu_custom_call.1} parent=39 // pred_check
        %p263 = pneg %p60
      $region46: #{tpu_custom_call.1} parent=39 // pred_check_branch
        %265 = sbr.rel (%p263) target = $region48
      $region47: #{tpu_custom_call.1} parent=39 // pred_region
        %p266 = scmp.lt.s32.totalorder %s14, 1
        %s267 = scalar_select %p266, %s14, 1
        %s268 = smul.addr %s267, 32
        %s269 = smul.addr %s268, 8
        %s270 = scalar_lea.vmem %s1, %s269
      $region48: #{tpu_custom_call.1} parent=39 // pred_fallthru
        _
    $region40: #{tpu_custom_call.1} parent=5 // pred_fallthru
      _
    %p271 = scmp.le.s32.totalorder 1, %s14
    %p272 = scmp.lt.s32.totalorder %s14, 3
    %p273 = pnand %p271, %p272
    %p274 = pneg %p273
    // Predicated region
    $region49: #{tpu_custom_call.1} parent=5 // pred_check
      _
    $region50: #{tpu_custom_call.1} parent=5 // pred_check_branch
      %276 = sbr.rel (%p273) target = $region52
    $region51: #{tpu_custom_call.1} parent=5 // pred_region
      %s277 = ssub.s32 %s14, 1
      %p278 = scmp.lt.s32.totalorder %s19, 1
      %s279 = scalar_select %p278, %s19, 1
      %s280 = smul.addr %s279, 32
      %s281 = smul.addr %s280, 8
      %s282 = scalar_lea.vmem %s0, %s281
      %p283 = pneg %p40
      %p284 = pneg %p37
      %p285 = scmp.lt.s32.totalorder %s19, 1
      %s286 = scalar_select %p285, %s19, 1
      %s287 = smul.addr %s286, 32
      %s288 = smul.addr %s287, 8
      %s289 = scalar_lea.vmem %s1, %s288
      %p290 = pneg %p66
      %p291 = pneg %p63
      %p292 = pneg %p87
      %p293 = pneg %p84
      %p294 = pneg %p108
      %p295 = pneg %p105
      %p296 = pneg %p129
      %p297 = pneg %p126
      %p298 = pneg %p150
      %p299 = pneg %p147
      %p300 = pneg %p171
      %p301 = pneg %p168
      %p302 = pneg %p192
      %p303 = pneg %p189
      %p304 = pneg %p218
      %p305 = pneg %p215
      %p306 = scmp.lt.s32.totalorder %s19, 1
      %s307 = scalar_select %p306, %s19, 1
      %s308 = smul.addr %s307, 32
      %s309 = smul.addr %s308, 8
      %s310 = scalar_lea.vmem %s8, %s309
      %p311 = scmp.lt.s32.totalorder %s19, 1
      %s312 = scalar_select %p311, %s19, 1
      %s313 = smul.addr %s312, 32
      %s314 = smul.addr %s313, 8
      %s315 = scalar_lea.vmem %s0, %s314
      %p316 = scmp.lt.s32.totalorder %s19, 1
      %s317 = scalar_select %p316, %s19, 1
      %s318 = smul.addr %s317, 32
      %s319 = smul.addr %s318, 8
      %s320 = scalar_lea.vmem %s1, %s319
      %p321 = scmp.lt.s32.totalorder %s19, 1
      %s322 = scalar_select %p321, %s19, 1
      %s323 = smul.addr %s322, 32
      %s324 = smul.addr %s323, 8
      %s325 = scalar_lea.vmem %s8, %s324
      %v327 = vld [vmem:[%s320] sm:$0xff]
      %v328 = vld [vmem:[%s320 + $0x8] sm:$0xff]
      %v329 = vld [vmem:[%s320 + $0x10] sm:$0xff]
      %v330 = vld [vmem:[%s320 + $0x18] sm:$0xff]
      %v331 = vld [vmem:[%s320 + $0x20] sm:$0xff]
      %v332 = vld [vmem:[%s320 + $0x28] sm:$0xff]
      %v333 = vld [vmem:[%s320 + $0x30] sm:$0xff]
      %v334 = vld [vmem:[%s320 + $0x38] sm:$0xff]
      %v335 = vld [vmem:[%s320 + $0x40] sm:$0xff]
      %v336 = vld [vmem:[%s320 + $0x48] sm:$0xff]
      %v337 = vld [vmem:[%s320 + $0x50] sm:$0xff]
      %v338 = vld [vmem:[%s320 + $0x58] sm:$0xff]
      %v339 = vld [vmem:[%s320 + $0x60] sm:$0xff]
      %v340 = vld [vmem:[%s320 + $0x68] sm:$0xff]
      %v341 = vld [vmem:[%s320 + $0x70] sm:$0xff]
      %v342 = vld [vmem:[%s320 + $0x78] sm:$0xff]
      %v343 = vld [vmem:[%s320 + $0x80] sm:$0xff]
      %v344 = vld [vmem:[%s320 + $0x88] sm:$0xff]
      %v345 = vld [vmem:[%s320 + $0x90] sm:$0xff]
      %v346 = vld [vmem:[%s320 + $0x98] sm:$0xff]
      %v347 = vld [vmem:[%s320 + $0xa0] sm:$0xff]
      %v348 = vld [vmem:[%s320 + $0xa8] sm:$0xff]
      %v349 = vld [vmem:[%s320 + $0xb0] sm:$0xff]
      %v350 = vld [vmem:[%s320 + $0xb8] sm:$0xff]
      %v351 = vld [vmem:[%s320 + $0xc0] sm:$0xff]
      %v352 = vld [vmem:[%s320 + $0xc8] sm:$0xff]
      %v353 = vld [vmem:[%s320 + $0xd0] sm:$0xff]
      %v354 = vld [vmem:[%s320 + $0xd8] sm:$0xff]
      %v355 = vld [vmem:[%s320 + $0xe0] sm:$0xff]
      %v356 = vld [vmem:[%s320 + $0xe8] sm:$0xff]
      %v357 = vld [vmem:[%s320 + $0xf0] sm:$0xff]
      %v358 = vld [vmem:[%s320 + $0xf8] sm:$0xff]
      %vm359 = vcmask 15360
      %360 = vst.msk [vmem:[%s325] sm:$0xff] %vm359, %v327
      %361 = vst.msk [vmem:[%s325 + $0x8] sm:$0xff] %vm359, %v328
      %362 = vst.msk [vmem:[%s325 + $0x10] sm:$0xff] %vm359, %v329
      %363 = vst.msk [vmem:[%s325 + $0x18] sm:$0xff] %vm359, %v330
      %364 = vst.msk [vmem:[%s325 + $0x20] sm:$0xff] %vm359, %v331
      %365 = vst.msk [vmem:[%s325 + $0x28] sm:$0xff] %vm359, %v332
      %366 = vst.msk [vmem:[%s325 + $0x30] sm:$0xff] %vm359, %v333
      %367 = vst.msk [vmem:[%s325 + $0x38] sm:$0xff] %vm359, %v334
      %368 = vst.msk [vmem:[%s325 + $0x40] sm:$0xff] %vm359, %v335
      %369 = vst.msk [vmem:[%s325 + $0x48] sm:$0xff] %vm359, %v336
      %370 = vst.msk [vmem:[%s325 + $0x50] sm:$0xff] %vm359, %v337
      %371 = vst.msk [vmem:[%s325 + $0x58] sm:$0xff] %vm359, %v338
      %372 = vst.msk [vmem:[%s325 + $0x60] sm:$0xff] %vm359, %v339
      %373 = vst.msk [vmem:[%s325 + $0x68] sm:$0xff] %vm359, %v340
      %374 = vst.msk [vmem:[%s325 + $0x70] sm:$0xff] %vm359, %v341
      %375 = vst.msk [vmem:[%s325 + $0x78] sm:$0xff] %vm359, %v342
      %376 = vst.msk [vmem:[%s325 + $0x80] sm:$0xff] %vm359, %v343
      %377 = vst.msk [vmem:[%s325 + $0x88] sm:$0xff] %vm359, %v344
      %378 = vst.msk [vmem:[%s325 + $0x90] sm:$0xff] %vm359, %v345
      %379 = vst.msk [vmem:[%s325 + $0x98] sm:$0xff] %vm359, %v346
      %380 = vst.msk [vmem:[%s325 + $0xa0] sm:$0xff] %vm359, %v347
      %381 = vst.msk [vmem:[%s325 + $0xa8] sm:$0xff] %vm359, %v348
      %382 = vst.msk [vmem:[%s325 + $0xb0] sm:$0xff] %vm359, %v349
      %383 = vst.msk [vmem:[%s325 + $0xb8] sm:$0xff] %vm359, %v350
      %384 = vst.msk [vmem:[%s325 + $0xc0] sm:$0xff] %vm359, %v351
      %385 = vst.msk [vmem:[%s325 + $0xc8] sm:$0xff] %vm359, %v352
      %386 = vst.msk [vmem:[%s325 + $0xd0] sm:$0xff] %vm359, %v353
      %387 = vst.msk [vmem:[%s325 + $0xd8] sm:$0xff] %vm359, %v354
      %388 = vst.msk [vmem:[%s325 + $0xe0] sm:$0xff] %vm359, %v355
      %389 = vst.msk [vmem:[%s325 + $0xe8] sm:$0xff] %vm359, %v356
      %390 = vst.msk [vmem:[%s325 + $0xf0] sm:$0xff] %vm359, %v357
      %391 = vst.msk [vmem:[%s325 + $0xf8] sm:$0xff] %vm359, %v358
      %v392 = vld [vmem:[%s315] sm:$0xff]
      %v393 = vld [vmem:[%s315 + $0x8] sm:$0xff]
      %v394 = vld [vmem:[%s315 + $0x10] sm:$0xff]
      %v395 = vld [vmem:[%s315 + $0x18] sm:$0xff]
      %v396 = vld [vmem:[%s315 + $0x20] sm:$0xff]
      %v397 = vld [vmem:[%s315 + $0x28] sm:$0xff]
      %v398 = vld [vmem:[%s315 + $0x30] sm:$0xff]
      %v399 = vld [vmem:[%s315 + $0x38] sm:$0xff]
      %v400 = vld [vmem:[%s315 + $0x40] sm:$0xff]
      %v401 = vld [vmem:[%s315 + $0x48] sm:$0xff]
      %v402 = vld [vmem:[%s315 + $0x50] sm:$0xff]
      %v403 = vld [vmem:[%s315 + $0x58] sm:$0xff]
      %v404 = vld [vmem:[%s315 + $0x60] sm:$0xff]
      %v405 = vld [vmem:[%s315 + $0x68] sm:$0xff]
      %v406 = vld [vmem:[%s315 + $0x70] sm:$0xff]
      %v407 = vld [vmem:[%s315 + $0x78] sm:$0xff]
      %v408 = vld [vmem:[%s315 + $0x80] sm:$0xff]
      %v409 = vld [vmem:[%s315 + $0x88] sm:$0xff]
      %v410 = vld [vmem:[%s315 + $0x90] sm:$0xff]
      %v411 = vld [vmem:[%s315 + $0x98] sm:$0xff]
      %v412 = vld [vmem:[%s315 + $0xa0] sm:$0xff]
      %v413 = vld [vmem:[%s315 + $0xa8] sm:$0xff]
      %v414 = vld [vmem:[%s315 + $0xb0] sm:$0xff]
      %v415 = vld [vmem:[%s315 + $0xb8] sm:$0xff]
      %v416 = vld [vmem:[%s315 + $0xc0] sm:$0xff]
      %v417 = vld [vmem:[%s315 + $0xc8] sm:$0xff]
      %v418 = vld [vmem:[%s315 + $0xd0] sm:$0xff]
      %v419 = vld [vmem:[%s315 + $0xd8] sm:$0xff]
      %v420 = vld [vmem:[%s315 + $0xe0] sm:$0xff]
      %v421 = vld [vmem:[%s315 + $0xe8] sm:$0xff]
      %v422 = vld [vmem:[%s315 + $0xf0] sm:$0xff]
      %v423 = vld [vmem:[%s315 + $0xf8] sm:$0xff]
      %v424 = vpack.c.bf16 %v393, %v392
      %v425 = vpack.c.bf16 %v395, %v394
      %v426 = vpack.c.bf16 %v397, %v396
      %v427 = vpack.c.bf16 %v399, %v398
      %v428 = vpack.c.bf16 %v401, %v400
      %v429 = vpack.c.bf16 %v403, %v402
      %v430 = vpack.c.bf16 %v405, %v404
      %v431 = vpack.c.bf16 %v407, %v406
      %v432 = vpack.c.bf16 %v409, %v408
      %v433 = vpack.c.bf16 %v411, %v410
      %v434 = vpack.c.bf16 %v413, %v412
      %v435 = vpack.c.bf16 %v415, %v414
      %v436 = vpack.c.bf16 %v417, %v416
      %v437 = vpack.c.bf16 %v419, %v418
      %v438 = vpack.c.bf16 %v421, %v420
      %v439 = vpack.c.bf16 %v423, %v422
      %v440 = vld [vmem:[%s2] sm:$0x1]
      %v441 = vld [vmem:[%s3] sm:$0x1]
      %v443 = vlaneseq
      %v444 = vshrl.u32 %v443, 7
      %v445 = vsub.s32 0, %v444
      %v446 = vrot.slane %v441, %v445
      %v449 = vsel %vm359, %v424, 0
      %v452 = vsel %vm359, %v425, 0
      %v455 = vsel %vm359, %v426, 0
      %v458 = vsel %vm359, %v427, 0
      %v461 = vsel %vm359, %v428, 0
      %v464 = vsel %vm359, %v429, 0
      %v467 = vsel %vm359, %v430, 0
      %v470 = vsel %vm359, %v431, 0
      %v473 = vsel %vm359, %v432, 0
      %v476 = vsel %vm359, %v433, 0
      %v479 = vsel %vm359, %v434, 0
      %v482 = vsel %vm359, %v435, 0
      %v485 = vsel %vm359, %v436, 0
      %v488 = vsel %vm359, %v437, 0
      %v491 = vsel %vm359, %v438, 0
      %v494 = vsel %vm359, %v439, 0
      %vm496 = vcmask 1040384
      %v498 = vsel %vm496, %v440, 0
      %500 = vmatprep.subr.bf16.mxu0 0
      %501 = vmatpush1.bf16.msra.mxu0 0
      %502 = vmatprep.subr.bf16.mxu0 0
      %503 = vmatpush1.bf16.msra.mxu0 0
      %504 = vmatprep.subr.bf16.mxu0 0
      %505 = vmatpush1.bf16.msra.mxu0 0
      %506 = vmatprep.subr.bf16.mxu0 0
      %507 = vmatpush1.bf16.msra.mxu0 0
      %508 = vmatprep.subr.bf16.mxu0 0
      %509 = vmatpush1.bf16.msra.mxu0 0
      %510 = vmatprep.subr.bf16.mxu0 0
      %511 = vmatpush1.bf16.msra.mxu0 0
      %512 = vmatprep.subr.bf16.mxu0 0
      %513 = vmatpush1.bf16.msra.mxu0 0
      %514 = vmatprep.subr.bf16.mxu0 0
      %515 = vmatpush1.bf16.msra.mxu0 %v498
      %516 = vmatprep.subr.bf16.mxu0 0
      %517 = vmatpush2.bf16.msra.mxu0 0
      %518 = vmatprep.subr.bf16.mxu0 0
      %519 = vmatpush2.bf16.msra.mxu0 0
      %520 = vmatprep.subr.bf16.mxu0 0
      %521 = vmatpush2.bf16.msra.mxu0 0
      %522 = vmatprep.subr.bf16.mxu0 0
      %523 = vmatpush2.bf16.msra.mxu0 0
      %524 = vmatprep.subr.bf16.mxu0 0
      %525 = vmatpush2.bf16.msra.mxu0 0
      %526 = vmatprep.subr.bf16.mxu0 0
      %527 = vmatpush2.bf16.msra.mxu0 0
      %528 = vmatprep.subr.bf16.mxu0 0
      %529 = vmatpush2.bf16.msra.mxu0 0
      %530 = vmatprep.subr.bf16.mxu0 0
      %531 = vmatpush2.bf16.msra.mxu0 0
      %532 = vmatprep.mubr.bf16.mxu0 0
      %533 = vmatmul.mubr.bf16.gmra.mxu0 %v449
      %v534 = vpop.f32.mrf.mxu0
      %v535 = vadd.f32 %v446, %v534
      %v536 = vpop.f32.mrf.mxu0
      %v537 = vpop.f32.mrf.mxu0
      %v538 = vadd.f32 %v446, %v537
      %v539 = vpop.f32.mrf.mxu0
      %540 = vmatprep.mubr.bf16.mxu0 0
      %541 = vmatmul.mubr.bf16.gmra.mxu0 %v452
      %v542 = vpop.f32.mrf.mxu0
      %v543 = vadd.f32 %v446, %v542
      %v544 = vpop.f32.mrf.mxu0
      %v545 = vpop.f32.mrf.mxu0
      %v546 = vadd.f32 %v446, %v545
      %v547 = vpop.f32.mrf.mxu0
      %548 = vmatprep.mubr.bf16.mxu0 0
      %549 = vmatmul.mubr.bf16.gmra.mxu0 %v455
      %v550 = vpop.f32.mrf.mxu0
      %v551 = vadd.f32 %v446, %v550
      %v552 = vpop.f32.mrf.mxu0
      %v553 = vpop.f32.mrf.mxu0
      %v554 = vadd.f32 %v446, %v553
      %v555 = vpop.f32.mrf.mxu0
      %556 = vmatprep.mubr.bf16.mxu0 0
      %557 = vmatmul.mubr.bf16.gmra.mxu0 %v458
      %v558 = vpop.f32.mrf.mxu0
      %v559 = vadd.f32 %v446, %v558
      %v560 = vpop.f32.mrf.mxu0
      %v561 = vpop.f32.mrf.mxu0
      %v562 = vadd.f32 %v446, %v561
      %v563 = vpop.f32.mrf.mxu0
      %564 = vmatprep.mubr.bf16.mxu0 0
      %565 = vmatmul.mubr.bf16.gmra.mxu0 %v461
      %v566 = vpop.f32.mrf.mxu0
      %v567 = vadd.f32 %v446, %v566
      %v568 = vpop.f32.mrf.mxu0
      %v569 = vpop.f32.mrf.mxu0
      %v570 = vadd.f32 %v446, %v569
      %v571 = vpop.f32.mrf.mxu0
      %572 = vmatprep.mubr.bf16.mxu0 0
      %573 = vmatmul.mubr.bf16.gmra.mxu0 %v464
      %v574 = vpop.f32.mrf.mxu0
      %v575 = vadd.f32 %v446, %v574
      %v576 = vpop.f32.mrf.mxu0
      %v577 = vpop.f32.mrf.mxu0
      %v578 = vadd.f32 %v446, %v577
      %v579 = vpop.f32.mrf.mxu0
      %580 = vmatprep.mubr.bf16.mxu0 0
      %581 = vmatmul.mubr.bf16.gmra.mxu0 %v467
      %v582 = vpop.f32.mrf.mxu0
      %v583 = vadd.f32 %v446, %v582
      %v584 = vpop.f32.mrf.mxu0
      %v585 = vpop.f32.mrf.mxu0
      %v586 = vadd.f32 %v446, %v585
      %v587 = vpop.f32.mrf.mxu0
      %588 = vmatprep.mubr.bf16.mxu0 0
      %589 = vmatmul.mubr.bf16.gmra.mxu0 %v470
      %v590 = vpop.f32.mrf.mxu0
      %v591 = vadd.f32 %v446, %v590
      %v592 = vpop.f32.mrf.mxu0
      %v593 = vpop.f32.mrf.mxu0
      %v594 = vadd.f32 %v446, %v593
      %v595 = vpop.f32.mrf.mxu0
      %596 = vmatprep.mubr.bf16.mxu0 0
      %597 = vmatmul.mubr.bf16.gmra.mxu0 %v473
      %v598 = vpop.f32.mrf.mxu0
      %v599 = vadd.f32 %v446, %v598
      %v600 = vpop.f32.mrf.mxu0
      %v601 = vpop.f32.mrf.mxu0
      %v602 = vadd.f32 %v446, %v601
      %v603 = vpop.f32.mrf.mxu0
      %604 = vmatprep.mubr.bf16.mxu0 0
      %605 = vmatmul.mubr.bf16.gmra.mxu0 %v476
      %v606 = vpop.f32.mrf.mxu0
      %v607 = vadd.f32 %v446, %v606
      %v608 = vpop.f32.mrf.mxu0
      %v609 = vpop.f32.mrf.mxu0
      %v610 = vadd.f32 %v446, %v609
      %v611 = vpop.f32.mrf.mxu0
      %612 = vmatprep.mubr.bf16.mxu0 0
      %613 = vmatmul.mubr.bf16.gmra.mxu0 %v479
      %v614 = vpop.f32.mrf.mxu0
      %v615 = vadd.f32 %v446, %v614
      %v616 = vpop.f32.mrf.mxu0
      %v617 = vpop.f32.mrf.mxu0
      %v618 = vadd.f32 %v446, %v617
      %v619 = vpop.f32.mrf.mxu0
      %620 = vmatprep.mubr.bf16.mxu0 0
      %621 = vmatmul.mubr.bf16.gmra.mxu0 %v482
      %v622 = vpop.f32.mrf.mxu0
      %v623 = vadd.f32 %v446, %v622
      %v624 = vpop.f32.mrf.mxu0
      %v625 = vpop.f32.mrf.mxu0
      %v626 = vadd.f32 %v446, %v625
      %v627 = vpop.f32.mrf.mxu0
      %628 = vmatprep.mubr.bf16.mxu0 0
      %629 = vmatmul.mubr.bf16.gmra.mxu0 %v485
      %v630 = vpop.f32.mrf.mxu0
      %v631 = vadd.f32 %v446, %v630
      %v632 = vpop.f32.mrf.mxu0
      %v633 = vpop.f32.mrf.mxu0
      %v634 = vadd.f32 %v446, %v633
      %v635 = vpop.f32.mrf.mxu0
      %636 = vmatprep.mubr.bf16.mxu0 0
      %637 = vmatmul.mubr.bf16.gmra.mxu0 %v488
      %v638 = vpop.f32.mrf.mxu0
      %v639 = vadd.f32 %v446, %v638
      %v640 = vpop.f32.mrf.mxu0
      %v641 = vpop.f32.mrf.mxu0
      %v642 = vadd.f32 %v446, %v641
      %v643 = vpop.f32.mrf.mxu0
      %644 = vmatprep.mubr.bf16.mxu0 0
      %645 = vmatmul.mubr.bf16.gmra.mxu0 %v491
      %v646 = vpop.f32.mrf.mxu0
      %v647 = vadd.f32 %v446, %v646
      %v648 = vpop.f32.mrf.mxu0
      %v649 = vpop.f32.mrf.mxu0
      %v650 = vadd.f32 %v446, %v649
      %v651 = vpop.f32.mrf.mxu0
      %652 = vmatprep.mubr.bf16.mxu0 0
      %653 = vmatmul.mubr.bf16.gmra.mxu0 %v494
      %v654 = vpop.f32.mrf.mxu0
      %v655 = vadd.f32 %v446, %v654
      %v656 = vpop.f32.mrf.mxu0
      %v657 = vpop.f32.mrf.mxu0
      %v658 = vadd.f32 %v446, %v657
      %v659 = vpop.f32.mrf.mxu0
      %660 = vdwg.mxu0
      %v661 = vmax.f32 %v535, 0.0
      %v662 = vmax.f32 %v538, 0.0
      %v663 = vmax.f32 %v543, 0.0
      %v664 = vmax.f32 %v546, 0.0
      %v665 = vmax.f32 %v551, 0.0
      %v666 = vmax.f32 %v554, 0.0
      %v667 = vmax.f32 %v559, 0.0
      %v668 = vmax.f32 %v562, 0.0
      %v669 = vmax.f32 %v567, 0.0
      %v670 = vmax.f32 %v570, 0.0
      %v671 = vmax.f32 %v575, 0.0
      %v672 = vmax.f32 %v578, 0.0
      %v673 = vmax.f32 %v583, 0.0
      %v674 = vmax.f32 %v586, 0.0
      %v675 = vmax.f32 %v591, 0.0
      %v676 = vmax.f32 %v594, 0.0
      %v677 = vmax.f32 %v599, 0.0
      %v678 = vmax.f32 %v602, 0.0
      %v679 = vmax.f32 %v607, 0.0
      %v680 = vmax.f32 %v610, 0.0
      %v681 = vmax.f32 %v615, 0.0
      %v682 = vmax.f32 %v618, 0.0
      %v683 = vmax.f32 %v623, 0.0
      %v684 = vmax.f32 %v626, 0.0
      %v685 = vmax.f32 %v631, 0.0
      %v686 = vmax.f32 %v634, 0.0
      %v687 = vmax.f32 %v639, 0.0
      %v688 = vmax.f32 %v642, 0.0
      %v689 = vmax.f32 %v647, 0.0
      %v690 = vmax.f32 %v650, 0.0
      %v691 = vmax.f32 %v655, 0.0
      %v692 = vmax.f32 %v658, 0.0
      %693 = vst.msk [vmem:[#allocation2] sm:$0xff] %vm359, 0.0
      %694 = vst.msk [vmem:[#allocation2 + $0x8] sm:$0xff] %vm359, 0.0
      %vm695 = vcmask 8192
      %696 = vst.msk [vmem:[#allocation2 + $0x10] sm:$0x1] %vm695, 0.0
      %697 = vst.msk [vmem:[#allocation2 + $0x111] sm:$0xff] %vm359, 0.0
      %698 = vst.msk [vmem:[#allocation2 + $0x119] sm:$0xff] %vm359, 0.0
      %699 = vst.msk [vmem:[#allocation2 + $0x121] sm:$0x1] %vm695, 0.0
      %700 = vst.msk [vmem:[#allocation2 + $0x11] sm:$0xff] %vm359, %v661
      %701 = vst.msk [vmem:[#allocation2 + $0x19] sm:$0xff] %vm359, %v662
      %702 = vst.msk [vmem:[#allocation2 + $0x21] sm:$0xff] %vm359, %v663
      %703 = vst.msk [vmem:[#allocation2 + $0x29] sm:$0xff] %vm359, %v664
      %704 = vst.msk [vmem:[#allocation2 + $0x31] sm:$0xff] %vm359, %v665
      %705 = vst.msk [vmem:[#allocation2 + $0x39] sm:$0xff] %vm359, %v666
      %706 = vst.msk [vmem:[#allocation2 + $0x41] sm:$0xff] %vm359, %v667
      %707 = vst.msk [vmem:[#allocation2 + $0x49] sm:$0xff] %vm359, %v668
      %708 = vst.msk [vmem:[#allocation2 + $0x51] sm:$0xff] %vm359, %v669
      %709 = vst.msk [vmem:[#allocation2 + $0x59] sm:$0xff] %vm359, %v670
      %710 = vst.msk [vmem:[#allocation2 + $0x61] sm:$0xff] %vm359, %v671
      %711 = vst.msk [vmem:[#allocation2 + $0x69] sm:$0xff] %vm359, %v672
      %712 = vst.msk [vmem:[#allocation2 + $0x71] sm:$0xff] %vm359, %v673
      %713 = vst.msk [vmem:[#allocation2 + $0x79] sm:$0xff] %vm359, %v674
      %714 = vst.msk [vmem:[#allocation2 + $0x81] sm:$0xff] %vm359, %v675
      %715 = vst.msk [vmem:[#allocation2 + $0x89] sm:$0xff] %vm359, %v676
      %716 = vst.msk [vmem:[#allocation2 + $0x91] sm:$0xff] %vm359, %v677
      %717 = vst.msk [vmem:[#allocation2 + $0x99] sm:$0xff] %vm359, %v678
      %718 = vst.msk [vmem:[#allocation2 + $0xa1] sm:$0xff] %vm359, %v679
      %719 = vst.msk [vmem:[#allocation2 + $0xa9] sm:$0xff] %vm359, %v680
      %720 = vst.msk [vmem:[#allocation2 + $0xb1] sm:$0xff] %vm359, %v681
      %721 = vst.msk [vmem:[#allocation2 + $0xb9] sm:$0xff] %vm359, %v682
      %722 = vst.msk [vmem:[#allocation2 + $0xc1] sm:$0xff] %vm359, %v683
      %723 = vst.msk [vmem:[#allocation2 + $0xc9] sm:$0xff] %vm359, %v684
      %724 = vst.msk [vmem:[#allocation2 + $0xd1] sm:$0xff] %vm359, %v685
      %725 = vst.msk [vmem:[#allocation2 + $0xd9] sm:$0xff] %vm359, %v686
      %726 = vst.msk [vmem:[#allocation2 + $0xe1] sm:$0xff] %vm359, %v687
      %727 = vst.msk [vmem:[#allocation2 + $0xe9] sm:$0xff] %vm359, %v688
      %728 = vst.msk [vmem:[#allocation2 + $0xf1] sm:$0xff] %vm359, %v689
      %729 = vst.msk [vmem:[#allocation2 + $0xf9] sm:$0xff] %vm359, %v690
      %730 = vst.msk [vmem:[#allocation2 + $0x101] sm:$0xff] %vm359, %v691
      %731 = vst.msk [vmem:[#allocation2 + $0x109] sm:$0xff] %vm359, %v692
      %v732 = vld [vmem:[%s4] sm:$0xff]
      %v733 = vld [vmem:[%s4 + $0x8] sm:$0x1]
      %v734 = vlaneseq
      %v735 = vshrl.u32 %v734, 7
      %v736 = vadd.s32 %v735, 8
      %v737 = vadd.s32 %v735, 16
      %v738 = vadd.s32 %v735, 24
      %v739 = vadd.s32 %v735, 32
      %v740 = vadd.s32 %v735, 40
      %v741 = vadd.s32 %v735, 48
      %v742 = vadd.s32 %v735, 56
      %v743 = vadd.s32 %v735, 64
      %v744 = vadd.s32 %v735, 72
      %v745 = vadd.s32 %v735, 80
      %v746 = vadd.s32 %v735, 88
      %v747 = vadd.s32 %v735, 96
      %v748 = vadd.s32 %v735, 104
      %v749 = vadd.s32 %v735, 112
      %v750 = vadd.s32 %v735, 120
      %v751 = vadd.s32 %v735, 128
      %v752 = vadd.s32 %v735, 136
      %v753 = vadd.s32 %v735, 144
      %v754 = vadd.s32 %v735, 152
      %v755 = vadd.s32 %v735, 160
      %v756 = vadd.s32 %v735, 168
      %v757 = vadd.s32 %v735, 176
      %v758 = vadd.s32 %v735, 184
      %v759 = vadd.s32 %v735, 192
      %v760 = vadd.s32 %v735, 200
      %v761 = vadd.s32 %v735, 208
      %v762 = vadd.s32 %v735, 216
      %v763 = vadd.s32 %v735, 224
      %v764 = vadd.s32 %v735, 232
      %v765 = vadd.s32 %v735, 240
      %v766 = vadd.s32 %v735, 248
      %vm767 = vcmp.lt.s32.totalorder %v735, 0
      %v768 = vsub.s32 0, %v735
      %v769 = vsel %vm767, %v768, %v735
      %v770 = vshrl.u32 %v769, 4
      %v771 = vand.u32 %v769, 15
      %v772 = vsub.s32 0, %v771
      %v773 = vsel %vm767, %v772, %v771
      %vm774 = vcmp.lt.s32.totalorder %v736, 0
      %v775 = vsub.s32 0, %v736
      %v776 = vsel %vm774, %v775, %v736
      %v777 = vshrl.u32 %v776, 4
      %v778 = vand.u32 %v776, 15
      %v779 = vsub.s32 0, %v778
      %v780 = vsel %vm774, %v779, %v778
      %vm781 = vcmp.lt.s32.totalorder %v737, 0
      %v782 = vsub.s32 0, %v737
      %v783 = vsel %vm781, %v782, %v737
      %v784 = vshrl.u32 %v783, 4
      %v785 = vand.u32 %v783, 15
      %v786 = vsub.s32 0, %v785
      %v787 = vsel %vm781, %v786, %v785
      %vm788 = vcmp.lt.s32.totalorder %v738, 0
      %v789 = vsub.s32 0, %v738
      %v790 = vsel %vm788, %v789, %v738
      %v791 = vshrl.u32 %v790, 4
      %v792 = vand.u32 %v790, 15
      %v793 = vsub.s32 0, %v792
      %v794 = vsel %vm788, %v793, %v792
      %vm795 = vcmp.lt.s32.totalorder %v739, 0
      %v796 = vsub.s32 0, %v739
      %v797 = vsel %vm795, %v796, %v739
      %v798 = vshrl.u32 %v797, 4
      %v799 = vand.u32 %v797, 15
      %v800 = vsub.s32 0, %v799
      %v801 = vsel %vm795, %v800, %v799
      %vm802 = vcmp.lt.s32.totalorder %v740, 0
      %v803 = vsub.s32 0, %v740
      %v804 = vsel %vm802, %v803, %v740
      %v805 = vshrl.u32 %v804, 4
      %v806 = vand.u32 %v804, 15
      %v807 = vsub.s32 0, %v806
      %v808 = vsel %vm802, %v807, %v806
      %vm809 = vcmp.lt.s32.totalorder %v741, 0
      %v810 = vsub.s32 0, %v741
      %v811 = vsel %vm809, %v810, %v741
      %v812 = vshrl.u32 %v811, 4
      %v813 = vand.u32 %v811, 15
      %v814 = vsub.s32 0, %v813
      %v815 = vsel %vm809, %v814, %v813
      %vm816 = vcmp.lt.s32.totalorder %v742, 0
      %v817 = vsub.s32 0, %v742
      %v818 = vsel %vm816, %v817, %v742
      %v819 = vshrl.u32 %v818, 4
      %v820 = vand.u32 %v818, 15
      %v821 = vsub.s32 0, %v820
      %v822 = vsel %vm816, %v821, %v820
      %vm823 = vcmp.lt.s32.totalorder %v743, 0
      %v824 = vsub.s32 0, %v743
      %v825 = vsel %vm823, %v824, %v743
      %v826 = vshrl.u32 %v825, 4
      %v827 = vand.u32 %v825, 15
      %v828 = vsub.s32 0, %v827
      %v829 = vsel %vm823, %v828, %v827
      %vm830 = vcmp.lt.s32.totalorder %v744, 0
      %v831 = vsub.s32 0, %v744
      %v832 = vsel %vm830, %v831, %v744
      %v833 = vshrl.u32 %v832, 4
      %v834 = vand.u32 %v832, 15
      %v835 = vsub.s32 0, %v834
      %v836 = vsel %vm830, %v835, %v834
      %vm837 = vcmp.lt.s32.totalorder %v745, 0
      %v838 = vsub.s32 0, %v745
      %v839 = vsel %vm837, %v838, %v745
      %v840 = vshrl.u32 %v839, 4
      %v841 = vand.u32 %v839, 15
      %v842 = vsub.s32 0, %v841
      %v843 = vsel %vm837, %v842, %v841
      %vm844 = vcmp.lt.s32.totalorder %v746, 0
      %v845 = vsub.s32 0, %v746
      %v846 = vsel %vm844, %v845, %v746
      %v847 = vshrl.u32 %v846, 4
      %v848 = vand.u32 %v846, 15
      %v849 = vsub.s32 0, %v848
      %v850 = vsel %vm844, %v849, %v848
      %vm851 = vcmp.lt.s32.totalorder %v747, 0
      %v852 = vsub.s32 0, %v747
      %v853 = vsel %vm851, %v852, %v747
      %v854 = vshrl.u32 %v853, 4
      %v855 = vand.u32 %v853, 15
      %v856 = vsub.s32 0, %v855
      %v857 = vsel %vm851, %v856, %v855
      %vm858 = vcmp.lt.s32.totalorder %v748, 0
      %v859 = vsub.s32 0, %v748
      %v860 = vsel %vm858, %v859, %v748
      %v861 = vshrl.u32 %v860, 4
      %v862 = vand.u32 %v860, 15
      %v863 = vsub.s32 0, %v862
      %v864 = vsel %vm858, %v863, %v862
      %vm865 = vcmp.lt.s32.totalorder %v749, 0
      %v866 = vsub.s32 0, %v749
      %v867 = vsel %vm865, %v866, %v749
      %v868 = vshrl.u32 %v867, 4
      %v869 = vand.u32 %v867, 15
      %v870 = vsub.s32 0, %v869
      %v871 = vsel %vm865, %v870, %v869
      %vm872 = vcmp.lt.s32.totalorder %v750, 0
      %v873 = vsub.s32 0, %v750
      %v874 = vsel %vm872, %v873, %v750
      %v875 = vshrl.u32 %v874, 4
      %v876 = vand.u32 %v874, 15
      %v877 = vsub.s32 0, %v876
      %v878 = vsel %vm872, %v877, %v876
      %vm879 = vcmp.lt.s32.totalorder %v751, 0
      %v880 = vsub.s32 0, %v751
      %v881 = vsel %vm879, %v880, %v751
      %v882 = vshrl.u32 %v881, 4
      %v883 = vand.u32 %v881, 15
      %v884 = vsub.s32 0, %v883
      %v885 = vsel %vm879, %v884, %v883
      %vm886 = vcmp.lt.s32.totalorder %v752, 0
      %v887 = vsub.s32 0, %v752
      %v888 = vsel %vm886, %v887, %v752
      %v889 = vshrl.u32 %v888, 4
      %v890 = vand.u32 %v888, 15
      %v891 = vsub.s32 0, %v890
      %v892 = vsel %vm886, %v891, %v890
      %vm893 = vcmp.lt.s32.totalorder %v753, 0
      %v894 = vsub.s32 0, %v753
      %v895 = vsel %vm893, %v894, %v753
      %v896 = vshrl.u32 %v895, 4
      %v897 = vand.u32 %v895, 15
      %v898 = vsub.s32 0, %v897
      %v899 = vsel %vm893, %v898, %v897
      %vm900 = vcmp.lt.s32.totalorder %v754, 0
      %v901 = vsub.s32 0, %v754
      %v902 = vsel %vm900, %v901, %v754
      %v903 = vshrl.u32 %v902, 4
      %v904 = vand.u32 %v902, 15
      %v905 = vsub.s32 0, %v904
      %v906 = vsel %vm900, %v905, %v904
      %vm907 = vcmp.lt.s32.totalorder %v755, 0
      %v908 = vsub.s32 0, %v755
      %v909 = vsel %vm907, %v908, %v755
      %v910 = vshrl.u32 %v909, 4
      %v911 = vand.u32 %v909, 15
      %v912 = vsub.s32 0, %v911
      %v913 = vsel %vm907, %v912, %v911
      %vm914 = vcmp.lt.s32.totalorder %v756, 0
      %v915 = vsub.s32 0, %v756
      %v916 = vsel %vm914, %v915, %v756
      %v917 = vshrl.u32 %v916, 4
      %v918 = vand.u32 %v916, 15
      %v919 = vsub.s32 0, %v918
      %v920 = vsel %vm914, %v919, %v918
      %vm921 = vcmp.lt.s32.totalorder %v757, 0
      %v922 = vsub.s32 0, %v757
      %v923 = vsel %vm921, %v922, %v757
      %v924 = vshrl.u32 %v923, 4
      %v925 = vand.u32 %v923, 15
      %v926 = vsub.s32 0, %v925
      %v927 = vsel %vm921, %v926, %v925
      %vm928 = vcmp.lt.s32.totalorder %v758, 0
      %v929 = vsub.s32 0, %v758
      %v930 = vsel %vm928, %v929, %v758
      %v931 = vshrl.u32 %v930, 4
      %v932 = vand.u32 %v930, 15
      %v933 = vsub.s32 0, %v932
      %v934 = vsel %vm928, %v933, %v932
      %vm935 = vcmp.lt.s32.totalorder %v759, 0
      %v936 = vsub.s32 0, %v759
      %v937 = vsel %vm935, %v936, %v759
      %v938 = vshrl.u32 %v937, 4
      %v939 = vand.u32 %v937, 15
      %v940 = vsub.s32 0, %v939
      %v941 = vsel %vm935, %v940, %v939
      %vm942 = vcmp.lt.s32.totalorder %v760, 0
      %v943 = vsub.s32 0, %v760
      %v944 = vsel %vm942, %v943, %v760
      %v945 = vshrl.u32 %v944, 4
      %v946 = vand.u32 %v944, 15
      %v947 = vsub.s32 0, %v946
      %v948 = vsel %vm942, %v947, %v946
      %vm949 = vcmp.lt.s32.totalorder %v761, 0
      %v950 = vsub.s32 0, %v761
      %v951 = vsel %vm949, %v950, %v761
      %v952 = vshrl.u32 %v951, 4
      %v953 = vand.u32 %v951, 15
      %v954 = vsub.s32 0, %v953
      %v955 = vsel %vm949, %v954, %v953
      %vm956 = vcmp.lt.s32.totalorder %v762, 0
      %v957 = vsub.s32 0, %v762
      %v958 = vsel %vm956, %v957, %v762
      %v959 = vshrl.u32 %v958, 4
      %v960 = vand.u32 %v958, 15
      %v961 = vsub.s32 0, %v960
      %v962 = vsel %vm956, %v961, %v960
      %vm963 = vcmp.lt.s32.totalorder %v763, 0
      %v964 = vsub.s32 0, %v763
      %v965 = vsel %vm963, %v964, %v763
      %v966 = vshrl.u32 %v965, 4
      %v967 = vand.u32 %v965, 15
      %v968 = vsub.s32 0, %v967
      %v969 = vsel %vm963, %v968, %v967
      %vm970 = vcmp.lt.s32.totalorder %v764, 0
      %v971 = vsub.s32 0, %v764
      %v972 = vsel %vm970, %v971, %v764
      %v973 = vshrl.u32 %v972, 4
      %v974 = vand.u32 %v972, 15
      %v975 = vsub.s32 0, %v974
      %v976 = vsel %vm970, %v975, %v974
      %vm977 = vcmp.lt.s32.totalorder %v765, 0
      %v978 = vsub.s32 0, %v765
      %v979 = vsel %vm977, %v978, %v765
      %v980 = vshrl.u32 %v979, 4
      %v981 = vand.u32 %v979, 15
      %v982 = vsub.s32 0, %v981
      %v983 = vsel %vm977, %v982, %v981
      %vm984 = vcmp.lt.s32.totalorder %v766, 0
      %v985 = vsub.s32 0, %v766
      %v986 = vsel %vm984, %v985, %v766
      %v987 = vshrl.u32 %v986, 4
      %v988 = vand.u32 %v986, 15
      %v989 = vsub.s32 0, %v988
      %v990 = vsel %vm984, %v989, %v988
      %vm991 = vcmp.ne.s32.totalorder %v773, 0
      %vm992 = vcmp.ne.s32.totalorder %v780, 0
      %vm993 = vcmp.ne.s32.totalorder %v787, 0
      %vm994 = vcmp.ne.s32.totalorder %v794, 0
      %vm995 = vcmp.ne.s32.totalorder %v801, 0
      %vm996 = vcmp.ne.s32.totalorder %v808, 0
      %vm997 = vcmp.ne.s32.totalorder %v815, 0
      %vm998 = vcmp.ne.s32.totalorder %v822, 0
      %vm999 = vcmp.ne.s32.totalorder %v829, 0
      %vm1000 = vcmp.ne.s32.totalorder %v836, 0
      %vm1001 = vcmp.ne.s32.totalorder %v843, 0
      %vm1002 = vcmp.ne.s32.totalorder %v850, 0
      %vm1003 = vcmp.ne.s32.totalorder %v857, 0
      %vm1004 = vcmp.ne.s32.totalorder %v864, 0
      %vm1005 = vcmp.ne.s32.totalorder %v871, 0
      %vm1006 = vcmp.ne.s32.totalorder %v878, 0
      %vm1007 = vcmp.ne.s32.totalorder %v885, 0
      %vm1008 = vcmp.ne.s32.totalorder %v892, 0
      %vm1009 = vcmp.ne.s32.totalorder %v899, 0
      %vm1010 = vcmp.ne.s32.totalorder %v906, 0
      %vm1011 = vcmp.ne.s32.totalorder %v913, 0
      %vm1012 = vcmp.ne.s32.totalorder %v920, 0
      %vm1013 = vcmp.ne.s32.totalorder %v927, 0
      %vm1014 = vcmp.ne.s32.totalorder %v934, 0
      %vm1015 = vcmp.ne.s32.totalorder %v941, 0
      %vm1016 = vcmp.ne.s32.totalorder %v948, 0
      %vm1017 = vcmp.ne.s32.totalorder %v955, 0
      %vm1018 = vcmp.ne.s32.totalorder %v962, 0
      %vm1019 = vcmp.ne.s32.totalorder %v969, 0
      %vm1020 = vcmp.ne.s32.totalorder %v976, 0
      %vm1021 = vcmp.ne.s32.totalorder %v983, 0
      %vm1022 = vcmp.ne.s32.totalorder %v990, 0
      %vm1023 = vcmp.lt.s32.totalorder %v773, 0
      %vm1024 = vcmp.lt.s32.totalorder %v780, 0
      %vm1025 = vcmp.lt.s32.totalorder %v787, 0
      %vm1026 = vcmp.lt.s32.totalorder %v794, 0
      %vm1027 = vcmp.lt.s32.totalorder %v801, 0
      %vm1028 = vcmp.lt.s32.totalorder %v808, 0
      %vm1029 = vcmp.lt.s32.totalorder %v815, 0
      %vm1030 = vcmp.lt.s32.totalorder %v822, 0
      %vm1031 = vcmp.lt.s32.totalorder %v829, 0
      %vm1032 = vcmp.lt.s32.totalorder %v836, 0
      %vm1033 = vcmp.lt.s32.totalorder %v843, 0
      %vm1034 = vcmp.lt.s32.totalorder %v850, 0
      %vm1035 = vcmp.lt.s32.totalorder %v857, 0
      %vm1036 = vcmp.lt.s32.totalorder %v864, 0
      %vm1037 = vcmp.lt.s32.totalorder %v871, 0
      %vm1038 = vcmp.lt.s32.totalorder %v878, 0
      %vm1039 = vcmp.lt.s32.totalorder %v885, 0
      %vm1040 = vcmp.lt.s32.totalorder %v892, 0
      %vm1041 = vcmp.lt.s32.totalorder %v899, 0
      %vm1042 = vcmp.lt.s32.totalorder %v906, 0
      %vm1043 = vcmp.lt.s32.totalorder %v913, 0
      %vm1044 = vcmp.lt.s32.totalorder %v920, 0
      %vm1045 = vcmp.lt.s32.totalorder %v927, 0
      %vm1046 = vcmp.lt.s32.totalorder %v934, 0
      %vm1047 = vcmp.lt.s32.totalorder %v941, 0
      %vm1048 = vcmp.lt.s32.totalorder %v948, 0
      %vm1049 = vcmp.lt.s32.totalorder %v955, 0
      %vm1050 = vcmp.lt.s32.totalorder %v962, 0
      %vm1051 = vcmp.lt.s32.totalorder %v969, 0
      %vm1052 = vcmp.lt.s32.totalorder %v976, 0
      %vm1053 = vcmp.lt.s32.totalorder %v983, 0
      %vm1054 = vcmp.lt.s32.totalorder %v990, 0
      %vm1055 = vmand %vm1023, %vm991
      %vm1056 = vmand %vm1024, %vm992
      %vm1057 = vmand %vm1025, %vm993
      %vm1058 = vmand %vm1026, %vm994
      %vm1059 = vmand %vm1027, %vm995
      %vm1060 = vmand %vm1028, %vm996
      %vm1061 = vmand %vm1029, %vm997
      %vm1062 = vmand %vm1030, %vm998
      %vm1063 = vmand %vm1031, %vm999
      %vm1064 = vmand %vm1032, %vm1000
      %vm1065 = vmand %vm1033, %vm1001
      %vm1066 = vmand %vm1034, %vm1002
      %vm1067 = vmand %vm1035, %vm1003
      %vm1068 = vmand %vm1036, %vm1004
      %vm1069 = vmand %vm1037, %vm1005
      %vm1070 = vmand %vm1038, %vm1006
      %vm1071 = vmand %vm1039, %vm1007
      %vm1072 = vmand %vm1040, %vm1008
      %vm1073 = vmand %vm1041, %vm1009
      %vm1074 = vmand %vm1042, %vm1010
      %vm1075 = vmand %vm1043, %vm1011
      %vm1076 = vmand %vm1044, %vm1012
      %vm1077 = vmand %vm1045, %vm1013
      %vm1078 = vmand %vm1046, %vm1014
      %vm1079 = vmand %vm1047, %vm1015
      %vm1080 = vmand %vm1048, %vm1016
      %vm1081 = vmand %vm1049, %vm1017
      %vm1082 = vmand %vm1050, %vm1018
      %vm1083 = vmand %vm1051, %vm1019
      %vm1084 = vmand %vm1052, %vm1020
      %vm1085 = vmand %vm1053, %vm1021
      %vm1086 = vmand %vm1054, %vm1022
      %v1087 = vadd.s32 %v773, 16
      %v1088 = vadd.s32 %v780, 16
      %v1089 = vadd.s32 %v787, 16
      %v1090 = vadd.s32 %v794, 16
      %v1091 = vadd.s32 %v801, 16
      %v1092 = vadd.s32 %v808, 16
      %v1093 = vadd.s32 %v815, 16
      %v1094 = vadd.s32 %v822, 16
      %v1095 = vadd.s32 %v829, 16
      %v1096 = vadd.s32 %v836, 16
      %v1097 = vadd.s32 %v843, 16
      %v1098 = vadd.s32 %v850, 16
      %v1099 = vadd.s32 %v857, 16
      %v1100 = vadd.s32 %v864, 16
      %v1101 = vadd.s32 %v871, 16
      %v1102 = vadd.s32 %v878, 16
      %v1103 = vadd.s32 %v885, 16
      %v1104 = vadd.s32 %v892, 16
      %v1105 = vadd.s32 %v899, 16
      %v1106 = vadd.s32 %v906, 16
      %v1107 = vadd.s32 %v913, 16
      %v1108 = vadd.s32 %v920, 16
      %v1109 = vadd.s32 %v927, 16
      %v1110 = vadd.s32 %v934, 16
      %v1111 = vadd.s32 %v941, 16
      %v1112 = vadd.s32 %v948, 16
      %v1113 = vadd.s32 %v955, 16
      %v1114 = vadd.s32 %v962, 16
      %v1115 = vadd.s32 %v969, 16
      %v1116 = vadd.s32 %v976, 16
      %v1117 = vadd.s32 %v983, 16
      %v1118 = vadd.s32 %v990, 16
      %v1119 = vsel %vm1055, %v1087, %v773
      %v1120 = vsel %vm1056, %v1088, %v780
      %v1121 = vsel %vm1057, %v1089, %v787
      %v1122 = vsel %vm1058, %v1090, %v794
      %v1123 = vsel %vm1059, %v1091, %v801
      %v1124 = vsel %vm1060, %v1092, %v808
      %v1125 = vsel %vm1061, %v1093, %v815
      %v1126 = vsel %vm1062, %v1094, %v822
      %v1127 = vsel %vm1063, %v1095, %v829
      %v1128 = vsel %vm1064, %v1096, %v836
      %v1129 = vsel %vm1065, %v1097, %v843
      %v1130 = vsel %vm1066, %v1098, %v850
      %v1131 = vsel %vm1067, %v1099, %v857
      %v1132 = vsel %vm1068, %v1100, %v864
      %v1133 = vsel %vm1069, %v1101, %v871
      %v1134 = vsel %vm1070, %v1102, %v878
      %v1135 = vsel %vm1071, %v1103, %v885
      %v1136 = vsel %vm1072, %v1104, %v892
      %v1137 = vsel %vm1073, %v1105, %v899
      %v1138 = vsel %vm1074, %v1106, %v906
      %v1139 = vsel %vm1075, %v1107, %v913
      %v1140 = vsel %vm1076, %v1108, %v920
      %v1141 = vsel %vm1077, %v1109, %v927
      %v1142 = vsel %vm1078, %v1110, %v934
      %v1143 = vsel %vm1079, %v1111, %v941
      %v1144 = vsel %vm1080, %v1112, %v948
      %v1145 = vsel %vm1081, %v1113, %v955
      %v1146 = vsel %vm1082, %v1114, %v962
      %v1147 = vsel %vm1083, %v1115, %v969
      %v1148 = vsel %vm1084, %v1116, %v976
      %v1149 = vsel %vm1085, %v1117, %v983
      %v1150 = vsel %vm1086, %v1118, %v990
      %v1151 = vadd.s32 %v1119, 4294967295
      %v1152 = vadd.s32 %v1120, 4294967295
      %v1153 = vadd.s32 %v1121, 4294967295
      %v1154 = vadd.s32 %v1122, 4294967295
      %v1155 = vadd.s32 %v1123, 4294967295
      %v1156 = vadd.s32 %v1124, 4294967295
      %v1157 = vadd.s32 %v1125, 4294967295
      %v1158 = vadd.s32 %v1126, 4294967295
      %v1159 = vadd.s32 %v1127, 4294967295
      %v1160 = vadd.s32 %v1128, 4294967295
      %v1161 = vadd.s32 %v1129, 4294967295
      %v1162 = vadd.s32 %v1130, 4294967295
      %v1163 = vadd.s32 %v1131, 4294967295
      %v1164 = vadd.s32 %v1132, 4294967295
      %v1165 = vadd.s32 %v1133, 4294967295
      %v1166 = vadd.s32 %v1134, 4294967295
      %v1167 = vadd.s32 %v1135, 4294967295
      %v1168 = vadd.s32 %v1136, 4294967295
      %v1169 = vadd.s32 %v1137, 4294967295
      %v1170 = vadd.s32 %v1138, 4294967295
      %v1171 = vadd.s32 %v1139, 4294967295
      %v1172 = vadd.s32 %v1140, 4294967295
      %v1173 = vadd.s32 %v1141, 4294967295
      %v1174 = vadd.s32 %v1142, 4294967295
      %v1175 = vadd.s32 %v1143, 4294967295
      %v1176 = vadd.s32 %v1144, 4294967295
      %v1177 = vadd.s32 %v1145, 4294967295
      %v1178 = vadd.s32 %v1146, 4294967295
      %v1179 = vadd.s32 %v1147, 4294967295
      %v1180 = vadd.s32 %v1148, 4294967295
      %v1181 = vadd.s32 %v1149, 4294967295
      %v1182 = vadd.s32 %v1150, 4294967295
      %vm1183 = vcmp.ge.s32.totalorder %v1151, 0
      %vm1184 = vcmp.ge.s32.totalorder %v1152, 0
      %vm1185 = vcmp.ge.s32.totalorder %v1153, 0
      %vm1186 = vcmp.ge.s32.totalorder %v1154, 0
      %vm1187 = vcmp.ge.s32.totalorder %v1155, 0
      %vm1188 = vcmp.ge.s32.totalorder %v1156, 0
      %vm1189 = vcmp.ge.s32.totalorder %v1157, 0
      %vm1190 = vcmp.ge.s32.totalorder %v1158, 0
      %vm1191 = vcmp.ge.s32.totalorder %v1159, 0
      %vm1192 = vcmp.ge.s32.totalorder %v1160, 0
      %vm1193 = vcmp.ge.s32.totalorder %v1161, 0
      %vm1194 = vcmp.ge.s32.totalorder %v1162, 0
      %vm1195 = vcmp.ge.s32.totalorder %v1163, 0
      %vm1196 = vcmp.ge.s32.totalorder %v1164, 0
      %vm1197 = vcmp.ge.s32.totalorder %v1165, 0
      %vm1198 = vcmp.ge.s32.totalorder %v1166, 0
      %vm1199 = vcmp.ge.s32.totalorder %v1167, 0
      %vm1200 = vcmp.ge.s32.totalorder %v1168, 0
      %vm1201 = vcmp.ge.s32.totalorder %v1169, 0
      %vm1202 = vcmp.ge.s32.totalorder %v1170, 0
      %vm1203 = vcmp.ge.s32.totalorder %v1171, 0
      %vm1204 = vcmp.ge.s32.totalorder %v1172, 0
      %vm1205 = vcmp.ge.s32.totalorder %v1173, 0
      %vm1206 = vcmp.ge.s32.totalorder %v1174, 0
      %vm1207 = vcmp.ge.s32.totalorder %v1175, 0
      %vm1208 = vcmp.ge.s32.totalorder %v1176, 0
      %vm1209 = vcmp.ge.s32.totalorder %v1177, 0
      %vm1210 = vcmp.ge.s32.totalorder %v1178, 0
      %vm1211 = vcmp.ge.s32.totalorder %v1179, 0
      %vm1212 = vcmp.ge.s32.totalorder %v1180, 0
      %vm1213 = vcmp.ge.s32.totalorder %v1181, 0
      %vm1214 = vcmp.ge.s32.totalorder %v1182, 0
      %vm1215 = vcmp.lt.s32.totalorder %v1151, 16
      %vm1216 = vcmp.lt.s32.totalorder %v1152, 16
      %vm1217 = vcmp.lt.s32.totalorder %v1153, 16
      %vm1218 = vcmp.lt.s32.totalorder %v1154, 16
      %vm1219 = vcmp.lt.s32.totalorder %v1155, 16
      %vm1220 = vcmp.lt.s32.totalorder %v1156, 16
      %vm1221 = vcmp.lt.s32.totalorder %v1157, 16
      %vm1222 = vcmp.lt.s32.totalorder %v1158, 16
      %vm1223 = vcmp.lt.s32.totalorder %v1159, 16
      %vm1224 = vcmp.lt.s32.totalorder %v1160, 16
      %vm1225 = vcmp.lt.s32.totalorder %v1161, 16
      %vm1226 = vcmp.lt.s32.totalorder %v1162, 16
      %vm1227 = vcmp.lt.s32.totalorder %v1163, 16
      %vm1228 = vcmp.lt.s32.totalorder %v1164, 16
      %vm1229 = vcmp.lt.s32.totalorder %v1165, 16
      %vm1230 = vcmp.lt.s32.totalorder %v1166, 16
      %vm1231 = vcmp.lt.s32.totalorder %v1167, 16
      %vm1232 = vcmp.lt.s32.totalorder %v1168, 16
      %vm1233 = vcmp.lt.s32.totalorder %v1169, 16
      %vm1234 = vcmp.lt.s32.totalorder %v1170, 16
      %vm1235 = vcmp.lt.s32.totalorder %v1171, 16
      %vm1236 = vcmp.lt.s32.totalorder %v1172, 16
      %vm1237 = vcmp.lt.s32.totalorder %v1173, 16
      %vm1238 = vcmp.lt.s32.totalorder %v1174, 16
      %vm1239 = vcmp.lt.s32.totalorder %v1175, 16
      %vm1240 = vcmp.lt.s32.totalorder %v1176, 16
      %vm1241 = vcmp.lt.s32.totalorder %v1177, 16
      %vm1242 = vcmp.lt.s32.totalorder %v1178, 16
      %vm1243 = vcmp.lt.s32.totalorder %v1179, 16
      %vm1244 = vcmp.lt.s32.totalorder %v1180, 16
      %vm1245 = vcmp.lt.s32.totalorder %v1181, 16
      %vm1246 = vcmp.lt.s32.totalorder %v1182, 16
      %vm1247 = vmand %vm1183, %vm1215
      %vm1248 = vmand %vm1184, %vm1216
      %vm1249 = vmand %vm1185, %vm1217
      %vm1250 = vmand %vm1186, %vm1218
      %vm1251 = vmand %vm1187, %vm1219
      %vm1252 = vmand %vm1188, %vm1220
      %vm1253 = vmand %vm1189, %vm1221
      %vm1254 = vmand %vm1190, %vm1222
      %vm1255 = vmand %vm1191, %vm1223
      %vm1256 = vmand %vm1192, %vm1224
      %vm1257 = vmand %vm1193, %vm1225
      %vm1258 = vmand %vm1194, %vm1226
      %vm1259 = vmand %vm1195, %vm1227
      %vm1260 = vmand %vm1196, %vm1228
      %vm1261 = vmand %vm1197, %vm1229
      %vm1262 = vmand %vm1198, %vm1230
      %vm1263 = vmand %vm1199, %vm1231
      %vm1264 = vmand %vm1200, %vm1232
      %vm1265 = vmand %vm1201, %vm1233
      %vm1266 = vmand %vm1202, %vm1234
      %vm1267 = vmand %vm1203, %vm1235
      %vm1268 = vmand %vm1204, %vm1236
      %vm1269 = vmand %vm1205, %vm1237
      %vm1270 = vmand %vm1206, %vm1238
      %vm1271 = vmand %vm1207, %vm1239
      %vm1272 = vmand %vm1208, %vm1240
      %vm1273 = vmand %vm1209, %vm1241
      %vm1274 = vmand %vm1210, %vm1242
      %vm1275 = vmand %vm1211, %vm1243
      %vm1276 = vmand %vm1212, %vm1244
      %vm1277 = vmand %vm1213, %vm1245
      %vm1278 = vmand %vm1214, %vm1246
      %v1279 = vld [vmem:[#allocation2] sm:$0xff]
      %v1280 = vld [vmem:[#allocation2 + $0x8] sm:$0xff]
      %v1281 = vld [vmem:[#allocation2 + $0x10] sm:$0xff]
      %v1282 = vld [vmem:[#allocation2 + $0x18] sm:$0xff]
      %v1283 = vld [vmem:[#allocation2 + $0x20] sm:$0xff]
      %v1284 = vld [vmem:[#allocation2 + $0x28] sm:$0xff]
      %v1285 = vld [vmem:[#allocation2 + $0x30] sm:$0xff]
      %v1286 = vld [vmem:[#allocation2 + $0x38] sm:$0xff]
      %v1287 = vld [vmem:[#allocation2 + $0x40] sm:$0xff]
      %v1288 = vld [vmem:[#allocation2 + $0x48] sm:$0xff]
      %v1289 = vld [vmem:[#allocation2 + $0x50] sm:$0xff]
      %v1290 = vld [vmem:[#allocation2 + $0x58] sm:$0xff]
      %v1291 = vld [vmem:[#allocation2 + $0x60] sm:$0xff]
      %v1292 = vld [vmem:[#allocation2 + $0x68] sm:$0xff]
      %v1293 = vld [vmem:[#allocation2 + $0x70] sm:$0xff]
      %v1294 = vld [vmem:[#allocation2 + $0x78] sm:$0xff]
      %v1295 = vld [vmem:[#allocation2 + $0x80] sm:$0xff]
      %v1296 = vld [vmem:[#allocation2 + $0x88] sm:$0xff]
      %v1297 = vld [vmem:[#allocation2 + $0x90] sm:$0xff]
      %v1298 = vld [vmem:[#allocation2 + $0x98] sm:$0xff]
      %v1299 = vld [vmem:[#allocation2 + $0xa0] sm:$0xff]
      %v1300 = vld [vmem:[#allocation2 + $0xa8] sm:$0xff]
      %v1301 = vld [vmem:[#allocation2 + $0xb0] sm:$0xff]
      %v1302 = vld [vmem:[#allocation2 + $0xb8] sm:$0xff]
      %v1303 = vld [vmem:[#allocation2 + $0xc0] sm:$0xff]
      %v1304 = vld [vmem:[#allocation2 + $0xc8] sm:$0xff]
      %v1305 = vld [vmem:[#allocation2 + $0xd0] sm:$0xff]
      %v1306 = vld [vmem:[#allocation2 + $0xd8] sm:$0xff]
      %v1307 = vld [vmem:[#allocation2 + $0xe0] sm:$0xff]
      %v1308 = vld [vmem:[#allocation2 + $0xe8] sm:$0xff]
      %v1309 = vld [vmem:[#allocation2 + $0xf0] sm:$0xff]
      %v1310 = vld [vmem:[#allocation2 + $0xf8] sm:$0xff]
      %v1311 = vlaneseq
      %v1312 = vshrl.u32 %v1311, 7
      %v1313 = vsub.s32 0, %v1312
      %v1314 = vrot.slane %v732, %v1313
      %v1315 = vmul.f32 %v1279, %v1314
      %v1316 = vmul.f32 %v1280, %v1314
      %v1317 = vmul.f32 %v1281, %v1314
      %v1318 = vmul.f32 %v1282, %v1314
      %v1319 = vmul.f32 %v1283, %v1314
      %v1320 = vmul.f32 %v1284, %v1314
      %v1321 = vmul.f32 %v1285, %v1314
      %v1322 = vmul.f32 %v1286, %v1314
      %v1323 = vmul.f32 %v1287, %v1314
      %v1324 = vmul.f32 %v1288, %v1314
      %v1325 = vmul.f32 %v1289, %v1314
      %v1326 = vmul.f32 %v1290, %v1314
      %v1327 = vmul.f32 %v1291, %v1314
      %v1328 = vmul.f32 %v1292, %v1314
      %v1329 = vmul.f32 %v1293, %v1314
      %v1330 = vmul.f32 %v1294, %v1314
      %v1331 = vmul.f32 %v1295, %v1314
      %v1332 = vmul.f32 %v1296, %v1314
      %v1333 = vmul.f32 %v1297, %v1314
      %v1334 = vmul.f32 %v1298, %v1314
      %v1335 = vmul.f32 %v1299, %v1314
      %v1336 = vmul.f32 %v1300, %v1314
      %v1337 = vmul.f32 %v1301, %v1314
      %v1338 = vmul.f32 %v1302, %v1314
      %v1339 = vmul.f32 %v1303, %v1314
      %v1340 = vmul.f32 %v1304, %v1314
      %v1341 = vmul.f32 %v1305, %v1314
      %v1342 = vmul.f32 %v1306, %v1314
      %v1343 = vmul.f32 %v1307, %v1314
      %v1344 = vmul.f32 %v1308, %v1314
      %v1345 = vmul.f32 %v1309, %v1314
      %v1346 = vmul.f32 %v1310, %v1314
      %v1347 = vsel %vm1247, 1, 0
      %v1348 = vsel %vm1248, 1, 0
      %v1349 = vsel %vm1249, 1, 0
      %v1350 = vsel %vm1250, 1, 0
      %v1351 = vsel %vm1251, 1, 0
      %v1352 = vsel %vm1252, 1, 0
      %v1353 = vsel %vm1253, 1, 0
      %v1354 = vsel %vm1254, 1, 0
      %v1355 = vsel %vm1255, 1, 0
      %v1356 = vsel %vm1256, 1, 0
      %v1357 = vsel %vm1257, 1, 0
      %v1358 = vsel %vm1258, 1, 0
      %v1359 = vsel %vm1259, 1, 0
      %v1360 = vsel %vm1260, 1, 0
      %v1361 = vsel %vm1261, 1, 0
      %v1362 = vsel %vm1262, 1, 0
      %v1363 = vsel %vm1263, 1, 0
      %v1364 = vsel %vm1264, 1, 0
      %v1365 = vsel %vm1265, 1, 0
      %v1366 = vsel %vm1266, 1, 0
      %v1367 = vsel %vm1267, 1, 0
      %v1368 = vsel %vm1268, 1, 0
      %v1369 = vsel %vm1269, 1, 0
      %v1370 = vsel %vm1270, 1, 0
      %v1371 = vsel %vm1271, 1, 0
      %v1372 = vsel %vm1272, 1, 0
      %v1373 = vsel %vm1273, 1, 0
      %v1374 = vsel %vm1274, 1, 0
      %v1375 = vsel %vm1275, 1, 0
      %v1376 = vsel %vm1276, 1, 0
      %v1377 = vsel %vm1277, 1, 0
      %v1378 = vsel %vm1278, 1, 0
      %vm1379 = vcmp.eq.s32.totalorder %v1347, 1
      %vm1380 = vcmp.eq.s32.totalorder %v1348, 1
      %vm1381 = vcmp.eq.s32.totalorder %v1349, 1
      %vm1382 = vcmp.eq.s32.totalorder %v1350, 1
      %vm1383 = vcmp.eq.s32.totalorder %v1351, 1
      %vm1384 = vcmp.eq.s32.totalorder %v1352, 1
      %vm1385 = vcmp.eq.s32.totalorder %v1353, 1
      %vm1386 = vcmp.eq.s32.totalorder %v1354, 1
      %vm1387 = vcmp.eq.s32.totalorder %v1355, 1
      %vm1388 = vcmp.eq.s32.totalorder %v1356, 1
      %vm1389 = vcmp.eq.s32.totalorder %v1357, 1
      %vm1390 = vcmp.eq.s32.totalorder %v1358, 1
      %vm1391 = vcmp.eq.s32.totalorder %v1359, 1
      %vm1392 = vcmp.eq.s32.totalorder %v1360, 1
      %vm1393 = vcmp.eq.s32.totalorder %v1361, 1
      %vm1394 = vcmp.eq.s32.totalorder %v1362, 1
      %vm1395 = vcmp.eq.s32.totalorder %v1363, 1
      %vm1396 = vcmp.eq.s32.totalorder %v1364, 1
      %vm1397 = vcmp.eq.s32.totalorder %v1365, 1
      %vm1398 = vcmp.eq.s32.totalorder %v1366, 1
      %vm1399 = vcmp.eq.s32.totalorder %v1367, 1
      %vm1400 = vcmp.eq.s32.totalorder %v1368, 1
      %vm1401 = vcmp.eq.s32.totalorder %v1369, 1
      %vm1402 = vcmp.eq.s32.totalorder %v1370, 1
      %vm1403 = vcmp.eq.s32.totalorder %v1371, 1
      %vm1404 = vcmp.eq.s32.totalorder %v1372, 1
      %vm1405 = vcmp.eq.s32.totalorder %v1373, 1
      %vm1406 = vcmp.eq.s32.totalorder %v1374, 1
      %vm1407 = vcmp.eq.s32.totalorder %v1375, 1
      %vm1408 = vcmp.eq.s32.totalorder %v1376, 1
      %vm1409 = vcmp.eq.s32.totalorder %v1377, 1
      %vm1410 = vcmp.eq.s32.totalorder %v1378, 1
      %v1411 = vsel %vm1379, %v1315, 0.0
      %v1412 = vsel %vm1380, %v1316, 0.0
      %v1413 = vsel %vm1381, %v1317, 0.0
      %v1414 = vsel %vm1382, %v1318, 0.0
      %v1415 = vsel %vm1383, %v1319, 0.0
      %v1416 = vsel %vm1384, %v1320, 0.0
      %v1417 = vsel %vm1385, %v1321, 0.0
      %v1418 = vsel %vm1386, %v1322, 0.0
      %v1419 = vsel %vm1387, %v1323, 0.0
      %v1420 = vsel %vm1388, %v1324, 0.0
      %v1421 = vsel %vm1389, %v1325, 0.0
      %v1422 = vsel %vm1390, %v1326, 0.0
      %v1423 = vsel %vm1391, %v1327, 0.0
      %v1424 = vsel %vm1392, %v1328, 0.0
      %v1425 = vsel %vm1393, %v1329, 0.0
      %v1426 = vsel %vm1394, %v1330, 0.0
      %v1427 = vsel %vm1395, %v1331, 0.0
      %v1428 = vsel %vm1396, %v1332, 0.0
      %v1429 = vsel %vm1397, %v1333, 0.0
      %v1430 = vsel %vm1398, %v1334, 0.0
      %v1431 = vsel %vm1399, %v1335, 0.0
      %v1432 = vsel %vm1400, %v1336, 0.0
      %v1433 = vsel %vm1401, %v1337, 0.0
      %v1434 = vsel %vm1402, %v1338, 0.0
      %v1435 = vsel %vm1403, %v1339, 0.0
      %v1436 = vsel %vm1404, %v1340, 0.0
      %v1437 = vsel %vm1405, %v1341, 0.0
      %v1438 = vsel %vm1406, %v1342, 0.0
      %v1439 = vsel %vm1407, %v1343, 0.0
      %v1440 = vsel %vm1408, %v1344, 0.0
      %v1441 = vsel %vm1409, %v1345, 0.0
      %v1442 = vsel %vm1410, %v1346, 0.0
      %v1443 = vadd.f32 %v1411, 0.0
      %v1444 = vadd.f32 %v1412, 0.0
      %v1445 = vadd.f32 %v1413, 0.0
      %v1446 = vadd.f32 %v1414, 0.0
      %v1447 = vadd.f32 %v1415, 0.0
      %v1448 = vadd.f32 %v1416, 0.0
      %v1449 = vadd.f32 %v1417, 0.0
      %v1450 = vadd.f32 %v1418, 0.0
      %v1451 = vadd.f32 %v1419, 0.0
      %v1452 = vadd.f32 %v1420, 0.0
      %v1453 = vadd.f32 %v1421, 0.0
      %v1454 = vadd.f32 %v1422, 0.0
      %v1455 = vadd.f32 %v1423, 0.0
      %v1456 = vadd.f32 %v1424, 0.0
      %v1457 = vadd.f32 %v1425, 0.0
      %v1458 = vadd.f32 %v1426, 0.0
      %v1459 = vadd.f32 %v1427, 0.0
      %v1460 = vadd.f32 %v1428, 0.0
      %v1461 = vadd.f32 %v1429, 0.0
      %v1462 = vadd.f32 %v1430, 0.0
      %v1463 = vadd.f32 %v1431, 0.0
      %v1464 = vadd.f32 %v1432, 0.0
      %v1465 = vadd.f32 %v1433, 0.0
      %v1466 = vadd.f32 %v1434, 0.0
      %v1467 = vadd.f32 %v1435, 0.0
      %v1468 = vadd.f32 %v1436, 0.0
      %v1469 = vadd.f32 %v1437, 0.0
      %v1470 = vadd.f32 %v1438, 0.0
      %v1471 = vadd.f32 %v1439, 0.0
      %v1472 = vadd.f32 %v1440, 0.0
      %v1473 = vadd.f32 %v1441, 0.0
      %v1474 = vadd.f32 %v1442, 0.0
      %v1475 = vld [vmem:[#allocation2 + $0x100] sm:$0xff]
      %v1476 = vld [vmem:[#allocation2 + $0x108] sm:$0xff]
      %v1477 = vlaneseq
      %v1478 = vshrl.u32 %v1477, 7
      %v1479 = vsub.s32 3, %v1478
      %v1480 = vrot.slane %v732, %v1479
      %v1481 = vmul.f32 %v1281, %v1480
      %v1482 = vmul.f32 %v1282, %v1480
      %v1483 = vmul.f32 %v1283, %v1480
      %v1484 = vmul.f32 %v1284, %v1480
      %v1485 = vmul.f32 %v1285, %v1480
      %v1486 = vmul.f32 %v1286, %v1480
      %v1487 = vmul.f32 %v1287, %v1480
      %v1488 = vmul.f32 %v1288, %v1480
      %v1489 = vmul.f32 %v1289, %v1480
      %v1490 = vmul.f32 %v1290, %v1480
      %v1491 = vmul.f32 %v1291, %v1480
      %v1492 = vmul.f32 %v1292, %v1480
      %v1493 = vmul.f32 %v1293, %v1480
      %v1494 = vmul.f32 %v1294, %v1480
      %v1495 = vmul.f32 %v1295, %v1480
      %v1496 = vmul.f32 %v1296, %v1480
      %v1497 = vmul.f32 %v1297, %v1480
      %v1498 = vmul.f32 %v1298, %v1480
      %v1499 = vmul.f32 %v1299, %v1480
      %v1500 = vmul.f32 %v1300, %v1480
      %v1501 = vmul.f32 %v1301, %v1480
      %v1502 = vmul.f32 %v1302, %v1480
      %v1503 = vmul.f32 %v1303, %v1480
      %v1504 = vmul.f32 %v1304, %v1480
      %v1505 = vmul.f32 %v1305, %v1480
      %v1506 = vmul.f32 %v1306, %v1480
      %v1507 = vmul.f32 %v1307, %v1480
      %v1508 = vmul.f32 %v1308, %v1480
      %v1509 = vmul.f32 %v1309, %v1480
      %v1510 = vmul.f32 %v1310, %v1480
      %v1511 = vmul.f32 %v1475, %v1480
      %v1512 = vmul.f32 %v1476, %v1480
      %v1513 = vsel %vm1379, %v1481, 0.0
      %v1514 = vsel %vm1380, %v1482, 0.0
      %v1515 = vsel %vm1381, %v1483, 0.0
      %v1516 = vsel %vm1382, %v1484, 0.0
      %v1517 = vsel %vm1383, %v1485, 0.0
      %v1518 = vsel %vm1384, %v1486, 0.0
      %v1519 = vsel %vm1385, %v1487, 0.0
      %v1520 = vsel %vm1386, %v1488, 0.0
      %v1521 = vsel %vm1387, %v1489, 0.0
      %v1522 = vsel %vm1388, %v1490, 0.0
      %v1523 = vsel %vm1389, %v1491, 0.0
      %v1524 = vsel %vm1390, %v1492, 0.0
      %v1525 = vsel %vm1391, %v1493, 0.0
      %v1526 = vsel %vm1392, %v1494, 0.0
      %v1527 = vsel %vm1393, %v1495, 0.0
      %v1528 = vsel %vm1394, %v1496, 0.0
      %v1529 = vsel %vm1395, %v1497, 0.0
      %v1530 = vsel %vm1396, %v1498, 0.0
      %v1531 = vsel %vm1397, %v1499, 0.0
      %v1532 = vsel %vm1398, %v1500, 0.0
      %v1533 = vsel %vm1399, %v1501, 0.0
      %v1534 = vsel %vm1400, %v1502, 0.0
      %v1535 = vsel %vm1401, %v1503, 0.0
      %v1536 = vsel %vm1402, %v1504, 0.0
      %v1537 = vsel %vm1403, %v1505, 0.0
      %v1538 = vsel %vm1404, %v1506, 0.0
      %v1539 = vsel %vm1405, %v1507, 0.0
      %v1540 = vsel %vm1406, %v1508, 0.0
      %v1541 = vsel %vm1407, %v1509, 0.0
      %v1542 = vsel %vm1408, %v1510, 0.0
      %v1543 = vsel %vm1409, %v1511, 0.0
      %v1544 = vsel %vm1410, %v1512, 0.0
      %v1545 = vadd.f32 %v1443, %v1513
      %v1546 = vadd.f32 %v1444, %v1514
      %v1547 = vadd.f32 %v1445, %v1515
      %v1548 = vadd.f32 %v1446, %v1516
      %v1549 = vadd.f32 %v1447, %v1517
      %v1550 = vadd.f32 %v1448, %v1518
      %v1551 = vadd.f32 %v1449, %v1519
      %v1552 = vadd.f32 %v1450, %v1520
      %v1553 = vadd.f32 %v1451, %v1521
      %v1554 = vadd.f32 %v1452, %v1522
      %v1555 = vadd.f32 %v1453, %v1523
      %v1556 = vadd.f32 %v1454, %v1524
      %v1557 = vadd.f32 %v1455, %v1525
      %v1558 = vadd.f32 %v1456, %v1526
      %v1559 = vadd.f32 %v1457, %v1527
      %v1560 = vadd.f32 %v1458, %v1528
      %v1561 = vadd.f32 %v1459, %v1529
      %v1562 = vadd.f32 %v1460, %v1530
      %v1563 = vadd.f32 %v1461, %v1531
      %v1564 = vadd.f32 %v1462, %v1532
      %v1565 = vadd.f32 %v1463, %v1533
      %v1566 = vadd.f32 %v1464, %v1534
      %v1567 = vadd.f32 %v1465, %v1535
      %v1568 = vadd.f32 %v1466, %v1536
      %v1569 = vadd.f32 %v1467, %v1537
      %v1570 = vadd.f32 %v1468, %v1538
      %v1571 = vadd.f32 %v1469, %v1539
      %v1572 = vadd.f32 %v1470, %v1540
      %v1573 = vadd.f32 %v1471, %v1541
      %v1574 = vadd.f32 %v1472, %v1542
      %v1575 = vadd.f32 %v1473, %v1543
      %v1576 = vadd.f32 %v1474, %v1544
      %v1577 = vld [vmem:[#allocation2 + $0x110] sm:$0xff]
      %v1578 = vld [vmem:[#allocation2 + $0x118] sm:$0xff]
      %v1579 = vlaneseq
      %v1580 = vshrl.u32 %v1579, 7
      %v1581 = vsub.s32 6, %v1580
      %v1582 = vrot.slane %v732, %v1581
      %v1583 = vmul.f32 %v1283, %v1582
      %v1584 = vmul.f32 %v1284, %v1582
      %v1585 = vmul.f32 %v1285, %v1582
      %v1586 = vmul.f32 %v1286, %v1582
      %v1587 = vmul.f32 %v1287, %v1582
      %v1588 = vmul.f32 %v1288, %v1582
      %v1589 = vmul.f32 %v1289, %v1582
      %v1590 = vmul.f32 %v1290, %v1582
      %v1591 = vmul.f32 %v1291, %v1582
      %v1592 = vmul.f32 %v1292, %v1582
      %v1593 = vmul.f32 %v1293, %v1582
      %v1594 = vmul.f32 %v1294, %v1582
      %v1595 = vmul.f32 %v1295, %v1582
      %v1596 = vmul.f32 %v1296, %v1582
      %v1597 = vmul.f32 %v1297, %v1582
      %v1598 = vmul.f32 %v1298, %v1582
      %v1599 = vmul.f32 %v1299, %v1582
      %v1600 = vmul.f32 %v1300, %v1582
      %v1601 = vmul.f32 %v1301, %v1582
      %v1602 = vmul.f32 %v1302, %v1582
      %v1603 = vmul.f32 %v1303, %v1582
      %v1604 = vmul.f32 %v1304, %v1582
      %v1605 = vmul.f32 %v1305, %v1582
      %v1606 = vmul.f32 %v1306, %v1582
      %v1607 = vmul.f32 %v1307, %v1582
      %v1608 = vmul.f32 %v1308, %v1582
      %v1609 = vmul.f32 %v1309, %v1582
      %v1610 = vmul.f32 %v1310, %v1582
      %v1611 = vmul.f32 %v1475, %v1582
      %v1612 = vmul.f32 %v1476, %v1582
      %v1613 = vmul.f32 %v1577, %v1582
      %v1614 = vmul.f32 %v1578, %v1582
      %v1615 = vsel %vm1379, %v1583, 0.0
      %v1616 = vsel %vm1380, %v1584, 0.0
      %v1617 = vsel %vm1381, %v1585, 0.0
      %v1618 = vsel %vm1382, %v1586, 0.0
      %v1619 = vsel %vm1383, %v1587, 0.0
      %v1620 = vsel %vm1384, %v1588, 0.0
      %v1621 = vsel %vm1385, %v1589, 0.0
      %v1622 = vsel %vm1386, %v1590, 0.0
      %v1623 = vsel %vm1387, %v1591, 0.0
      %v1624 = vsel %vm1388, %v1592, 0.0
      %v1625 = vsel %vm1389, %v1593, 0.0
      %v1626 = vsel %vm1390, %v1594, 0.0
      %v1627 = vsel %vm1391, %v1595, 0.0
      %v1628 = vsel %vm1392, %v1596, 0.0
      %v1629 = vsel %vm1393, %v1597, 0.0
      %v1630 = vsel %vm1394, %v1598, 0.0
      %v1631 = vsel %vm1395, %v1599, 0.0
      %v1632 = vsel %vm1396, %v1600, 0.0
      %v1633 = vsel %vm1397, %v1601, 0.0
      %v1634 = vsel %vm1398, %v1602, 0.0
      %v1635 = vsel %vm1399, %v1603, 0.0
      %v1636 = vsel %vm1400, %v1604, 0.0
      %v1637 = vsel %vm1401, %v1605, 0.0
      %v1638 = vsel %vm1402, %v1606, 0.0
      %v1639 = vsel %vm1403, %v1607, 0.0
      %v1640 = vsel %vm1404, %v1608, 0.0
      %v1641 = vsel %vm1405, %v1609, 0.0
      %v1642 = vsel %vm1406, %v1610, 0.0
      %v1643 = vsel %vm1407, %v1611, 0.0
      %v1644 = vsel %vm1408, %v1612, 0.0
      %v1645 = vsel %vm1409, %v1613, 0.0
      %v1646 = vsel %vm1410, %v1614, 0.0
      %v1647 = vadd.f32 %v1545, %v1615
      %v1648 = vadd.f32 %v1546, %v1616
      %v1649 = vadd.f32 %v1547, %v1617
      %v1650 = vadd.f32 %v1548, %v1618
      %v1651 = vadd.f32 %v1549, %v1619
      %v1652 = vadd.f32 %v1550, %v1620
      %v1653 = vadd.f32 %v1551, %v1621
      %v1654 = vadd.f32 %v1552, %v1622
      %v1655 = vadd.f32 %v1553, %v1623
      %v1656 = vadd.f32 %v1554, %v1624
      %v1657 = vadd.f32 %v1555, %v1625
      %v1658 = vadd.f32 %v1556, %v1626
      %v1659 = vadd.f32 %v1557, %v1627
      %v1660 = vadd.f32 %v1558, %v1628
      %v1661 = vadd.f32 %v1559, %v1629
      %v1662 = vadd.f32 %v1560, %v1630
      %v1663 = vadd.f32 %v1561, %v1631
      %v1664 = vadd.f32 %v1562, %v1632
      %v1665 = vadd.f32 %v1563, %v1633
      %v1666 = vadd.f32 %v1564, %v1634
      %v1667 = vadd.f32 %v1565, %v1635
      %v1668 = vadd.f32 %v1566, %v1636
      %v1669 = vadd.f32 %v1567, %v1637
      %v1670 = vadd.f32 %v1568, %v1638
      %v1671 = vadd.f32 %v1569, %v1639
      %v1672 = vadd.f32 %v1570, %v1640
      %v1673 = vadd.f32 %v1571, %v1641
      %v1674 = vadd.f32 %v1572, %v1642
      %v1675 = vadd.f32 %v1573, %v1643
      %v1676 = vadd.f32 %v1574, %v1644
      %v1677 = vadd.f32 %v1575, %v1645
      %v1678 = vadd.f32 %v1576, %v1646
      %v1679 = vld [vmem:[#allocation2 + $0x1] sm:$0xff]
      %v1680 = vld [vmem:[#allocation2 + $0x9] sm:$0xff]
      %v1681 = vld [vmem:[#allocation2 + $0x11] sm:$0xff]
      %v1682 = vld [vmem:[#allocation2 + $0x19] sm:$0xff]
      %v1683 = vld [vmem:[#allocation2 + $0x21] sm:$0xff]
      %v1684 = vld [vmem:[#allocation2 + $0x29] sm:$0xff]
      %v1685 = vld [vmem:[#allocation2 + $0x31] sm:$0xff]
      %v1686 = vld [vmem:[#allocation2 + $0x39] sm:$0xff]
      %v1687 = vld [vmem:[#allocation2 + $0x41] sm:$0xff]
      %v1688 = vld [vmem:[#allocation2 + $0x49] sm:$0xff]
      %v1689 = vld [vmem:[#allocation2 + $0x51] sm:$0xff]
      %v1690 = vld [vmem:[#allocation2 + $0x59] sm:$0xff]
      %v1691 = vld [vmem:[#allocation2 + $0x61] sm:$0xff]
      %v1692 = vld [vmem:[#allocation2 + $0x69] sm:$0xff]
      %v1693 = vld [vmem:[#allocation2 + $0x71] sm:$0xff]
      %v1694 = vld [vmem:[#allocation2 + $0x79] sm:$0xff]
      %v1695 = vld [vmem:[#allocation2 + $0x81] sm:$0xff]
      %v1696 = vld [vmem:[#allocation2 + $0x89] sm:$0xff]
      %v1697 = vld [vmem:[#allocation2 + $0x91] sm:$0xff]
      %v1698 = vld [vmem:[#allocation2 + $0x99] sm:$0xff]
      %v1699 = vld [vmem:[#allocation2 + $0xa1] sm:$0xff]
      %v1700 = vld [vmem:[#allocation2 + $0xa9] sm:$0xff]
      %v1701 = vld [vmem:[#allocation2 + $0xb1] sm:$0xff]
      %v1702 = vld [vmem:[#allocation2 + $0xb9] sm:$0xff]
      %v1703 = vld [vmem:[#allocation2 + $0xc1] sm:$0xff]
      %v1704 = vld [vmem:[#allocation2 + $0xc9] sm:$0xff]
      %v1705 = vld [vmem:[#allocation2 + $0xd1] sm:$0xff]
      %v1706 = vld [vmem:[#allocation2 + $0xd9] sm:$0xff]
      %v1707 = vld [vmem:[#allocation2 + $0xe1] sm:$0xff]
      %v1708 = vld [vmem:[#allocation2 + $0xe9] sm:$0xff]
      %v1709 = vld [vmem:[#allocation2 + $0xf1] sm:$0xff]
      %v1710 = vld [vmem:[#allocation2 + $0xf9] sm:$0xff]
      %v1711 = vlaneseq
      %v1712 = vshrl.u32 %v1711, 7
      %v1713 = vsub.s32 1, %v1712
      %v1714 = vrot.slane %v732, %v1713
      %v1715 = vmul.f32 %v1679, %v1714
      %v1716 = vmul.f32 %v1680, %v1714
      %v1717 = vmul.f32 %v1681, %v1714
      %v1718 = vmul.f32 %v1682, %v1714
      %v1719 = vmul.f32 %v1683, %v1714
      %v1720 = vmul.f32 %v1684, %v1714
      %v1721 = vmul.f32 %v1685, %v1714
      %v1722 = vmul.f32 %v1686, %v1714
      %v1723 = vmul.f32 %v1687, %v1714
      %v1724 = vmul.f32 %v1688, %v1714
      %v1725 = vmul.f32 %v1689, %v1714
      %v1726 = vmul.f32 %v1690, %v1714
      %v1727 = vmul.f32 %v1691, %v1714
      %v1728 = vmul.f32 %v1692, %v1714
      %v1729 = vmul.f32 %v1693, %v1714
      %v1730 = vmul.f32 %v1694, %v1714
      %v1731 = vmul.f32 %v1695, %v1714
      %v1732 = vmul.f32 %v1696, %v1714
      %v1733 = vmul.f32 %v1697, %v1714
      %v1734 = vmul.f32 %v1698, %v1714
      %v1735 = vmul.f32 %v1699, %v1714
      %v1736 = vmul.f32 %v1700, %v1714
      %v1737 = vmul.f32 %v1701, %v1714
      %v1738 = vmul.f32 %v1702, %v1714
      %v1739 = vmul.f32 %v1703, %v1714
      %v1740 = vmul.f32 %v1704, %v1714
      %v1741 = vmul.f32 %v1705, %v1714
      %v1742 = vmul.f32 %v1706, %v1714
      %v1743 = vmul.f32 %v1707, %v1714
      %v1744 = vmul.f32 %v1708, %v1714
      %v1745 = vmul.f32 %v1709, %v1714
      %v1746 = vmul.f32 %v1710, %v1714
      %v1747 = vadd.f32 %v1647, %v1715
      %v1748 = vadd.f32 %v1648, %v1716
      %v1749 = vadd.f32 %v1649, %v1717
      %v1750 = vadd.f32 %v1650, %v1718
      %v1751 = vadd.f32 %v1651, %v1719
      %v1752 = vadd.f32 %v1652, %v1720
      %v1753 = vadd.f32 %v1653, %v1721
      %v1754 = vadd.f32 %v1654, %v1722
      %v1755 = vadd.f32 %v1655, %v1723
      %v1756 = vadd.f32 %v1656, %v1724
      %v1757 = vadd.f32 %v1657, %v1725
      %v1758 = vadd.f32 %v1658, %v1726
      %v1759 = vadd.f32 %v1659, %v1727
      %v1760 = vadd.f32 %v1660, %v1728
      %v1761 = vadd.f32 %v1661, %v1729
      %v1762 = vadd.f32 %v1662, %v1730
      %v1763 = vadd.f32 %v1663, %v1731
      %v1764 = vadd.f32 %v1664, %v1732
      %v1765 = vadd.f32 %v1665, %v1733
      %v1766 = vadd.f32 %v1666, %v1734
      %v1767 = vadd.f32 %v1667, %v1735
      %v1768 = vadd.f32 %v1668, %v1736
      %v1769 = vadd.f32 %v1669, %v1737
      %v1770 = vadd.f32 %v1670, %v1738
      %v1771 = vadd.f32 %v1671, %v1739
      %v1772 = vadd.f32 %v1672, %v1740
      %v1773 = vadd.f32 %v1673, %v1741
      %v1774 = vadd.f32 %v1674, %v1742
      %v1775 = vadd.f32 %v1675, %v1743
      %v1776 = vadd.f32 %v1676, %v1744
      %v1777 = vadd.f32 %v1677, %v1745
      %v1778 = vadd.f32 %v1678, %v1746
      %v1779 = vld [vmem:[#allocation2 + $0x101] sm:$0xff]
      %v1780 = vld [vmem:[#allocation2 + $0x109] sm:$0xff]
      %v1781 = vlaneseq
      %v1782 = vshrl.u32 %v1781, 7
      %v1783 = vsub.s32 4, %v1782
      %v1784 = vrot.slane %v732, %v1783
      %v1785 = vmul.f32 %v1681, %v1784
      %v1786 = vmul.f32 %v1682, %v1784
      %v1787 = vmul.f32 %v1683, %v1784
      %v1788 = vmul.f32 %v1684, %v1784
      %v1789 = vmul.f32 %v1685, %v1784
      %v1790 = vmul.f32 %v1686, %v1784
      %v1791 = vmul.f32 %v1687, %v1784
      %v1792 = vmul.f32 %v1688, %v1784
      %v1793 = vmul.f32 %v1689, %v1784
      %v1794 = vmul.f32 %v1690, %v1784
      %v1795 = vmul.f32 %v1691, %v1784
      %v1796 = vmul.f32 %v1692, %v1784
      %v1797 = vmul.f32 %v1693, %v1784
      %v1798 = vmul.f32 %v1694, %v1784
      %v1799 = vmul.f32 %v1695, %v1784
      %v1800 = vmul.f32 %v1696, %v1784
      %v1801 = vmul.f32 %v1697, %v1784
      %v1802 = vmul.f32 %v1698, %v1784
      %v1803 = vmul.f32 %v1699, %v1784
      %v1804 = vmul.f32 %v1700, %v1784
      %v1805 = vmul.f32 %v1701, %v1784
      %v1806 = vmul.f32 %v1702, %v1784
      %v1807 = vmul.f32 %v1703, %v1784
      %v1808 = vmul.f32 %v1704, %v1784
      %v1809 = vmul.f32 %v1705, %v1784
      %v1810 = vmul.f32 %v1706, %v1784
      %v1811 = vmul.f32 %v1707, %v1784
      %v1812 = vmul.f32 %v1708, %v1784
      %v1813 = vmul.f32 %v1709, %v1784
      %v1814 = vmul.f32 %v1710, %v1784
      %v1815 = vmul.f32 %v1779, %v1784
      %v1816 = vmul.f32 %v1780, %v1784
      %v1817 = vadd.f32 %v1747, %v1785
      %v1818 = vadd.f32 %v1748, %v1786
      %v1819 = vadd.f32 %v1749, %v1787
      %v1820 = vadd.f32 %v1750, %v1788
      %v1821 = vadd.f32 %v1751, %v1789
      %v1822 = vadd.f32 %v1752, %v1790
      %v1823 = vadd.f32 %v1753, %v1791
      %v1824 = vadd.f32 %v1754, %v1792
      %v1825 = vadd.f32 %v1755, %v1793
      %v1826 = vadd.f32 %v1756, %v1794
      %v1827 = vadd.f32 %v1757, %v1795
      %v1828 = vadd.f32 %v1758, %v1796
      %v1829 = vadd.f32 %v1759, %v1797
      %v1830 = vadd.f32 %v1760, %v1798
      %v1831 = vadd.f32 %v1761, %v1799
      %v1832 = vadd.f32 %v1762, %v1800
      %v1833 = vadd.f32 %v1763, %v1801
      %v1834 = vadd.f32 %v1764, %v1802
      %v1835 = vadd.f32 %v1765, %v1803
      %v1836 = vadd.f32 %v1766, %v1804
      %v1837 = vadd.f32 %v1767, %v1805
      %v1838 = vadd.f32 %v1768, %v1806
      %v1839 = vadd.f32 %v1769, %v1807
      %v1840 = vadd.f32 %v1770, %v1808
      %v1841 = vadd.f32 %v1771, %v1809
      %v1842 = vadd.f32 %v1772, %v1810
      %v1843 = vadd.f32 %v1773, %v1811
      %v1844 = vadd.f32 %v1774, %v1812
      %v1845 = vadd.f32 %v1775, %v1813
      %v1846 = vadd.f32 %v1776, %v1814
      %v1847 = vadd.f32 %v1777, %v1815
      %v1848 = vadd.f32 %v1778, %v1816
      %v1849 = vld [vmem:[#allocation2 + $0x111] sm:$0xff]
      %v1850 = vld [vmem:[#allocation2 + $0x119] sm:$0xff]
      %v1851 = vlaneseq
      %v1852 = vshrl.u32 %v1851, 7
      %v1853 = vsub.s32 7, %v1852
      %v1854 = vrot.slane %v732, %v1853
      %v1855 = vmul.f32 %v1683, %v1854
      %v1856 = vmul.f32 %v1684, %v1854
      %v1857 = vmul.f32 %v1685, %v1854
      %v1858 = vmul.f32 %v1686, %v1854
      %v1859 = vmul.f32 %v1687, %v1854
      %v1860 = vmul.f32 %v1688, %v1854
      %v1861 = vmul.f32 %v1689, %v1854
      %v1862 = vmul.f32 %v1690, %v1854
      %v1863 = vmul.f32 %v1691, %v1854
      %v1864 = vmul.f32 %v1692, %v1854
      %v1865 = vmul.f32 %v1693, %v1854
      %v1866 = vmul.f32 %v1694, %v1854
      %v1867 = vmul.f32 %v1695, %v1854
      %v1868 = vmul.f32 %v1696, %v1854
      %v1869 = vmul.f32 %v1697, %v1854
      %v1870 = vmul.f32 %v1698, %v1854
      %v1871 = vmul.f32 %v1699, %v1854
      %v1872 = vmul.f32 %v1700, %v1854
      %v1873 = vmul.f32 %v1701, %v1854
      %v1874 = vmul.f32 %v1702, %v1854
      %v1875 = vmul.f32 %v1703, %v1854
      %v1876 = vmul.f32 %v1704, %v1854
      %v1877 = vmul.f32 %v1705, %v1854
      %v1878 = vmul.f32 %v1706, %v1854
      %v1879 = vmul.f32 %v1707, %v1854
      %v1880 = vmul.f32 %v1708, %v1854
      %v1881 = vmul.f32 %v1709, %v1854
      %v1882 = vmul.f32 %v1710, %v1854
      %v1883 = vmul.f32 %v1779, %v1854
      %v1884 = vmul.f32 %v1780, %v1854
      %v1885 = vmul.f32 %v1849, %v1854
      %v1886 = vmul.f32 %v1850, %v1854
      %v1887 = vadd.f32 %v1817, %v1855
      %v1888 = vadd.f32 %v1818, %v1856
      %v1889 = vadd.f32 %v1819, %v1857
      %v1890 = vadd.f32 %v1820, %v1858
      %v1891 = vadd.f32 %v1821, %v1859
      %v1892 = vadd.f32 %v1822, %v1860
      %v1893 = vadd.f32 %v1823, %v1861
      %v1894 = vadd.f32 %v1824, %v1862
      %v1895 = vadd.f32 %v1825, %v1863
      %v1896 = vadd.f32 %v1826, %v1864
      %v1897 = vadd.f32 %v1827, %v1865
      %v1898 = vadd.f32 %v1828, %v1866
      %v1899 = vadd.f32 %v1829, %v1867
      %v1900 = vadd.f32 %v1830, %v1868
      %v1901 = vadd.f32 %v1831, %v1869
      %v1902 = vadd.f32 %v1832, %v1870
      %v1903 = vadd.f32 %v1833, %v1871
      %v1904 = vadd.f32 %v1834, %v1872
      %v1905 = vadd.f32 %v1835, %v1873
      %v1906 = vadd.f32 %v1836, %v1874
      %v1907 = vadd.f32 %v1837, %v1875
      %v1908 = vadd.f32 %v1838, %v1876
      %v1909 = vadd.f32 %v1839, %v1877
      %v1910 = vadd.f32 %v1840, %v1878
      %v1911 = vadd.f32 %v1841, %v1879
      %v1912 = vadd.f32 %v1842, %v1880
      %v1913 = vadd.f32 %v1843, %v1881
      %v1914 = vadd.f32 %v1844, %v1882
      %v1915 = vadd.f32 %v1845, %v1883
      %v1916 = vadd.f32 %v1846, %v1884
      %v1917 = vadd.f32 %v1847, %v1885
      %v1918 = vadd.f32 %v1848, %v1886
      %v1919 = vadd.s32 %v1119, 1
      %v1920 = vadd.s32 %v1120, 1
      %v1921 = vadd.s32 %v1121, 1
      %v1922 = vadd.s32 %v1122, 1
      %v1923 = vadd.s32 %v1123, 1
      %v1924 = vadd.s32 %v1124, 1
      %v1925 = vadd.s32 %v1125, 1
      %v1926 = vadd.s32 %v1126, 1
      %v1927 = vadd.s32 %v1127, 1
      %v1928 = vadd.s32 %v1128, 1
      %v1929 = vadd.s32 %v1129, 1
      %v1930 = vadd.s32 %v1130, 1
      %v1931 = vadd.s32 %v1131, 1
      %v1932 = vadd.s32 %v1132, 1
      %v1933 = vadd.s32 %v1133, 1
      %v1934 = vadd.s32 %v1134, 1
      %v1935 = vadd.s32 %v1135, 1
      %v1936 = vadd.s32 %v1136, 1
      %v1937 = vadd.s32 %v1137, 1
      %v1938 = vadd.s32 %v1138, 1
      %v1939 = vadd.s32 %v1139, 1
      %v1940 = vadd.s32 %v1140, 1
      %v1941 = vadd.s32 %v1141, 1
      %v1942 = vadd.s32 %v1142, 1
      %v1943 = vadd.s32 %v1143, 1
      %v1944 = vadd.s32 %v1144, 1
      %v1945 = vadd.s32 %v1145, 1
      %v1946 = vadd.s32 %v1146, 1
      %v1947 = vadd.s32 %v1147, 1
      %v1948 = vadd.s32 %v1148, 1
      %v1949 = vadd.s32 %v1149, 1
      %v1950 = vadd.s32 %v1150, 1
      %vm1951 = vcmp.ge.s32.totalorder %v1919, 0
      %vm1952 = vcmp.ge.s32.totalorder %v1920, 0
      %vm1953 = vcmp.ge.s32.totalorder %v1921, 0
      %vm1954 = vcmp.ge.s32.totalorder %v1922, 0
      %vm1955 = vcmp.ge.s32.totalorder %v1923, 0
      %vm1956 = vcmp.ge.s32.totalorder %v1924, 0
      %vm1957 = vcmp.ge.s32.totalorder %v1925, 0
      %vm1958 = vcmp.ge.s32.totalorder %v1926, 0
      %vm1959 = vcmp.ge.s32.totalorder %v1927, 0
      %vm1960 = vcmp.ge.s32.totalorder %v1928, 0
      %vm1961 = vcmp.ge.s32.totalorder %v1929, 0
      %vm1962 = vcmp.ge.s32.totalorder %v1930, 0
      %vm1963 = vcmp.ge.s32.totalorder %v1931, 0
      %vm1964 = vcmp.ge.s32.totalorder %v1932, 0
      %vm1965 = vcmp.ge.s32.totalorder %v1933, 0
      %vm1966 = vcmp.ge.s32.totalorder %v1934, 0
      %vm1967 = vcmp.ge.s32.totalorder %v1935, 0
      %vm1968 = vcmp.ge.s32.totalorder %v1936, 0
      %vm1969 = vcmp.ge.s32.totalorder %v1937, 0
      %vm1970 = vcmp.ge.s32.totalorder %v1938, 0
      %vm1971 = vcmp.ge.s32.totalorder %v1939, 0
      %vm1972 = vcmp.ge.s32.totalorder %v1940, 0
      %vm1973 = vcmp.ge.s32.totalorder %v1941, 0
      %vm1974 = vcmp.ge.s32.totalorder %v1942, 0
      %vm1975 = vcmp.ge.s32.totalorder %v1943, 0
      %vm1976 = vcmp.ge.s32.totalorder %v1944, 0
      %vm1977 = vcmp.ge.s32.totalorder %v1945, 0
      %vm1978 = vcmp.ge.s32.totalorder %v1946, 0
      %vm1979 = vcmp.ge.s32.totalorder %v1947, 0
      %vm1980 = vcmp.ge.s32.totalorder %v1948, 0
      %vm1981 = vcmp.ge.s32.totalorder %v1949, 0
      %vm1982 = vcmp.ge.s32.totalorder %v1950, 0
      %vm1983 = vcmp.lt.s32.totalorder %v1919, 16
      %vm1984 = vcmp.lt.s32.totalorder %v1920, 16
      %vm1985 = vcmp.lt.s32.totalorder %v1921, 16
      %vm1986 = vcmp.lt.s32.totalorder %v1922, 16
      %vm1987 = vcmp.lt.s32.totalorder %v1923, 16
      %vm1988 = vcmp.lt.s32.totalorder %v1924, 16
      %vm1989 = vcmp.lt.s32.totalorder %v1925, 16
      %vm1990 = vcmp.lt.s32.totalorder %v1926, 16
      %vm1991 = vcmp.lt.s32.totalorder %v1927, 16
      %vm1992 = vcmp.lt.s32.totalorder %v1928, 16
      %vm1993 = vcmp.lt.s32.totalorder %v1929, 16
      %vm1994 = vcmp.lt.s32.totalorder %v1930, 16
      %vm1995 = vcmp.lt.s32.totalorder %v1931, 16
      %vm1996 = vcmp.lt.s32.totalorder %v1932, 16
      %vm1997 = vcmp.lt.s32.totalorder %v1933, 16
      %vm1998 = vcmp.lt.s32.totalorder %v1934, 16
      %vm1999 = vcmp.lt.s32.totalorder %v1935, 16
      %vm2000 = vcmp.lt.s32.totalorder %v1936, 16
      %vm2001 = vcmp.lt.s32.totalorder %v1937, 16
      %vm2002 = vcmp.lt.s32.totalorder %v1938, 16
      %vm2003 = vcmp.lt.s32.totalorder %v1939, 16
      %vm2004 = vcmp.lt.s32.totalorder %v1940, 16
      %vm2005 = vcmp.lt.s32.totalorder %v1941, 16
      %vm2006 = vcmp.lt.s32.totalorder %v1942, 16
      %vm2007 = vcmp.lt.s32.totalorder %v1943, 16
      %vm2008 = vcmp.lt.s32.totalorder %v1944, 16
      %vm2009 = vcmp.lt.s32.totalorder %v1945, 16
      %vm2010 = vcmp.lt.s32.totalorder %v1946, 16
      %vm2011 = vcmp.lt.s32.totalorder %v1947, 16
      %vm2012 = vcmp.lt.s32.totalorder %v1948, 16
      %vm2013 = vcmp.lt.s32.totalorder %v1949, 16
      %vm2014 = vcmp.lt.s32.totalorder %v1950, 16
      %vm2015 = vmand %vm1951, %vm1983
      %vm2016 = vmand %vm1952, %vm1984
      %vm2017 = vmand %vm1953, %vm1985
      %vm2018 = vmand %vm1954, %vm1986
      %vm2019 = vmand %vm1955, %vm1987
      %vm2020 = vmand %vm1956, %vm1988
      %vm2021 = vmand %vm1957, %vm1989
      %vm2022 = vmand %vm1958, %vm1990
      %vm2023 = vmand %vm1959, %vm1991
      %vm2024 = vmand %vm1960, %vm1992
      %vm2025 = vmand %vm1961, %vm1993
      %vm2026 = vmand %vm1962, %vm1994
      %vm2027 = vmand %vm1963, %vm1995
      %vm2028 = vmand %vm1964, %vm1996
      %vm2029 = vmand %vm1965, %vm1997
      %vm2030 = vmand %vm1966, %vm1998
      %vm2031 = vmand %vm1967, %vm1999
      %vm2032 = vmand %vm1968, %vm2000
      %vm2033 = vmand %vm1969, %vm2001
      %vm2034 = vmand %vm1970, %vm2002
      %vm2035 = vmand %vm1971, %vm2003
      %vm2036 = vmand %vm1972, %vm2004
      %vm2037 = vmand %vm1973, %vm2005
      %vm2038 = vmand %vm1974, %vm2006
      %vm2039 = vmand %vm1975, %vm2007
      %vm2040 = vmand %vm1976, %vm2008
      %vm2041 = vmand %vm1977, %vm2009
      %vm2042 = vmand %vm1978, %vm2010
      %vm2043 = vmand %vm1979, %vm2011
      %vm2044 = vmand %vm1980, %vm2012
      %vm2045 = vmand %vm1981, %vm2013
      %vm2046 = vmand %vm1982, %vm2014
      %v2047 = vld [vmem:[#allocation2 + $0x2] sm:$0xff]
      %v2048 = vld [vmem:[#allocation2 + $0xa] sm:$0xff]
      %v2049 = vld [vmem:[#allocation2 + $0x12] sm:$0xff]
      %v2050 = vld [vmem:[#allocation2 + $0x1a] sm:$0xff]
      %v2051 = vld [vmem:[#allocation2 + $0x22] sm:$0xff]
      %v2052 = vld [vmem:[#allocation2 + $0x2a] sm:$0xff]
      %v2053 = vld [vmem:[#allocation2 + $0x32] sm:$0xff]
      %v2054 = vld [vmem:[#allocation2 + $0x3a] sm:$0xff]
      %v2055 = vld [vmem:[#allocation2 + $0x42] sm:$0xff]
      %v2056 = vld [vmem:[#allocation2 + $0x4a] sm:$0xff]
      %v2057 = vld [vmem:[#allocation2 + $0x52] sm:$0xff]
      %v2058 = vld [vmem:[#allocation2 + $0x5a] sm:$0xff]
      %v2059 = vld [vmem:[#allocation2 + $0x62] sm:$0xff]
      %v2060 = vld [vmem:[#allocation2 + $0x6a] sm:$0xff]
      %v2061 = vld [vmem:[#allocation2 + $0x72] sm:$0xff]
      %v2062 = vld [vmem:[#allocation2 + $0x7a] sm:$0xff]
      %v2063 = vld [vmem:[#allocation2 + $0x82] sm:$0xff]
      %v2064 = vld [vmem:[#allocation2 + $0x8a] sm:$0xff]
      %v2065 = vld [vmem:[#allocation2 + $0x92] sm:$0xff]
      %v2066 = vld [vmem:[#allocation2 + $0x9a] sm:$0xff]
      %v2067 = vld [vmem:[#allocation2 + $0xa2] sm:$0xff]
      %v2068 = vld [vmem:[#allocation2 + $0xaa] sm:$0xff]
      %v2069 = vld [vmem:[#allocation2 + $0xb2] sm:$0xff]
      %v2070 = vld [vmem:[#allocation2 + $0xba] sm:$0xff]
      %v2071 = vld [vmem:[#allocation2 + $0xc2] sm:$0xff]
      %v2072 = vld [vmem:[#allocation2 + $0xca] sm:$0xff]
      %v2073 = vld [vmem:[#allocation2 + $0xd2] sm:$0xff]
      %v2074 = vld [vmem:[#allocation2 + $0xda] sm:$0xff]
      %v2075 = vld [vmem:[#allocation2 + $0xe2] sm:$0xff]
      %v2076 = vld [vmem:[#allocation2 + $0xea] sm:$0xff]
      %v2077 = vld [vmem:[#allocation2 + $0xf2] sm:$0xff]
      %v2078 = vld [vmem:[#allocation2 + $0xfa] sm:$0xff]
      %v2079 = vlaneseq
      %v2080 = vshrl.u32 %v2079, 7
      %v2081 = vsub.s32 2, %v2080
      %v2082 = vrot.slane %v732, %v2081
      %v2083 = vmul.f32 %v2047, %v2082
      %v2084 = vmul.f32 %v2048, %v2082
      %v2085 = vmul.f32 %v2049, %v2082
      %v2086 = vmul.f32 %v2050, %v2082
      %v2087 = vmul.f32 %v2051, %v2082
      %v2088 = vmul.f32 %v2052, %v2082
      %v2089 = vmul.f32 %v2053, %v2082
      %v2090 = vmul.f32 %v2054, %v2082
      %v2091 = vmul.f32 %v2055, %v2082
      %v2092 = vmul.f32 %v2056, %v2082
      %v2093 = vmul.f32 %v2057, %v2082
      %v2094 = vmul.f32 %v2058, %v2082
      %v2095 = vmul.f32 %v2059, %v2082
      %v2096 = vmul.f32 %v2060, %v2082
      %v2097 = vmul.f32 %v2061, %v2082
      %v2098 = vmul.f32 %v2062, %v2082
      %v2099 = vmul.f32 %v2063, %v2082
      %v2100 = vmul.f32 %v2064, %v2082
      %v2101 = vmul.f32 %v2065, %v2082
      %v2102 = vmul.f32 %v2066, %v2082
      %v2103 = vmul.f32 %v2067, %v2082
      %v2104 = vmul.f32 %v2068, %v2082
      %v2105 = vmul.f32 %v2069, %v2082
      %v2106 = vmul.f32 %v2070, %v2082
      %v2107 = vmul.f32 %v2071, %v2082
      %v2108 = vmul.f32 %v2072, %v2082
      %v2109 = vmul.f32 %v2073, %v2082
      %v2110 = vmul.f32 %v2074, %v2082
      %v2111 = vmul.f32 %v2075, %v2082
      %v2112 = vmul.f32 %v2076, %v2082
      %v2113 = vmul.f32 %v2077, %v2082
      %v2114 = vmul.f32 %v2078, %v2082
      %v2115 = vsel %vm2015, 1, 0
      %v2116 = vsel %vm2016, 1, 0
      %v2117 = vsel %vm2017, 1, 0
      %v2118 = vsel %vm2018, 1, 0
      %v2119 = vsel %vm2019, 1, 0
      %v2120 = vsel %vm2020, 1, 0
      %v2121 = vsel %vm2021, 1, 0
      %v2122 = vsel %vm2022, 1, 0
      %v2123 = vsel %vm2023, 1, 0
      %v2124 = vsel %vm2024, 1, 0
      %v2125 = vsel %vm2025, 1, 0
      %v2126 = vsel %vm2026, 1, 0
      %v2127 = vsel %vm2027, 1, 0
      %v2128 = vsel %vm2028, 1, 0
      %v2129 = vsel %vm2029, 1, 0
      %v2130 = vsel %vm2030, 1, 0
      %v2131 = vsel %vm2031, 1, 0
      %v2132 = vsel %vm2032, 1, 0
      %v2133 = vsel %vm2033, 1, 0
      %v2134 = vsel %vm2034, 1, 0
      %v2135 = vsel %vm2035, 1, 0
      %v2136 = vsel %vm2036, 1, 0
      %v2137 = vsel %vm2037, 1, 0
      %v2138 = vsel %vm2038, 1, 0
      %v2139 = vsel %vm2039, 1, 0
      %v2140 = vsel %vm2040, 1, 0
      %v2141 = vsel %vm2041, 1, 0
      %v2142 = vsel %vm2042, 1, 0
      %v2143 = vsel %vm2043, 1, 0
      %v2144 = vsel %vm2044, 1, 0
      %v2145 = vsel %vm2045, 1, 0
      %v2146 = vsel %vm2046, 1, 0
      %vm2147 = vcmp.eq.s32.totalorder %v2115, 1
      %vm2148 = vcmp.eq.s32.totalorder %v2116, 1
      %vm2149 = vcmp.eq.s32.totalorder %v2117, 1
      %vm2150 = vcmp.eq.s32.totalorder %v2118, 1
      %vm2151 = vcmp.eq.s32.totalorder %v2119, 1
      %vm2152 = vcmp.eq.s32.totalorder %v2120, 1
      %vm2153 = vcmp.eq.s32.totalorder %v2121, 1
      %vm2154 = vcmp.eq.s32.totalorder %v2122, 1
      %vm2155 = vcmp.eq.s32.totalorder %v2123, 1
      %vm2156 = vcmp.eq.s32.totalorder %v2124, 1
      %vm2157 = vcmp.eq.s32.totalorder %v2125, 1
      %vm2158 = vcmp.eq.s32.totalorder %v2126, 1
      %vm2159 = vcmp.eq.s32.totalorder %v2127, 1
      %vm2160 = vcmp.eq.s32.totalorder %v2128, 1
      %vm2161 = vcmp.eq.s32.totalorder %v2129, 1
      %vm2162 = vcmp.eq.s32.totalorder %v2130, 1
      %vm2163 = vcmp.eq.s32.totalorder %v2131, 1
      %vm2164 = vcmp.eq.s32.totalorder %v2132, 1
      %vm2165 = vcmp.eq.s32.totalorder %v2133, 1
      %vm2166 = vcmp.eq.s32.totalorder %v2134, 1
      %vm2167 = vcmp.eq.s32.totalorder %v2135, 1
      %vm2168 = vcmp.eq.s32.totalorder %v2136, 1
      %vm2169 = vcmp.eq.s32.totalorder %v2137, 1
      %vm2170 = vcmp.eq.s32.totalorder %v2138, 1
      %vm2171 = vcmp.eq.s32.totalorder %v2139, 1
      %vm2172 = vcmp.eq.s32.totalorder %v2140, 1
      %vm2173 = vcmp.eq.s32.totalorder %v2141, 1
      %vm2174 = vcmp.eq.s32.totalorder %v2142, 1
      %vm2175 = vcmp.eq.s32.totalorder %v2143, 1
      %vm2176 = vcmp.eq.s32.totalorder %v2144, 1
      %vm2177 = vcmp.eq.s32.totalorder %v2145, 1
      %vm2178 = vcmp.eq.s32.totalorder %v2146, 1
      %v2179 = vsel %vm2147, %v2083, 0.0
      %v2180 = vsel %vm2148, %v2084, 0.0
      %v2181 = vsel %vm2149, %v2085, 0.0
      %v2182 = vsel %vm2150, %v2086, 0.0
      %v2183 = vsel %vm2151, %v2087, 0.0
      %v2184 = vsel %vm2152, %v2088, 0.0
      %v2185 = vsel %vm2153, %v2089, 0.0
      %v2186 = vsel %vm2154, %v2090, 0.0
      %v2187 = vsel %vm2155, %v2091, 0.0
      %v2188 = vsel %vm2156, %v2092, 0.0
      %v2189 = vsel %vm2157, %v2093, 0.0
      %v2190 = vsel %vm2158, %v2094, 0.0
      %v2191 = vsel %vm2159, %v2095, 0.0
      %v2192 = vsel %vm2160, %v2096, 0.0
      %v2193 = vsel %vm2161, %v2097, 0.0
      %v2194 = vsel %vm2162, %v2098, 0.0
      %v2195 = vsel %vm2163, %v2099, 0.0
      %v2196 = vsel %vm2164, %v2100, 0.0
      %v2197 = vsel %vm2165, %v2101, 0.0
      %v2198 = vsel %vm2166, %v2102, 0.0
      %v2199 = vsel %vm2167, %v2103, 0.0
      %v2200 = vsel %vm2168, %v2104, 0.0
      %v2201 = vsel %vm2169, %v2105, 0.0
      %v2202 = vsel %vm2170, %v2106, 0.0
      %v2203 = vsel %vm2171, %v2107, 0.0
      %v2204 = vsel %vm2172, %v2108, 0.0
      %v2205 = vsel %vm2173, %v2109, 0.0
      %v2206 = vsel %vm2174, %v2110, 0.0
      %v2207 = vsel %vm2175, %v2111, 0.0
      %v2208 = vsel %vm2176, %v2112, 0.0
      %v2209 = vsel %vm2177, %v2113, 0.0
      %v2210 = vsel %vm2178, %v2114, 0.0
      %v2211 = vadd.f32 %v1887, %v2179
      %v2212 = vadd.f32 %v1888, %v2180
      %v2213 = vadd.f32 %v1889, %v2181
      %v2214 = vadd.f32 %v1890, %v2182
      %v2215 = vadd.f32 %v1891, %v2183
      %v2216 = vadd.f32 %v1892, %v2184
      %v2217 = vadd.f32 %v1893, %v2185
      %v2218 = vadd.f32 %v1894, %v2186
      %v2219 = vadd.f32 %v1895, %v2187
      %v2220 = vadd.f32 %v1896, %v2188
      %v2221 = vadd.f32 %v1897, %v2189
      %v2222 = vadd.f32 %v1898, %v2190
      %v2223 = vadd.f32 %v1899, %v2191
      %v2224 = vadd.f32 %v1900, %v2192
      %v2225 = vadd.f32 %v1901, %v2193
      %v2226 = vadd.f32 %v1902, %v2194
      %v2227 = vadd.f32 %v1903, %v2195
      %v2228 = vadd.f32 %v1904, %v2196
      %v2229 = vadd.f32 %v1905, %v2197
      %v2230 = vadd.f32 %v1906, %v2198
      %v2231 = vadd.f32 %v1907, %v2199
      %v2232 = vadd.f32 %v1908, %v2200
      %v2233 = vadd.f32 %v1909, %v2201
      %v2234 = vadd.f32 %v1910, %v2202
      %v2235 = vadd.f32 %v1911, %v2203
      %v2236 = vadd.f32 %v1912, %v2204
      %v2237 = vadd.f32 %v1913, %v2205
      %v2238 = vadd.f32 %v1914, %v2206
      %v2239 = vadd.f32 %v1915, %v2207
      %v2240 = vadd.f32 %v1916, %v2208
      %v2241 = vadd.f32 %v1917, %v2209
      %v2242 = vadd.f32 %v1918, %v2210
      %v2243 = vld [vmem:[#allocation2 + $0x102] sm:$0xff]
      %v2244 = vld [vmem:[#allocation2 + $0x10a] sm:$0xff]
      %v2245 = vlaneseq
      %v2246 = vshrl.u32 %v2245, 7
      %v2247 = vsub.s32 5, %v2246
      %v2248 = vrot.slane %v732, %v2247
      %v2249 = vmul.f32 %v2049, %v2248
      %v2250 = vmul.f32 %v2050, %v2248
      %v2251 = vmul.f32 %v2051, %v2248
      %v2252 = vmul.f32 %v2052, %v2248
      %v2253 = vmul.f32 %v2053, %v2248
      %v2254 = vmul.f32 %v2054, %v2248
      %v2255 = vmul.f32 %v2055, %v2248
      %v2256 = vmul.f32 %v2056, %v2248
      %v2257 = vmul.f32 %v2057, %v2248
      %v2258 = vmul.f32 %v2058, %v2248
      %v2259 = vmul.f32 %v2059, %v2248
      %v2260 = vmul.f32 %v2060, %v2248
      %v2261 = vmul.f32 %v2061, %v2248
      %v2262 = vmul.f32 %v2062, %v2248
      %v2263 = vmul.f32 %v2063, %v2248
      %v2264 = vmul.f32 %v2064, %v2248
      %v2265 = vmul.f32 %v2065, %v2248
      %v2266 = vmul.f32 %v2066, %v2248
      %v2267 = vmul.f32 %v2067, %v2248
      %v2268 = vmul.f32 %v2068, %v2248
      %v2269 = vmul.f32 %v2069, %v2248
      %v2270 = vmul.f32 %v2070, %v2248
      %v2271 = vmul.f32 %v2071, %v2248
      %v2272 = vmul.f32 %v2072, %v2248
      %v2273 = vmul.f32 %v2073, %v2248
      %v2274 = vmul.f32 %v2074, %v2248
      %v2275 = vmul.f32 %v2075, %v2248
      %v2276 = vmul.f32 %v2076, %v2248
      %v2277 = vmul.f32 %v2077, %v2248
      %v2278 = vmul.f32 %v2078, %v2248
      %v2279 = vmul.f32 %v2243, %v2248
      %v2280 = vmul.f32 %v2244, %v2248
      %v2281 = vsel %vm2147, %v2249, 0.0
      %v2282 = vsel %vm2148, %v2250, 0.0
      %v2283 = vsel %vm2149, %v2251, 0.0
      %v2284 = vsel %vm2150, %v2252, 0.0
      %v2285 = vsel %vm2151, %v2253, 0.0
      %v2286 = vsel %vm2152, %v2254, 0.0
      %v2287 = vsel %vm2153, %v2255, 0.0
      %v2288 = vsel %vm2154, %v2256, 0.0
      %v2289 = vsel %vm2155, %v2257, 0.0
      %v2290 = vsel %vm2156, %v2258, 0.0
      %v2291 = vsel %vm2157, %v2259, 0.0
      %v2292 = vsel %vm2158, %v2260, 0.0
      %v2293 = vsel %vm2159, %v2261, 0.0
      %v2294 = vsel %vm2160, %v2262, 0.0
      %v2295 = vsel %vm2161, %v2263, 0.0
      %v2296 = vsel %vm2162, %v2264, 0.0
      %v2297 = vsel %vm2163, %v2265, 0.0
      %v2298 = vsel %vm2164, %v2266, 0.0
      %v2299 = vsel %vm2165, %v2267, 0.0
      %v2300 = vsel %vm2166, %v2268, 0.0
      %v2301 = vsel %vm2167, %v2269, 0.0
      %v2302 = vsel %vm2168, %v2270, 0.0
      %v2303 = vsel %vm2169, %v2271, 0.0
      %v2304 = vsel %vm2170, %v2272, 0.0
      %v2305 = vsel %vm2171, %v2273, 0.0
      %v2306 = vsel %vm2172, %v2274, 0.0
      %v2307 = vsel %vm2173, %v2275, 0.0
      %v2308 = vsel %vm2174, %v2276, 0.0
      %v2309 = vsel %vm2175, %v2277, 0.0
      %v2310 = vsel %vm2176, %v2278, 0.0
      %v2311 = vsel %vm2177, %v2279, 0.0
      %v2312 = vsel %vm2178, %v2280, 0.0
      %v2313 = vadd.f32 %v2211, %v2281
      %v2314 = vadd.f32 %v2212, %v2282
      %v2315 = vadd.f32 %v2213, %v2283
      %v2316 = vadd.f32 %v2214, %v2284
      %v2317 = vadd.f32 %v2215, %v2285
      %v2318 = vadd.f32 %v2216, %v2286
      %v2319 = vadd.f32 %v2217, %v2287
      %v2320 = vadd.f32 %v2218, %v2288
      %v2321 = vadd.f32 %v2219, %v2289
      %v2322 = vadd.f32 %v2220, %v2290
      %v2323 = vadd.f32 %v2221, %v2291
      %v2324 = vadd.f32 %v2222, %v2292
      %v2325 = vadd.f32 %v2223, %v2293
      %v2326 = vadd.f32 %v2224, %v2294
      %v2327 = vadd.f32 %v2225, %v2295
      %v2328 = vadd.f32 %v2226, %v2296
      %v2329 = vadd.f32 %v2227, %v2297
      %v2330 = vadd.f32 %v2228, %v2298
      %v2331 = vadd.f32 %v2229, %v2299
      %v2332 = vadd.f32 %v2230, %v2300
      %v2333 = vadd.f32 %v2231, %v2301
      %v2334 = vadd.f32 %v2232, %v2302
      %v2335 = vadd.f32 %v2233, %v2303
      %v2336 = vadd.f32 %v2234, %v2304
      %v2337 = vadd.f32 %v2235, %v2305
      %v2338 = vadd.f32 %v2236, %v2306
      %v2339 = vadd.f32 %v2237, %v2307
      %v2340 = vadd.f32 %v2238, %v2308
      %v2341 = vadd.f32 %v2239, %v2309
      %v2342 = vadd.f32 %v2240, %v2310
      %v2343 = vadd.f32 %v2241, %v2311
      %v2344 = vadd.f32 %v2242, %v2312
      %v2345 = vld [vmem:[#allocation2 + $0x112] sm:$0xff]
      %v2346 = vld [vmem:[#allocation2 + $0x11a] sm:$0xff]
      %v2347 = vlaneseq
      %v2348 = vshrl.u32 %v2347, 7
      %v2349 = vsub.s32 0, %v2348
      %v2350 = vrot.slane %v733, %v2349
      %v2351 = vmul.f32 %v2051, %v2350
      %v2352 = vmul.f32 %v2052, %v2350
      %v2353 = vmul.f32 %v2053, %v2350
      %v2354 = vmul.f32 %v2054, %v2350
      %v2355 = vmul.f32 %v2055, %v2350
      %v2356 = vmul.f32 %v2056, %v2350
      %v2357 = vmul.f32 %v2057, %v2350
      %v2358 = vmul.f32 %v2058, %v2350
      %v2359 = vmul.f32 %v2059, %v2350
      %v2360 = vmul.f32 %v2060, %v2350
      %v2361 = vmul.f32 %v2061, %v2350
      %v2362 = vmul.f32 %v2062, %v2350
      %v2363 = vmul.f32 %v2063, %v2350
      %v2364 = vmul.f32 %v2064, %v2350
      %v2365 = vmul.f32 %v2065, %v2350
      %v2366 = vmul.f32 %v2066, %v2350
      %v2367 = vmul.f32 %v2067, %v2350
      %v2368 = vmul.f32 %v2068, %v2350
      %v2369 = vmul.f32 %v2069, %v2350
      %v2370 = vmul.f32 %v2070, %v2350
      %v2371 = vmul.f32 %v2071, %v2350
      %v2372 = vmul.f32 %v2072, %v2350
      %v2373 = vmul.f32 %v2073, %v2350
      %v2374 = vmul.f32 %v2074, %v2350
      %v2375 = vmul.f32 %v2075, %v2350
      %v2376 = vmul.f32 %v2076, %v2350
      %v2377 = vmul.f32 %v2077, %v2350
      %v2378 = vmul.f32 %v2078, %v2350
      %v2379 = vmul.f32 %v2243, %v2350
      %v2380 = vmul.f32 %v2244, %v2350
      %v2381 = vmul.f32 %v2345, %v2350
      %v2382 = vmul.f32 %v2346, %v2350
      %v2383 = vsel %vm2147, %v2351, 0.0
      %v2384 = vsel %vm2148, %v2352, 0.0
      %v2385 = vsel %vm2149, %v2353, 0.0
      %v2386 = vsel %vm2150, %v2354, 0.0
      %v2387 = vsel %vm2151, %v2355, 0.0
      %v2388 = vsel %vm2152, %v2356, 0.0
      %v2389 = vsel %vm2153, %v2357, 0.0
      %v2390 = vsel %vm2154, %v2358, 0.0
      %v2391 = vsel %vm2155, %v2359, 0.0
      %v2392 = vsel %vm2156, %v2360, 0.0
      %v2393 = vsel %vm2157, %v2361, 0.0
      %v2394 = vsel %vm2158, %v2362, 0.0
      %v2395 = vsel %vm2159, %v2363, 0.0
      %v2396 = vsel %vm2160, %v2364, 0.0
      %v2397 = vsel %vm2161, %v2365, 0.0
      %v2398 = vsel %vm2162, %v2366, 0.0
      %v2399 = vsel %vm2163, %v2367, 0.0
      %v2400 = vsel %vm2164, %v2368, 0.0
      %v2401 = vsel %vm2165, %v2369, 0.0
      %v2402 = vsel %vm2166, %v2370, 0.0
      %v2403 = vsel %vm2167, %v2371, 0.0
      %v2404 = vsel %vm2168, %v2372, 0.0
      %v2405 = vsel %vm2169, %v2373, 0.0
      %v2406 = vsel %vm2170, %v2374, 0.0
      %v2407 = vsel %vm2171, %v2375, 0.0
      %v2408 = vsel %vm2172, %v2376, 0.0
      %v2409 = vsel %vm2173, %v2377, 0.0
      %v2410 = vsel %vm2174, %v2378, 0.0
      %v2411 = vsel %vm2175, %v2379, 0.0
      %v2412 = vsel %vm2176, %v2380, 0.0
      %v2413 = vsel %vm2177, %v2381, 0.0
      %v2414 = vsel %vm2178, %v2382, 0.0
      %v2415 = vadd.f32 %v2313, %v2383
      %v2416 = vadd.f32 %v2314, %v2384
      %v2417 = vadd.f32 %v2315, %v2385
      %v2418 = vadd.f32 %v2316, %v2386
      %v2419 = vadd.f32 %v2317, %v2387
      %v2420 = vadd.f32 %v2318, %v2388
      %v2421 = vadd.f32 %v2319, %v2389
      %v2422 = vadd.f32 %v2320, %v2390
      %v2423 = vadd.f32 %v2321, %v2391
      %v2424 = vadd.f32 %v2322, %v2392
      %v2425 = vadd.f32 %v2323, %v2393
      %v2426 = vadd.f32 %v2324, %v2394
      %v2427 = vadd.f32 %v2325, %v2395
      %v2428 = vadd.f32 %v2326, %v2396
      %v2429 = vadd.f32 %v2327, %v2397
      %v2430 = vadd.f32 %v2328, %v2398
      %v2431 = vadd.f32 %v2329, %v2399
      %v2432 = vadd.f32 %v2330, %v2400
      %v2433 = vadd.f32 %v2331, %v2401
      %v2434 = vadd.f32 %v2332, %v2402
      %v2435 = vadd.f32 %v2333, %v2403
      %v2436 = vadd.f32 %v2334, %v2404
      %v2437 = vadd.f32 %v2335, %v2405
      %v2438 = vadd.f32 %v2336, %v2406
      %v2439 = vadd.f32 %v2337, %v2407
      %v2440 = vadd.f32 %v2338, %v2408
      %v2441 = vadd.f32 %v2339, %v2409
      %v2442 = vadd.f32 %v2340, %v2410
      %v2443 = vadd.f32 %v2341, %v2411
      %v2444 = vadd.f32 %v2342, %v2412
      %v2445 = vadd.f32 %v2343, %v2413
      %v2446 = vadd.f32 %v2344, %v2414
      %v2447 = vld [vmem:[%s5] sm:$0x1]
      %v2449 = vlaneseq
      %v2450 = vshrl.u32 %v2449, 7
      %v2451 = vsub.s32 0, %v2450
      %v2452 = vrot.slane %v2447, %v2451
      %v2454 = vadd.f32 %v2415, %v2452
      %v2455 = vadd.f32 %v2416, %v2452
      %v2456 = vadd.f32 %v2417, %v2452
      %v2457 = vadd.f32 %v2418, %v2452
      %v2458 = vadd.f32 %v2419, %v2452
      %v2459 = vadd.f32 %v2420, %v2452
      %v2460 = vadd.f32 %v2421, %v2452
      %v2461 = vadd.f32 %v2422, %v2452
      %v2462 = vadd.f32 %v2423, %v2452
      %v2463 = vadd.f32 %v2424, %v2452
      %v2464 = vadd.f32 %v2425, %v2452
      %v2465 = vadd.f32 %v2426, %v2452
      %v2466 = vadd.f32 %v2427, %v2452
      %v2467 = vadd.f32 %v2428, %v2452
      %v2468 = vadd.f32 %v2429, %v2452
      %v2469 = vadd.f32 %v2430, %v2452
      %v2470 = vadd.f32 %v2431, %v2452
      %v2471 = vadd.f32 %v2432, %v2452
      %v2472 = vadd.f32 %v2433, %v2452
      %v2473 = vadd.f32 %v2434, %v2452
      %v2474 = vadd.f32 %v2435, %v2452
      %v2475 = vadd.f32 %v2436, %v2452
      %v2476 = vadd.f32 %v2437, %v2452
      %v2477 = vadd.f32 %v2438, %v2452
      %v2478 = vadd.f32 %v2439, %v2452
      %v2479 = vadd.f32 %v2440, %v2452
      %v2480 = vadd.f32 %v2441, %v2452
      %v2481 = vadd.f32 %v2442, %v2452
      %v2482 = vadd.f32 %v2443, %v2452
      %v2483 = vadd.f32 %v2444, %v2452
      %v2484 = vadd.f32 %v2445, %v2452
      %v2485 = vadd.f32 %v2446, %v2452
      %v2486 = vpack.c.bf16 %v2455, %v2454
      %v2487 = vpack.c.bf16 %v2457, %v2456
      %v2488 = vpack.c.bf16 %v2459, %v2458
      %v2489 = vpack.c.bf16 %v2461, %v2460
      %v2490 = vpack.c.bf16 %v2463, %v2462
      %v2491 = vpack.c.bf16 %v2465, %v2464
      %v2492 = vpack.c.bf16 %v2467, %v2466
      %v2493 = vpack.c.bf16 %v2469, %v2468
      %v2494 = vpack.c.bf16 %v2471, %v2470
      %v2495 = vpack.c.bf16 %v2473, %v2472
      %v2496 = vpack.c.bf16 %v2475, %v2474
      %v2497 = vpack.c.bf16 %v2477, %v2476
      %v2498 = vpack.c.bf16 %v2479, %v2478
      %v2499 = vpack.c.bf16 %v2481, %v2480
      %v2500 = vpack.c.bf16 %v2483, %v2482
      %v2501 = vpack.c.bf16 %v2485, %v2484
      %v2502 = vld [vmem:[%s6] sm:$0x1]
      %v2503 = vld [vmem:[%s7] sm:$0x1]
      %v2505 = vlaneseq
      %v2506 = vshrl.u32 %v2505, 7
      %v2507 = vsub.s32 0, %v2506
      %v2508 = vrot.slane %v2503, %v2507
      %v2511 = vsel %vm359, %v2486, 0
      %v2514 = vsel %vm359, %v2487, 0
      %v2517 = vsel %vm359, %v2488, 0
      %v2520 = vsel %vm359, %v2489, 0
      %v2523 = vsel %vm359, %v2490, 0
      %v2526 = vsel %vm359, %v2491, 0
      %v2529 = vsel %vm359, %v2492, 0
      %v2532 = vsel %vm359, %v2493, 0
      %v2535 = vsel %vm359, %v2494, 0
      %v2538 = vsel %vm359, %v2495, 0
      %v2541 = vsel %vm359, %v2496, 0
      %v2544 = vsel %vm359, %v2497, 0
      %v2547 = vsel %vm359, %v2498, 0
      %v2550 = vsel %vm359, %v2499, 0
      %v2553 = vsel %vm359, %v2500, 0
      %v2556 = vsel %vm359, %v2501, 0
      %v2559 = vsel %vm496, %v2502, 0
      %2561 = vmatprep.subr.bf16.mxu0 0
      %2562 = vmatpush1.bf16.msra.mxu0 0
      %2563 = vmatprep.subr.bf16.mxu0 0
      %2564 = vmatpush1.bf16.msra.mxu0 0
      %2565 = vmatprep.subr.bf16.mxu0 0
      %2566 = vmatpush1.bf16.msra.mxu0 0
      %2567 = vmatprep.subr.bf16.mxu0 0
      %2568 = vmatpush1.bf16.msra.mxu0 0
      %2569 = vmatprep.subr.bf16.mxu0 0
      %2570 = vmatpush1.bf16.msra.mxu0 0
      %2571 = vmatprep.subr.bf16.mxu0 0
      %2572 = vmatpush1.bf16.msra.mxu0 0
      %2573 = vmatprep.subr.bf16.mxu0 0
      %2574 = vmatpush1.bf16.msra.mxu0 0
      %2575 = vmatprep.subr.bf16.mxu0 0
      %2576 = vmatpush1.bf16.msra.mxu0 %v2559
      %2577 = vmatprep.subr.bf16.mxu0 0
      %2578 = vmatpush2.bf16.msra.mxu0 0
      %2579 = vmatprep.subr.bf16.mxu0 0
      %2580 = vmatpush2.bf16.msra.mxu0 0
      %2581 = vmatprep.subr.bf16.mxu0 0
      %2582 = vmatpush2.bf16.msra.mxu0 0
      %2583 = vmatprep.subr.bf16.mxu0 0
      %2584 = vmatpush2.bf16.msra.mxu0 0
      %2585 = vmatprep.subr.bf16.mxu0 0
      %2586 = vmatpush2.bf16.msra.mxu0 0
      %2587 = vmatprep.subr.bf16.mxu0 0
      %2588 = vmatpush2.bf16.msra.mxu0 0
      %2589 = vmatprep.subr.bf16.mxu0 0
      %2590 = vmatpush2.bf16.msra.mxu0 0
      %2591 = vmatprep.subr.bf16.mxu0 0
      %2592 = vmatpush2.bf16.msra.mxu0 0
      %2593 = vmatprep.mubr.bf16.mxu0 0
      %2594 = vmatmul.mubr.bf16.gmra.mxu0 %v2511
      %v2595 = vpop.f32.mrf.mxu0
      %v2596 = vadd.f32 %v2508, %v2595
      %v2597 = vpop.f32.mrf.mxu0
      %v2598 = vpop.f32.mrf.mxu0
      %v2599 = vadd.f32 %v2508, %v2598
      %v2600 = vpop.f32.mrf.mxu0
      %2601 = vmatprep.mubr.bf16.mxu0 0
      %2602 = vmatmul.mubr.bf16.gmra.mxu0 %v2514
      %v2603 = vpop.f32.mrf.mxu0
      %v2604 = vadd.f32 %v2508, %v2603
      %v2605 = vpop.f32.mrf.mxu0
      %v2606 = vpop.f32.mrf.mxu0
      %v2607 = vadd.f32 %v2508, %v2606
      %v2608 = vpop.f32.mrf.mxu0
      %2609 = vmatprep.mubr.bf16.mxu0 0
      %2610 = vmatmul.mubr.bf16.gmra.mxu0 %v2517
      %v2611 = vpop.f32.mrf.mxu0
      %v2612 = vadd.f32 %v2508, %v2611
      %v2613 = vpop.f32.mrf.mxu0
      %v2614 = vpop.f32.mrf.mxu0
      %v2615 = vadd.f32 %v2508, %v2614
      %v2616 = vpop.f32.mrf.mxu0
      %2617 = vmatprep.mubr.bf16.mxu0 0
      %2618 = vmatmul.mubr.bf16.gmra.mxu0 %v2520
      %v2619 = vpop.f32.mrf.mxu0
      %v2620 = vadd.f32 %v2508, %v2619
      %v2621 = vpop.f32.mrf.mxu0
      %v2622 = vpop.f32.mrf.mxu0
      %v2623 = vadd.f32 %v2508, %v2622
      %v2624 = vpop.f32.mrf.mxu0
      %2625 = vmatprep.mubr.bf16.mxu0 0
      %2626 = vmatmul.mubr.bf16.gmra.mxu0 %v2523
      %v2627 = vpop.f32.mrf.mxu0
      %v2628 = vadd.f32 %v2508, %v2627
      %v2629 = vpop.f32.mrf.mxu0
      %v2630 = vpop.f32.mrf.mxu0
      %v2631 = vadd.f32 %v2508, %v2630
      %v2632 = vpop.f32.mrf.mxu0
      %2633 = vmatprep.mubr.bf16.mxu0 0
      %2634 = vmatmul.mubr.bf16.gmra.mxu0 %v2526
      %v2635 = vpop.f32.mrf.mxu0
      %v2636 = vadd.f32 %v2508, %v2635
      %v2637 = vpop.f32.mrf.mxu0
      %v2638 = vpop.f32.mrf.mxu0
      %v2639 = vadd.f32 %v2508, %v2638
      %v2640 = vpop.f32.mrf.mxu0
      %2641 = vmatprep.mubr.bf16.mxu0 0
      %2642 = vmatmul.mubr.bf16.gmra.mxu0 %v2529
      %v2643 = vpop.f32.mrf.mxu0
      %v2644 = vadd.f32 %v2508, %v2643
      %v2645 = vpop.f32.mrf.mxu0
      %v2646 = vpop.f32.mrf.mxu0
      %v2647 = vadd.f32 %v2508, %v2646
      %v2648 = vpop.f32.mrf.mxu0
      %2649 = vmatprep.mubr.bf16.mxu0 0
      %2650 = vmatmul.mubr.bf16.gmra.mxu0 %v2532
      %v2651 = vpop.f32.mrf.mxu0
      %v2652 = vadd.f32 %v2508, %v2651
      %v2653 = vpop.f32.mrf.mxu0
      %v2654 = vpop.f32.mrf.mxu0
      %v2655 = vadd.f32 %v2508, %v2654
      %v2656 = vpop.f32.mrf.mxu0
      %2657 = vmatprep.mubr.bf16.mxu0 0
      %2658 = vmatmul.mubr.bf16.gmra.mxu0 %v2535
      %v2659 = vpop.f32.mrf.mxu0
      %v2660 = vadd.f32 %v2508, %v2659
      %v2661 = vpop.f32.mrf.mxu0
      %v2662 = vpop.f32.mrf.mxu0
      %v2663 = vadd.f32 %v2508, %v2662
      %v2664 = vpop.f32.mrf.mxu0
      %2665 = vmatprep.mubr.bf16.mxu0 0
      %2666 = vmatmul.mubr.bf16.gmra.mxu0 %v2538
      %v2667 = vpop.f32.mrf.mxu0
      %v2668 = vadd.f32 %v2508, %v2667
      %v2669 = vpop.f32.mrf.mxu0
      %v2670 = vpop.f32.mrf.mxu0
      %v2671 = vadd.f32 %v2508, %v2670
      %v2672 = vpop.f32.mrf.mxu0
      %2673 = vmatprep.mubr.bf16.mxu0 0
      %2674 = vmatmul.mubr.bf16.gmra.mxu0 %v2541
      %v2675 = vpop.f32.mrf.mxu0
      %v2676 = vadd.f32 %v2508, %v2675
      %v2677 = vpop.f32.mrf.mxu0
      %v2678 = vpop.f32.mrf.mxu0
      %v2679 = vadd.f32 %v2508, %v2678
      %v2680 = vpop.f32.mrf.mxu0
      %2681 = vmatprep.mubr.bf16.mxu0 0
      %2682 = vmatmul.mubr.bf16.gmra.mxu0 %v2544
      %v2683 = vpop.f32.mrf.mxu0
      %v2684 = vadd.f32 %v2508, %v2683
      %v2685 = vpop.f32.mrf.mxu0
      %v2686 = vpop.f32.mrf.mxu0
      %v2687 = vadd.f32 %v2508, %v2686
      %v2688 = vpop.f32.mrf.mxu0
      %2689 = vmatprep.mubr.bf16.mxu0 0
      %2690 = vmatmul.mubr.bf16.gmra.mxu0 %v2547
      %v2691 = vpop.f32.mrf.mxu0
      %v2692 = vadd.f32 %v2508, %v2691
      %v2693 = vpop.f32.mrf.mxu0
      %v2694 = vpop.f32.mrf.mxu0
      %v2695 = vadd.f32 %v2508, %v2694
      %v2696 = vpop.f32.mrf.mxu0
      %2697 = vmatprep.mubr.bf16.mxu0 0
      %2698 = vmatmul.mubr.bf16.gmra.mxu0 %v2550
      %v2699 = vpop.f32.mrf.mxu0
      %v2700 = vadd.f32 %v2508, %v2699
      %v2701 = vpop.f32.mrf.mxu0
      %v2702 = vpop.f32.mrf.mxu0
      %v2703 = vadd.f32 %v2508, %v2702
      %v2704 = vpop.f32.mrf.mxu0
      %2705 = vmatprep.mubr.bf16.mxu0 0
      %2706 = vmatmul.mubr.bf16.gmra.mxu0 %v2553
      %v2707 = vpop.f32.mrf.mxu0
      %v2708 = vadd.f32 %v2508, %v2707
      %v2709 = vpop.f32.mrf.mxu0
      %v2710 = vpop.f32.mrf.mxu0
      %v2711 = vadd.f32 %v2508, %v2710
      %v2712 = vpop.f32.mrf.mxu0
      %2713 = vmatprep.mubr.bf16.mxu0 0
      %2714 = vmatmul.mubr.bf16.gmra.mxu0 %v2556
      %v2715 = vpop.f32.mrf.mxu0
      %v2716 = vadd.f32 %v2508, %v2715
      %v2717 = vpop.f32.mrf.mxu0
      %v2718 = vpop.f32.mrf.mxu0
      %v2719 = vadd.f32 %v2508, %v2718
      %v2720 = vpop.f32.mrf.mxu0
      %2721 = vdwg.mxu0
      %v2722 = vmax.f32 %v2596, 0.0
      %v2723 = vmax.f32 %v2599, 0.0
      %v2724 = vmax.f32 %v2604, 0.0
      %v2725 = vmax.f32 %v2607, 0.0
      %v2726 = vmax.f32 %v2612, 0.0
      %v2727 = vmax.f32 %v2615, 0.0
      %v2728 = vmax.f32 %v2620, 0.0
      %v2729 = vmax.f32 %v2623, 0.0
      %v2730 = vmax.f32 %v2628, 0.0
      %v2731 = vmax.f32 %v2631, 0.0
      %v2732 = vmax.f32 %v2636, 0.0
      %v2733 = vmax.f32 %v2639, 0.0
      %v2734 = vmax.f32 %v2644, 0.0
      %v2735 = vmax.f32 %v2647, 0.0
      %v2736 = vmax.f32 %v2652, 0.0
      %v2737 = vmax.f32 %v2655, 0.0
      %v2738 = vmax.f32 %v2660, 0.0
      %v2739 = vmax.f32 %v2663, 0.0
      %v2740 = vmax.f32 %v2668, 0.0
      %v2741 = vmax.f32 %v2671, 0.0
      %v2742 = vmax.f32 %v2676, 0.0
      %v2743 = vmax.f32 %v2679, 0.0
      %v2744 = vmax.f32 %v2684, 0.0
      %v2745 = vmax.f32 %v2687, 0.0
      %v2746 = vmax.f32 %v2692, 0.0
      %v2747 = vmax.f32 %v2695, 0.0
      %v2748 = vmax.f32 %v2700, 0.0
      %v2749 = vmax.f32 %v2703, 0.0
      %v2750 = vmax.f32 %v2708, 0.0
      %v2751 = vmax.f32 %v2711, 0.0
      %v2752 = vmax.f32 %v2716, 0.0
      %v2753 = vmax.f32 %v2719, 0.0
      %2786 = vrot.lane.b32.xlu0 %v2722, 2
      %v2787 = vpop.permute.xlu0 %2786
      %2788 = vrot.lane.b32.xlu0 %v2723, 2
      %v2789 = vpop.permute.xlu0 %2788
      %2790 = vrot.lane.b32.xlu0 %v2724, 2
      %v2791 = vpop.permute.xlu0 %2790
      %2792 = vrot.lane.b32.xlu0 %v2725, 2
      %v2793 = vpop.permute.xlu0 %2792
      %2794 = vrot.lane.b32.xlu0 %v2726, 2
      %v2795 = vpop.permute.xlu0 %2794
      %2796 = vrot.lane.b32.xlu0 %v2727, 2
      %v2797 = vpop.permute.xlu0 %2796
      %2798 = vrot.lane.b32.xlu0 %v2728, 2
      %v2799 = vpop.permute.xlu0 %2798
      %2800 = vrot.lane.b32.xlu0 %v2729, 2
      %v2801 = vpop.permute.xlu0 %2800
      %2802 = vrot.lane.b32.xlu0 %v2730, 2
      %v2803 = vpop.permute.xlu0 %2802
      %2804 = vrot.lane.b32.xlu0 %v2731, 2
      %v2805 = vpop.permute.xlu0 %2804
      %2806 = vrot.lane.b32.xlu0 %v2732, 2
      %v2807 = vpop.permute.xlu0 %2806
      %2808 = vrot.lane.b32.xlu0 %v2733, 2
      %v2809 = vpop.permute.xlu0 %2808
      %2810 = vrot.lane.b32.xlu0 %v2734, 2
      %v2811 = vpop.permute.xlu0 %2810
      %2812 = vrot.lane.b32.xlu0 %v2735, 2
      %v2813 = vpop.permute.xlu0 %2812
      %2814 = vrot.lane.b32.xlu0 %v2736, 2
      %v2815 = vpop.permute.xlu0 %2814
      %2816 = vrot.lane.b32.xlu0 %v2737, 2
      %v2817 = vpop.permute.xlu0 %2816
      %2818 = vrot.lane.b32.xlu0 %v2738, 2
      %v2819 = vpop.permute.xlu0 %2818
      %2820 = vrot.lane.b32.xlu0 %v2739, 2
      %v2821 = vpop.permute.xlu0 %2820
      %2822 = vrot.lane.b32.xlu0 %v2740, 2
      %v2823 = vpop.permute.xlu0 %2822
      %2824 = vrot.lane.b32.xlu0 %v2741, 2
      %v2825 = vpop.permute.xlu0 %2824
      %2826 = vrot.lane.b32.xlu0 %v2742, 2
      %v2827 = vpop.permute.xlu0 %2826
      %2828 = vrot.lane.b32.xlu0 %v2743, 2
      %v2829 = vpop.permute.xlu0 %2828
      %2830 = vrot.lane.b32.xlu0 %v2744, 2
      %v2831 = vpop.permute.xlu0 %2830
      %2832 = vrot.lane.b32.xlu0 %v2745, 2
      %v2833 = vpop.permute.xlu0 %2832
      %2834 = vrot.lane.b32.xlu0 %v2746, 2
      %v2835 = vpop.permute.xlu0 %2834
      %2836 = vrot.lane.b32.xlu0 %v2747, 2
      %v2837 = vpop.permute.xlu0 %2836
      %2838 = vrot.lane.b32.xlu0 %v2748, 2
      %v2839 = vpop.permute.xlu0 %2838
      %2840 = vrot.lane.b32.xlu0 %v2749, 2
      %v2841 = vpop.permute.xlu0 %2840
      %2842 = vrot.lane.b32.xlu0 %v2750, 2
      %v2843 = vpop.permute.xlu0 %2842
      %2844 = vrot.lane.b32.xlu0 %v2751, 2
      %v2845 = vpop.permute.xlu0 %2844
      %2846 = vrot.lane.b32.xlu0 %v2752, 2
      %v2847 = vpop.permute.xlu0 %2846
      %2848 = vrot.lane.b32.xlu0 %v2753, 2
      %v2849 = vpop.permute.xlu0 %2848
      %vm2882 = vcmask 31760
      %2883 = vst.msk [vmem:[%s325] sm:$0xff] %vm2882, %v2787
      %2884 = vst.msk [vmem:[%s325 + $0x8] sm:$0xff] %vm2882, %v2789
      %2885 = vst.msk [vmem:[%s325 + $0x10] sm:$0xff] %vm2882, %v2791
      %2886 = vst.msk [vmem:[%s325 + $0x18] sm:$0xff] %vm2882, %v2793
      %2887 = vst.msk [vmem:[%s325 + $0x20] sm:$0xff] %vm2882, %v2795
      %2888 = vst.msk [vmem:[%s325 + $0x28] sm:$0xff] %vm2882, %v2797
      %2889 = vst.msk [vmem:[%s325 + $0x30] sm:$0xff] %vm2882, %v2799
      %2890 = vst.msk [vmem:[%s325 + $0x38] sm:$0xff] %vm2882, %v2801
      %2891 = vst.msk [vmem:[%s325 + $0x40] sm:$0xff] %vm2882, %v2803
      %2892 = vst.msk [vmem:[%s325 + $0x48] sm:$0xff] %vm2882, %v2805
      %2893 = vst.msk [vmem:[%s325 + $0x50] sm:$0xff] %vm2882, %v2807
      %2894 = vst.msk [vmem:[%s325 + $0x58] sm:$0xff] %vm2882, %v2809
      %2895 = vst.msk [vmem:[%s325 + $0x60] sm:$0xff] %vm2882, %v2811
      %2896 = vst.msk [vmem:[%s325 + $0x68] sm:$0xff] %vm2882, %v2813
      %2897 = vst.msk [vmem:[%s325 + $0x70] sm:$0xff] %vm2882, %v2815
      %2898 = vst.msk [vmem:[%s325 + $0x78] sm:$0xff] %vm2882, %v2817
      %2899 = vst.msk [vmem:[%s325 + $0x80] sm:$0xff] %vm2882, %v2819
      %2900 = vst.msk [vmem:[%s325 + $0x88] sm:$0xff] %vm2882, %v2821
      %2901 = vst.msk [vmem:[%s325 + $0x90] sm:$0xff] %vm2882, %v2823
      %2902 = vst.msk [vmem:[%s325 + $0x98] sm:$0xff] %vm2882, %v2825
      %2903 = vst.msk [vmem:[%s325 + $0xa0] sm:$0xff] %vm2882, %v2827
      %2904 = vst.msk [vmem:[%s325 + $0xa8] sm:$0xff] %vm2882, %v2829
      %2905 = vst.msk [vmem:[%s325 + $0xb0] sm:$0xff] %vm2882, %v2831
      %2906 = vst.msk [vmem:[%s325 + $0xb8] sm:$0xff] %vm2882, %v2833
      %2907 = vst.msk [vmem:[%s325 + $0xc0] sm:$0xff] %vm2882, %v2835
      %2908 = vst.msk [vmem:[%s325 + $0xc8] sm:$0xff] %vm2882, %v2837
      %2909 = vst.msk [vmem:[%s325 + $0xd0] sm:$0xff] %vm2882, %v2839
      %2910 = vst.msk [vmem:[%s325 + $0xd8] sm:$0xff] %vm2882, %v2841
      %2911 = vst.msk [vmem:[%s325 + $0xe0] sm:$0xff] %vm2882, %v2843
      %2912 = vst.msk [vmem:[%s325 + $0xe8] sm:$0xff] %vm2882, %v2845
      %2913 = vst.msk [vmem:[%s325 + $0xf0] sm:$0xff] %vm2882, %v2847
      %2914 = vst.msk [vmem:[%s325 + $0xf8] sm:$0xff] %vm2882, %v2849
      %p2915 = scmp.lt.s32.totalorder %s19, 1
      %s2916 = scalar_select %p2915, %s19, 1
      %s2917 = smul.addr %s2916, 32
      %s2918 = smul.addr %s2917, 8
      %s2919 = scalar_lea.vmem %s8, %s2918
      // Predicated region
      $region53: #{tpu_custom_call.1} parent=51 // pred_check
        %p2920 = pneg %p215
      $region54: #{tpu_custom_call.1} parent=51 // pred_check_branch
        %2922 = sbr.rel (%p2920) target = $region56
      $region55: #{tpu_custom_call.1} parent=51 // pred_region
        _
      $region56: #{tpu_custom_call.1} parent=51 // pred_fallthru
        _
    $region52: #{tpu_custom_call.1} parent=5 // pred_fallthru
      _
    %p2923 = scmp.le.s32.totalorder 2, %s14
    // Predicated region
    $region57: #{tpu_custom_call.1} parent=5 // pred_check
      %p2924 = pneg %p2923
    $region58: #{tpu_custom_call.1} parent=5 // pred_check_branch
      %2926 = sbr.rel (%p2924) target = $region60
    $region59: #{tpu_custom_call.1} parent=5 // pred_region
      %s2927 = ssub.s32 %s14, 2
      // Predicated region
      $region61: #{tpu_custom_call.1} parent=59 // pred_check
        %p2928 = pneg %p221
      $region62: #{tpu_custom_call.1} parent=59 // pred_check_branch
        %2930 = sbr.rel (%p2928) target = $region64
      $region63: #{tpu_custom_call.1} parent=59 // pred_region
        %p2931 = scmp.lt.s32.totalorder %s20, 1
        %s2932 = scalar_select %p2931, %s20, 1
        %s2933 = smul.addr %s2932, 32
        %s2934 = smul.addr %s2933, 8
        %s2935 = scalar_lea.vmem %s8, %s2934
      $region64: #{tpu_custom_call.1} parent=59 // pred_fallthru
        _
    $region60: #{tpu_custom_call.1} parent=5 // pred_fallthru
      _
  $region6: #{tpu_custom_call.1} parent=0 // loop_footer
    %s18 = sadd.s32 1, %s14
  $region7: #{tpu_custom_call.1} parent=0 // loop_footer_branch
    %13 = sbr.rel target = $region3
  $region8: #{tpu_custom_call.1} parent=0 // loop_exit
    _

</llo_original>
